<compile_context>
chip_gen: v7x
topology: tpu7x:2x2x1
jax: 0.10.0
libtpu: 0.0.40
codegen_flags: <defaults>
</compile_context>

<pallas_src>
import math
import functools

import jax
import jax.numpy as jnp
from jax.experimental import pallas as pl
from jax.experimental.pallas import tpu as pltpu


def _head_major(x, num_heads, head_dim):
    """[rows, num_heads*head_dim] -> [num_heads, rows, head_dim] (heads = batch)."""
    rows = x.shape[0]
    x3 = x.reshape(rows, num_heads, head_dim)
    if hasattr(pltpu, "einshape"):          # lane-layout-aware relayout
        return pltpu.einshape("rhd->hrd", x3)
    return jnp.swapaxes(x3, 0, 1)           # fallback for older jax


def _head_merge(x):
    """[num_heads, rows, head_dim] -> [rows, num_heads*head_dim]."""
    num_heads, rows, head_dim = x.shape
    if hasattr(pltpu, "einshape"):
        x3 = pltpu.einshape("hrd->rhd", x)
    else:
        x3 = jnp.swapaxes(x, 0, 1)
    return x3.reshape(rows, num_heads * head_dim)


def _cross_attention_kernel(hs_ref, ctx_ref, *rest,
                            num_heads, head_dim, hidden, has_mask):
    if has_mask:
        (mask_ref, wq_ref, bq_ref, wkv_ref, bkv_ref,
         o_ref, q_scr, m_scr, l_scr, acc_scr) = rest
    else:
        (wq_ref, bq_ref, wkv_ref, bkv_ref,
         o_ref, q_scr, m_scr, l_scr, acc_scr) = rest
        mask_ref = None

    ki = pl.program_id(2)

    # --- New (batch, q-tile): project Q once (score scale pre-folded into
    #     Wq/bq by prepare_attention_params) and reset online-softmax state.
    @pl.when(ki == 0)
    def _():
        hs = hs_ref[0]                                            # (tq, H) bf16
        q = jnp.dot(hs, wq_ref[...],
                    preferred_element_type=jnp.float32) + bq_ref[...]
        q_scr[...] = _head_major(q, num_heads, head_dim).astype(jnp.bfloat16)
        m_scr[...] = jnp.full(m_scr.shape, -jnp.inf, dtype=jnp.float32)
        l_scr[...] = jnp.zeros(l_scr.shape, dtype=jnp.float32)
        acc_scr[...] = jnp.zeros(acc_scr.shape, dtype=jnp.float32)

    # --- K/V projection for this key tile: single fused [Cd, 2H] MXU pass.
    ctx = ctx_ref[0]                                              # (tk, Cd) bf16
    kv = jnp.dot(ctx, wkv_ref[...],
                 preferred_element_type=jnp.float32) + bkv_ref[...]
    kh = _head_major(kv[:, :hidden], num_heads, head_dim).astype(jnp.bfloat16)
    vh = _head_major(kv[:, hidden:], num_heads, head_dim).astype(jnp.bfloat16)

    # --- Scores for ALL heads in one batched MXU matmul (heads = batch dim).
    s = jnp.einsum("hqd,hkd->hqk", q_scr[...], kh,
                   preferred_element_type=jnp.float32)            # (NH, tq, tk)
    if has_mask:
        s = s + mask_ref[...].astype(jnp.float32)                 # (1,tq,tk) bcast

    # --- Online softmax update (all f32; reductions over a lane-aligned tk).
    m_new = jnp.maximum(m_scr[...], jnp.max(s, axis=-1, keepdims=True))
    alpha = jnp.exp(m_scr[...] - m_new)
    p = jnp.exp(s - m_new)
    l_scr[...] = alpha * l_scr[...] + jnp.sum(p, axis=-1, keepdims=True)
    acc_scr[...] = alpha * acc_scr[...] + jnp.einsum(
        "hqk,hkd->hqd", p.astype(jnp.bfloat16), vh,
        preferred_element_type=jnp.float32)
    m_scr[...] = m_new

    # --- Last key tile: normalize (EUP reciprocal), merge heads, single
    #     lane-dense [tq, H] store.
    @pl.when(ki == pl.num_programs(2) - 1)
    def _():
        out = acc_scr[...] * pl.reciprocal(l_scr[...], approx=True)
        o_ref[0] = _head_merge(out).astype(o_ref.dtype)


def prepare_attention_params(params, *, num_heads, weight_dtype=jnp.bfloat16):
    """One-time parameter prep (call at load time, NOT per forward call):
       - fold 1/sqrt(head_dim) score scale into Wq/bq,
       - fuse Wk|Wv (and bk|bv) so K/V come from a single MXU pass,
       - cast weights to bf16 (MXU operand dtype; halves HBM bytes and the
         VMEM-resident footprint).  Biases stay f32 (added post f32-accumulate).
    """
    hidden = params["wq"].shape[1]
    assert hidden % num_heads == 0
    head_dim = hidden // num_heads
    scale = 1.0 / math.sqrt(head_dim)
    return {
        "wq": (params["wq"] * scale).astype(weight_dtype),
        "bq": (params["bq"] * scale).astype(jnp.float32),
        "wkv": jnp.concatenate([params["wk"], params["wv"]], axis=1).astype(weight_dtype),
        "bkv": jnp.concatenate([params["bk"], params["bv"]], axis=1).astype(jnp.float32),
    }


def attention_forward(hidden_states, context, prepared_params, attention_mask=None,
                      *, num_heads, block_q=None, block_k=None,
                      vmem_limit_bytes=32 * 1024 * 1024):
    B, Sq, H = hidden_states.shape
    Bc, Sk, Cd = context.shape
    assert Bc == B
    assert H % num_heads == 0
    head_dim = H // num_heads
    out_dtype = hidden_states.dtype

    # Tile sizes: pick the biggest that fits comfortably in VMEM.  On v7x
    # (64 MiB physical) keep block_q <= 512 and block_k at 512-1024; on
    # v5e/v6e (128 MiB) larger q tiles are fine.
    if block_q is None:
        block_q = Sq if Sq <= 256 else 256
    if block_k is None:
        block_k = Sk if Sk <= 512 else 512
    assert Sq % block_q == 0 and Sk % block_k == 0
    assert block_q == Sq or block_q % 8 == 0        # sublane alignment
    assert block_k == Sk or block_k % 8 == 0
    has_mask = attention_mask is not None
    if has_mask:
        assert attention_mask.shape == (B, Sq, Sk)
        # mask is tiled along both Sq and Sk -> key tile must be lane-aligned.
        assert block_k == Sk or block_k % 128 == 0

    nq = Sq // block_q
    nk = Sk // block_k

    # bf16 activations: MXU operand dtype + half the HBM->VMEM DMA bytes.
    hs = hidden_states.astype(jnp.bfloat16)
    ctx = context.astype(jnp.bfloat16)

    kernel = functools.partial(
        _cross_attention_kernel, num_heads=num_heads, head_dim=head_dim,
        hidden=H, has_mask=has_mask)

    in_arrays = [hs, ctx]
    in_specs = [
        # q tile of hidden_states: index independent of ki -> fetched once per
        # (b, qi) by the pipeline.
        pl.BlockSpec((1, block_q, H), lambda b, qi, ki: (b, qi, 0)),
        # key tile of context: streams along the innermost axis (double-buffered).
        pl.BlockSpec((1, block_k, Cd), lambda b, qi, ki: (b, ki, 0)),
    ]
    if has_mask:
        in_arrays.append(attention_mask)
        in_specs.append(pl.BlockSpec((1, block_q, block_k),
                                     lambda b, qi, ki: (b, qi, ki)))
    in_arrays += [prepared_params["wq"], prepared_params["bq"],
                  prepared_params["wkv"], prepared_params["bkv"]]
    # Constant index_maps -> projection weights/biases DMA'd once and kept
    # VMEM-resident across the whole grid.
    in_specs += [
        pl.BlockSpec((H, H), lambda b, qi, ki: (0, 0)),
        pl.BlockSpec((1, H), lambda b, qi, ki: (0, 0)),
        pl.BlockSpec((Cd, 2 * H), lambda b, qi, ki: (0, 0)),
        pl.BlockSpec((1, 2 * H), lambda b, qi, ki: (0, 0)),
    ]

    out = pl.pallas_call(
        kernel,
        out_shape=jax.ShapeDtypeStruct((B, Sq, H), out_dtype),
        grid=(B, nq, nk),
        in_specs=in_specs,
        out_specs=pl.BlockSpec((1, block_q, H), lambda b, qi, ki: (b, qi, 0)),
        scratch_shapes=[
            pltpu.VMEM((num_heads, block_q, head_dim), jnp.bfloat16),  # Q (head-major)
            pltpu.VMEM((num_heads, block_q, 1), jnp.float32),          # running max m
            pltpu.VMEM((num_heads, block_q, 1), jnp.float32),          # running sum l
            pltpu.VMEM((num_heads, block_q, head_dim), jnp.float32),   # output acc
        ],
        compiler_params=pltpu.CompilerParams(
            # batch / q-tile axes shard across TensorCores (2x on v7x megacore);
            # the key axis carries the online-softmax state -> arbitrary, last.
            dimension_semantics=("parallel", "parallel", "arbitrary"),
            vmem_limit_bytes=vmem_limit_bytes,
        ),
    )(*in_arrays)

    return out


def _reference(hidden_states, context, params, attention_mask, num_heads):
    B, Sq, H = hidden_states.shape
    _, Sk, Cd = context.shape
    dH = H // num_heads
    q = hidden_states @ params["wq"] + params["bq"][0]
    k = context @ params["wk"] + params["bk"][0]
    v = context @ params["wv"] + params["bv"][0]
    q = q.reshape(B, Sq, num_heads, dH).transpose(0, 2, 1, 3)
    k = k.reshape(B, Sk, num_heads, dH).transpose(0, 2, 1, 3)
    v = v.reshape(B, Sk, num_heads, dH).transpose(0, 2, 1, 3)
    s = jnp.einsum("bhqd,bhkd->bhqk", q, k) / math.sqrt(dH)
    if attention_mask is not None:
        s = s + attention_mask[:, None, :, :]
    p = jax.nn.softmax(s, axis=-1)
    o = jnp.einsum("bhqk,bhkd->bhqd", p, v)
    return o.transpose(0, 2, 1, 3).reshape(B, Sq, H)


if __name__ == "__main__":
    # Config: cross_hidden_size=32, cross_num_attention_heads=4 (head_dim=8),
    # ctx_dim=32.  Sk=256 with block_k=128 keeps key tiles lane-aligned so the
    # softmax reductions are unmasked; block_q=16 keeps bf16 sublane tiling
    # happy.  Grid = (B, Sq/16, Sk/128) = (2, 2, 2): exercises the online
    # softmax across two key tiles and pipelined DMA across q tiles / batch.
    B, Sq, Sk, H, Cd, NH = 2, 32, 256, 32, 32, 4

    key = jax.random.PRNGKey(0)
    ks = jax.random.split(key, 9)
    hidden_states = jax.random.normal(ks[0], (B, Sq, H), jnp.float32)
    context = jax.random.normal(ks[1], (B, Sk, Cd), jnp.float32)
    attention_mask = jnp.where(
        jax.random.uniform(ks[2], (B, Sq, Sk)) > 0.9, -10000.0, 0.0
    ).astype(jnp.float32)

    scale_q = 1.0 / math.sqrt(H)
    scale_kv = 1.0 / math.sqrt(Cd)
    params = {
        "wq": jax.random.normal(ks[3], (H, H), jnp.float32) * scale_q,
        "bq": jax.random.normal(ks[4], (1, H), jnp.float32) * 0.02,
        "wk": jax.random.normal(ks[5], (Cd, H), jnp.float32) * scale_kv,
        "bk": jax.random.normal(ks[6], (1, H), jnp.float32) * 0.02,
        "wv": jax.random.normal(ks[7], (Cd, H), jnp.float32) * scale_kv,
        "bv": jax.random.normal(ks[8], (1, H), jnp.float32) * 0.02,
    }

    # One-time parameter prep (scale fold + KV fusion + bf16) at load time.
    prepared = prepare_attention_params(params, num_heads=NH)

    fwd = jax.jit(functools.partial(attention_forward, num_heads=NH,
                                    block_q=16, block_k=128))

    # bf16 MXU operands => compare against the f32 reference at bf16-level
    # tolerance (the exact-softmax deviation from approx reciprocal is ~1e-3).
    TOL = dict(atol=3e-2, rtol=3e-2)

    # Masked path.
    out = jax.block_until_ready(fwd(hidden_states, context, prepared, attention_mask))
    ref = _reference(hidden_states, context, params, attention_mask, NH)
    assert out.shape == (B, Sq, H)
    assert jnp.allclose(out, ref, **TOL), "mismatch vs reference (mask)"

    # No-mask specialization path (skips the mask input / DMA / add entirely).
    out_nm = jax.block_until_ready(fwd(hidden_states, context, prepared, None))
    ref_nm = _reference(hidden_states, context, params, None, NH)
    assert jnp.allclose(out_nm, ref_nm, **TOL), "mismatch vs reference (no mask)"

    print("KERNEL_OK")
</pallas_src>

<mosaic_0001>
module attributes {stable_mosaic.version = 11 : i64} {
  func.func @_cross_attention_kernel(%arg0: i32, %arg1: i32, %arg2: i32, %arg3: memref<1x16x32xbf16, #tpu.memory_space<vmem>>, %arg4: memref<1x128x32xbf16, #tpu.memory_space<vmem>>, %arg5: memref<1x16x128xf32, #tpu.memory_space<vmem>>, %arg6: memref<32x32xbf16, #tpu.memory_space<vmem>>, %arg7: memref<1x32xf32, #tpu.memory_space<vmem>>, %arg8: memref<32x64xbf16, #tpu.memory_space<vmem>>, %arg9: memref<1x64xf32, #tpu.memory_space<vmem>>, %arg10: memref<1x16x32xf32, #tpu.memory_space<vmem>>, %arg11: memref<4x16x8xbf16, #tpu.memory_space<vmem>>, %arg12: memref<4x16x1xf32, #tpu.memory_space<vmem>>, %arg13: memref<4x16x1xf32, #tpu.memory_space<vmem>>, %arg14: memref<4x16x8xf32, #tpu.memory_space<vmem>>) attributes {dimension_semantics = [#tpu.dimension_semantics<parallel>, #tpu.dimension_semantics<parallel>, #tpu.dimension_semantics<arbitrary>], iteration_bounds = array<i64: 2, 2, 2>, scalar_prefetch = 0 : i64, scratch_operands = 4 : i64, tpu.core_type = #tpu.core_type<tc>, window_params = [{transform_indices = @transform_0, window_bounds = array<i64: 1, 16, 32>}, {transform_indices = @transform_1, window_bounds = array<i64: 1, 128, 32>}, {transform_indices = @transform_2, window_bounds = array<i64: 1, 16, 128>}, {pipeline_mode = #tpu.pipeline_mode<synchronous>, transform_indices = @transform_3, window_bounds = array<i64: 32, 32>}, {pipeline_mode = #tpu.pipeline_mode<synchronous>, transform_indices = @transform_4, window_bounds = array<i64: 1, 32>}, {pipeline_mode = #tpu.pipeline_mode<synchronous>, transform_indices = @transform_5, window_bounds = array<i64: 32, 64>}, {pipeline_mode = #tpu.pipeline_mode<synchronous>, transform_indices = @transform_6, window_bounds = array<i64: 1, 64>}, {transform_indices = @transform_7, window_bounds = array<i64: 1, 16, 32>}]} {
    %c0_i32 = arith.constant 0 : i32
    %0 = arith.cmpi eq, %arg2, %c0_i32 : i32
    %1 = arith.extui %0 : i1 to i32
    %c0_i32_0 = arith.constant 0 : i32
    %2 = arith.cmpi ne, %1, %c0_i32_0 : i32
    scf.if %2 {
      %c0_39 = arith.constant 0 : index
      %c0_40 = arith.constant 0 : index
      %c0_41 = arith.constant 0 : index
      %50 = vector.load %arg3[%c0_39, %c0_40, %c0_41] : memref<1x16x32xbf16, #tpu.memory_space<vmem>>, vector<1x16x32xbf16>
      %51 = vector.shape_cast %50 : vector<1x16x32xbf16> to vector<16x32xbf16>
      %c0_42 = arith.constant 0 : index
      %c0_43 = arith.constant 0 : index
      %52 = vector.load %arg6[%c0_42, %c0_43] : memref<32x32xbf16, #tpu.memory_space<vmem>>, vector<32x32xbf16>
      %cst_44 = arith.constant dense<0.000000e+00> : vector<16x32xf32>
      %53 = tpu.matmul %51, %52, %cst_44 {dimension_numbers = #tpu.dot_dimension_numbers<[1], [0], [0], [1], [0, 0, 1, 1], [], []>} : vector<16x32xbf16>, vector<32x32xbf16>, vector<16x32xf32> -> vector<16x32xf32>
      %c0_45 = arith.constant 0 : index
      %c0_46 = arith.constant 0 : index
      %54 = vector.load %arg7[%c0_45, %c0_46] : memref<1x32xf32, #tpu.memory_space<vmem>>, vector<1x32xf32>
      %55 = vector.broadcast %54 : vector<1x32xf32> to vector<16x32xf32>
      %56 = arith.addf %53, %55 : vector<16x32xf32>
      %57 = vector.shape_cast %56 : vector<16x32xf32> to vector<16x4x8xf32>
      %58 = tpu.transpose %57, [1, 0, 2] : vector<16x4x8xf32> -> vector<4x16x8xf32>
      %59 = arith.truncf %58 : vector<4x16x8xf32> to vector<4x16x8xbf16>
      %c0_47 = arith.constant 0 : index
      %c0_48 = arith.constant 0 : index
      %c0_49 = arith.constant 0 : index
      %60 = vector.load %arg11[%c0_47, %c0_48, %c0_49] : memref<4x16x8xbf16, #tpu.memory_space<vmem>>, vector<4x16x8xbf16>
      tpu.vector_store %arg11[%c0_47, %c0_48, %c0_49], %59 {strides = array<i32>} : memref<4x16x8xbf16, #tpu.memory_space<vmem>>, vector<4x16x8xbf16>,
      %cst_50 = arith.constant 0xFF800000 : f32
      %61 = vector.broadcast %cst_50 : f32 to vector<4x16x1xf32>
      %c0_51 = arith.constant 0 : index
      %c0_52 = arith.constant 0 : index
      %c0_53 = arith.constant 0 : index
      %62 = vector.load %arg12[%c0_51, %c0_52, %c0_53] : memref<4x16x1xf32, #tpu.memory_space<vmem>>, vector<4x16x1xf32>
      tpu.vector_store %arg12[%c0_51, %c0_52, %c0_53], %61 {strides = array<i32>} : memref<4x16x1xf32, #tpu.memory_space<vmem>>, vector<4x16x1xf32>,
      %cst_54 = arith.constant 0.000000e+00 : f32
      %63 = vector.broadcast %cst_54 : f32 to vector<4x16x1xf32>
      %c0_55 = arith.constant 0 : index
      %c0_56 = arith.constant 0 : index
      %c0_57 = arith.constant 0 : index
      %64 = vector.load %arg13[%c0_55, %c0_56, %c0_57] : memref<4x16x1xf32, #tpu.memory_space<vmem>>, vector<4x16x1xf32>
      tpu.vector_store %arg13[%c0_55, %c0_56, %c0_57], %63 {strides = array<i32>} : memref<4x16x1xf32, #tpu.memory_space<vmem>>, vector<4x16x1xf32>,
      %cst_58 = arith.constant 0.000000e+00 : f32
      %65 = vector.broadcast %cst_58 : f32 to vector<4x16x8xf32>
      %c0_59 = arith.constant 0 : index
      %c0_60 = arith.constant 0 : index
      %c0_61 = arith.constant 0 : index
      %66 = vector.load %arg14[%c0_59, %c0_60, %c0_61] : memref<4x16x8xf32, #tpu.memory_space<vmem>>, vector<4x16x8xf32>
      tpu.vector_store %arg14[%c0_59, %c0_60, %c0_61], %65 {strides = array<i32>} : memref<4x16x8xf32, #tpu.memory_space<vmem>>, vector<4x16x8xf32>,
    } else {
    }
    %c0 = arith.constant 0 : index
    %c0_1 = arith.constant 0 : index
    %c0_2 = arith.constant 0 : index
    %3 = vector.load %arg4[%c0, %c0_1, %c0_2] : memref<1x128x32xbf16, #tpu.memory_space<vmem>>, vector<1x128x32xbf16>
    %4 = vector.shape_cast %3 : vector<1x128x32xbf16> to vector<128x32xbf16>
    %c0_3 = arith.constant 0 : index
    %c0_4 = arith.constant 0 : index
    %5 = vector.load %arg8[%c0_3, %c0_4] : memref<32x64xbf16, #tpu.memory_space<vmem>>, vector<32x64xbf16>
    %cst = arith.constant dense<0.000000e+00> : vector<128x64xf32>
    %6 = tpu.matmul %4, %5, %cst {dimension_numbers = #tpu.dot_dimension_numbers<[1], [0], [0], [1], [0, 0, 1, 1], [], []>} : vector<128x32xbf16>, vector<32x64xbf16>, vector<128x64xf32> -> vector<128x64xf32>
    %c0_5 = arith.constant 0 : index
    %c0_6 = arith.constant 0 : index
    %7 = vector.load %arg9[%c0_5, %c0_6] : memref<1x64xf32, #tpu.memory_space<vmem>>, vector<1x64xf32>
    %8 = vector.broadcast %7 : vector<1x64xf32> to vector<128x64xf32>
    %9 = arith.addf %6, %8 : vector<128x64xf32>
    %10 = vector.extract_strided_slice %9 {offsets = [0, 0], sizes = [128, 32], strides = [1, 1]} : vector<128x64xf32> to vector<128x32xf32>
    %11 = vector.shape_cast %10 : vector<128x32xf32> to vector<128x4x8xf32>
    %12 = tpu.transpose %11, [1, 0, 2] : vector<128x4x8xf32> -> vector<4x128x8xf32>
    %13 = arith.truncf %12 : vector<4x128x8xf32> to vector<4x128x8xbf16>
    %14 = vector.extract_strided_slice %9 {offsets = [0, 32], sizes = [128, 32], strides = [1, 1]} : vector<128x64xf32> to vector<128x32xf32>
    %15 = vector.shape_cast %14 : vector<128x32xf32> to vector<128x4x8xf32>
    %16 = tpu.transpose %15, [1, 0, 2] : vector<128x4x8xf32> -> vector<4x128x8xf32>
    %17 = arith.truncf %16 : vector<4x128x8xf32> to vector<4x128x8xbf16>
    %c0_7 = arith.constant 0 : index
    %c0_8 = arith.constant 0 : index
    %c0_9 = arith.constant 0 : index
    %18 = vector.load %arg11[%c0_7, %c0_8, %c0_9] : memref<4x16x8xbf16, #tpu.memory_space<vmem>>, vector<4x16x8xbf16>
    "tpu.trace_start"() <{level = 10 : i32, message = "hqd,hkd->hqk"}> : () -> ()
    %cst_10 = arith.constant dense<0.000000e+00> : vector<4x16x128xf32>
    %19 = tpu.matmul %18, %13, %cst_10 {dimension_numbers = #tpu.dot_dimension_numbers<[2], [2], [1], [1], [0, 0, 0, 1, 1, 1], [0], [0]>} : vector<4x16x8xbf16>, vector<4x128x8xbf16>, vector<4x16x128xf32> -> vector<4x16x128xf32>
    "tpu.trace_stop"() : () -> ()
    %c0_11 = arith.constant 0 : index
    %c0_12 = arith.constant 0 : index
    %c0_13 = arith.constant 0 : index
    %20 = vector.load %arg5[%c0_11, %c0_12, %c0_13] : memref<1x16x128xf32, #tpu.memory_space<vmem>>, vector<1x16x128xf32>
    %21 = vector.broadcast %20 : vector<1x16x128xf32> to vector<4x16x128xf32>
    %22 = arith.addf %19, %21 : vector<4x16x128xf32>
    %c0_14 = arith.constant 0 : index
    %c0_15 = arith.constant 0 : index
    %c0_16 = arith.constant 0 : index
    %23 = vector.load %arg12[%c0_14, %c0_15, %c0_16] : memref<4x16x1xf32, #tpu.memory_space<vmem>>, vector<4x16x1xf32>
    %cst_17 = arith.constant dense<0xFF800000> : vector<4x16xf32>
    %24 = vector.multi_reduction <maximumf>, %22, %cst_17 [2] : vector<4x16x128xf32> to vector<4x16xf32>
    %25 = vector.shape_cast %24 : vector<4x16xf32> to vector<4x16x1xf32>
    %26 = arith.maximumf %23, %25 : vector<4x16x1xf32>
    %c0_18 = arith.constant 0 : index
    %c0_19 = arith.constant 0 : index
    %c0_20 = arith.constant 0 : index
    %27 = vector.load %arg12[%c0_18, %c0_19, %c0_20] : memref<4x16x1xf32, #tpu.memory_space<vmem>>, vector<4x16x1xf32>
    %28 = arith.subf %27, %26 : vector<4x16x1xf32>
    %29 = math.exp %28 : vector<4x16x1xf32>
    %30 = vector.broadcast %26 : vector<4x16x1xf32> to vector<4x16x128xf32>
    %31 = arith.subf %22, %30 : vector<4x16x128xf32>
    %32 = math.exp %31 : vector<4x16x128xf32>
    %c0_21 = arith.constant 0 : index
    %c0_22 = arith.constant 0 : index
    %c0_23 = arith.constant 0 : index
    %33 = vector.load %arg13[%c0_21, %c0_22, %c0_23] : memref<4x16x1xf32, #tpu.memory_space<vmem>>, vector<4x16x1xf32>
    %34 = arith.mulf %29, %33 : vector<4x16x1xf32>
    %cst_24 = arith.constant dense<0.000000e+00> : vector<4x16xf32>
    %35 = vector.multi_reduction <add>, %32, %cst_24 [2] : vector<4x16x128xf32> to vector<4x16xf32>
    %36 = vector.shape_cast %35 : vector<4x16xf32> to vector<4x16x1xf32>
    %37 = arith.addf %34, %36 : vector<4x16x1xf32>
    %c0_25 = arith.constant 0 : index
    %c0_26 = arith.constant 0 : index
    %c0_27 = arith.constant 0 : index
    %38 = vector.load %arg13[%c0_25, %c0_26, %c0_27] : memref<4x16x1xf32, #tpu.memory_space<vmem>>, vector<4x16x1xf32>
    tpu.vector_store %arg13[%c0_25, %c0_26, %c0_27], %37 {strides = array<i32>} : memref<4x16x1xf32, #tpu.memory_space<vmem>>, vector<4x16x1xf32>,
    %c0_28 = arith.constant 0 : index
    %c0_29 = arith.constant 0 : index
    %c0_30 = arith.constant 0 : index
    %39 = vector.load %arg14[%c0_28, %c0_29, %c0_30] : memref<4x16x8xf32, #tpu.memory_space<vmem>>, vector<4x16x8xf32>
    %40 = vector.broadcast %29 : vector<4x16x1xf32> to vector<4x16x8xf32>
    %41 = arith.mulf %40, %39 : vector<4x16x8xf32>
    %42 = arith.truncf %32 : vector<4x16x128xf32> to vector<4x16x128xbf16>
    "tpu.trace_start"() <{level = 10 : i32, message = "hqk,hkd->hqd"}> : () -> ()
    %cst_31 = arith.constant dense<0.000000e+00> : vector<4x16x8xf32>
    %43 = tpu.matmul %42, %17, %cst_31 {dimension_numbers = #tpu.dot_dimension_numbers<[2], [1], [1], [2], [0, 0, 0, 1, 1, 2], [0], [0]>} : vector<4x16x128xbf16>, vector<4x128x8xbf16>, vector<4x16x8xf32> -> vector<4x16x8xf32>
    "tpu.trace_stop"() : () -> ()
    %44 = arith.addf %41, %43 : vector<4x16x8xf32>
    %c0_32 = arith.constant 0 : index
    %c0_33 = arith.constant 0 : index
    %c0_34 = arith.constant 0 : index
    %45 = vector.load %arg14[%c0_32, %c0_33, %c0_34] : memref<4x16x8xf32, #tpu.memory_space<vmem>>, vector<4x16x8xf32>
    tpu.vector_store %arg14[%c0_32, %c0_33, %c0_34], %44 {strides = array<i32>} : memref<4x16x8xf32, #tpu.memory_space<vmem>>, vector<4x16x8xf32>,
    %c0_35 = arith.constant 0 : index
    %c0_36 = arith.constant 0 : index
    %c0_37 = arith.constant 0 : index
    %46 = vector.load %arg12[%c0_35, %c0_36, %c0_37] : memref<4x16x1xf32, #tpu.memory_space<vmem>>, vector<4x16x1xf32>
    tpu.vector_store %arg12[%c0_35, %c0_36, %c0_37], %26 {strides = array<i32>} : memref<4x16x1xf32, #tpu.memory_space<vmem>>, vector<4x16x1xf32>,
    %c1_i32 = arith.constant 1 : i32
    %47 = arith.cmpi eq, %arg2, %c1_i32 : i32
    %48 = arith.extui %47 : i1 to i32
    %c0_i32_38 = arith.constant 0 : i32
    %49 = arith.cmpi ne, %48, %c0_i32_38 : i32
    scf.if %49 {
      %c0_39 = arith.constant 0 : index
      %c0_40 = arith.constant 0 : index
      %c0_41 = arith.constant 0 : index
      %50 = vector.load %arg14[%c0_39, %c0_40, %c0_41] : memref<4x16x8xf32, #tpu.memory_space<vmem>>, vector<4x16x8xf32>
      %c0_42 = arith.constant 0 : index
      %c0_43 = arith.constant 0 : index
      %c0_44 = arith.constant 0 : index
      %51 = vector.load %arg13[%c0_42, %c0_43, %c0_44] : memref<4x16x1xf32, #tpu.memory_space<vmem>>, vector<4x16x1xf32>
      %52 = tpu.reciprocal %51 {approx = true} : vector<4x16x1xf32> -> vector<4x16x1xf32>
      %53 = vector.broadcast %52 : vector<4x16x1xf32> to vector<4x16x8xf32>
      %54 = arith.mulf %50, %53 : vector<4x16x8xf32>
      %55 = tpu.transpose %54, [1, 0, 2] : vector<4x16x8xf32> -> vector<16x4x8xf32>
      %56 = vector.shape_cast %55 : vector<16x4x8xf32> to vector<16x32xf32>
      %c0_45 = arith.constant 0 : index
      %c0_46 = arith.constant 0 : index
      %c0_47 = arith.constant 0 : index
      %57 = vector.load %arg10[%c0_45, %c0_46, %c0_47] : memref<1x16x32xf32, #tpu.memory_space<vmem>>, vector<1x16x32xf32>
      %58 = vector.shape_cast %57 : vector<1x16x32xf32> to vector<16x32xf32>
      %59 = vector.shape_cast %56 : vector<16x32xf32> to vector<1x16x32xf32>
      tpu.vector_store %arg10[%c0_45, %c0_46, %c0_47], %59 {strides = array<i32>} : memref<1x16x32xf32, #tpu.memory_space<vmem>>, vector<1x16x32xf32>,
    } else {
    }
    return
  }
  func.func @transform_0(%arg0: i32, %arg1: i32, %arg2: i32) -> (i32, i32, i32) {
    %c0_i32 = arith.constant 0 : i32
    %c0_i32_0 = arith.constant 0 : i32
    return %arg0, %arg1, %c0_i32 : i32, i32, i32
  }
  func.func @transform_1(%arg0: i32, %arg1: i32, %arg2: i32) -> (i32, i32, i32) {
    %c0_i32 = arith.constant 0 : i32
    %c0_i32_0 = arith.constant 0 : i32
    return %arg0, %arg2, %c0_i32 : i32, i32, i32
  }
  func.func @transform_2(%arg0: i32, %arg1: i32, %arg2: i32) -> (i32, i32, i32) {
    %c0_i32 = arith.constant 0 : i32
    return %arg0, %arg1, %arg2 : i32, i32, i32
  }
  func.func @transform_3(%arg0: i32, %arg1: i32, %arg2: i32) -> (i32, i32) {
    %c0_i32 = arith.constant 0 : i32
    %c0_i32_0 = arith.constant 0 : i32
    %c0_i32_1 = arith.constant 0 : i32
    return %c0_i32, %c0_i32_0 : i32, i32
  }
  func.func @transform_4(%arg0: i32, %arg1: i32, %arg2: i32) -> (i32, i32) {
    %c0_i32 = arith.constant 0 : i32
    %c0_i32_0 = arith.constant 0 : i32
    %c0_i32_1 = arith.constant 0 : i32
    return %c0_i32, %c0_i32_0 : i32, i32
  }
  func.func @transform_5(%arg0: i32, %arg1: i32, %arg2: i32) -> (i32, i32) {
    %c0_i32 = arith.constant 0 : i32
    %c0_i32_0 = arith.constant 0 : i32
    %c0_i32_1 = arith.constant 0 : i32
    return %c0_i32, %c0_i32_0 : i32, i32
  }
  func.func @transform_6(%arg0: i32, %arg1: i32, %arg2: i32) -> (i32, i32) {
    %c0_i32 = arith.constant 0 : i32
    %c0_i32_0 = arith.constant 0 : i32
    %c0_i32_1 = arith.constant 0 : i32
    return %c0_i32, %c0_i32_0 : i32, i32
  }
  func.func @transform_7(%arg0: i32, %arg1: i32, %arg2: i32) -> (i32, i32, i32) {
    %c0_i32 = arith.constant 0 : i32
    %c0_i32_0 = arith.constant 0 : i32
    return %arg0, %arg1, %c0_i32 : i32, i32, i32
  }
}

</mosaic_0001>

<llo_original>
// kernel: attention_forward.1
$region0: #{attention_forward.1}
  #allocation0 [shape = 'u32[]', space=smem, size = 0x4, offset = 0x4, fixed_abs, tag = 'smem constant byte address 0x4 - core index']
  #allocation1 [shape = 'u32[144,128]{1,0:T(1,128)}', space=vmem, size = 0x12000, scoped, tag = 'internal scratch']
  #allocation2 [shape = 'bf16[4,16,8]{2,1,0:T(16,128)(2,1)}', space=vmem, size = 0x4000, scoped, tag = 'scratch operand']
  #allocation3 [shape = 'f32[4,16,1]{2,1,0:T(8,128)}', space=vmem, size = 0x8000, scoped, tag = 'scratch operand']
  #allocation4 [shape = 'f32[4,16,1]{2,1,0:T(8,128)}', space=vmem, size = 0x8000, scoped, tag = 'scratch operand']
  #allocation5 [shape = 'f32[4,16,8]{2,1,0:T(8,128)}', space=vmem, size = 0x8000, scoped, tag = 'scratch operand']
  %s0 = inlined_call_operand.vmem [shape: bf16[2,32,32], index: 0, kind: input, shape index: {}]
  %s1 = inlined_call_operand.vmem [shape: bf16[2,256,32], index: 1, kind: input, shape index: {}]
  %s2 = inlined_call_operand.vmem [shape: f32[2,32,256], index: 2, kind: input, shape index: {}]
  %s3 = inlined_call_operand.vmem [shape: bf16[32,32], index: 3, kind: input, shape index: {}]
  %s4 = inlined_call_operand.vmem [shape: f32[1,32], index: 4, kind: input, shape index: {}]
  %s5 = inlined_call_operand.vmem [shape: bf16[32,64], index: 5, kind: input, shape index: {}]
  %s6 = inlined_call_operand.vmem [shape: f32[1,64], index: 6, kind: input, shape index: {}]
  %s7 = inlined_call_operand.hbm [shape: f32[2,32,32], index: 7, kind: output, shape index: {}]
  %s8 = sld [smem:[#allocation0]]
  $region107: #{attention_forward.1} parent=0
    _
  %s10 = ssub.s32 1, %s8
  %s11 = scalar_select 0, %s10, %s8
  $region1: #{attention_forward.1} parent=0
    #allocation6 [shape = 'u8[16384]{0}', space=vmem, size = 0x4000, scoped, tag = 'input window, operand 2']
    #allocation7 [shape = 'u8[16384]{0}', space=vmem, size = 0x4000, scoped, tag = 'output window, operand 0']
    #allocation8 [shape = 's32[2]{0}', space=sflag, size = 0x8, scoped, tag = 'scoped memory for attention_forward.1']
    %12 = vsyncpa [#allocation8], 0
    %s13 = scalar_lea.sflag [#allocation8], 1
    %14 = vsyncpa %s13, 0
    loop: start=0, step=1, limit=10
    $region2: #{attention_forward.1} parent=1 // loop_pre_header
      _
    $region3: #{attention_forward.1} parent=1 // loop_header
      %s16 = sphi 0, %s20
      %p17 = scmp.ge.s32.totalorder %s16, 10
      %s23 = sphi 0, %s42
      %s24 = sphi 0, %s38
      %s25 = sphi 0, %s34
      %s26 = sphi 0, %s23
      %s27 = sphi 0, %s24
      %s28 = sphi 0, %s25
      %s29 = sphi 0, %s26
      %s30 = sphi 0, %s27
      %s31 = sphi 0, %s28
      %s47 = sphi 0, %s49
      %s50 = sphi 0, %s47
      %s51 = sphi 0, %s50
      %s67 = sphi 0, %s51
      %s75 = sphi 0, %s77
      %s78 = sphi 0, %s75
      %s79 = sphi 0, %s78
      %s95 = sphi 0, %s79
      %s105 = sphi 0, %s107
      %s108 = sphi 0, %s105
      %s109 = sphi 0, %s108
      %s125 = sphi 0, %s109
      %s129 = sphi 0, %s129
      %s131 = sphi 0, %s129
      %s132 = sphi 0, %s131
      %s146 = sphi 0, %s132
      %s150 = sphi 0, %s150
      %s152 = sphi 0, %s150
      %s153 = sphi 0, %s152
      %s167 = sphi 0, %s153
      %s171 = sphi 0, %s171
      %s173 = sphi 0, %s171
      %s174 = sphi 0, %s173
      %s188 = sphi 0, %s174
      %s192 = sphi 0, %s192
      %s194 = sphi 0, %s192
      %s195 = sphi 0, %s194
      %s209 = sphi 0, %s195
      %s217 = sphi 0, %s219
      %s220 = sphi 0, %s217
      %s221 = sphi 0, %s220
      %s237 = sphi 0, %s221
    $region4: #{attention_forward.1} parent=1 // loop_header_branch
      %19 = sbr.rel (%p17) target = $region8
    $region5: #{attention_forward.1} parent=1 // loop_body
      %s21 = ssub.s32 %s16, 1
      %s22 = ssub.s32 %s16, 2
      %s32 = sadd.s32 1, %s25
      %p33 = scmp.ge.s32.totalorder %s32, 2
      %s34 = scalar_select %p33, 0, %s32
      %s35 = sadd.s32 1, %s24
      %s36 = scalar_select %p33, %s35, %s24
      %p37 = scmp.ge.s32.totalorder %s36, 2
      %s38 = scalar_select %p37, 0, %s36
      %s39 = sadd.s32 1, %s23
      %s40 = scalar_select %p37, %s39, %s23
      %p41 = scmp.ge.s32.totalorder %s40, 2
      %s42 = scalar_select %p41, 0, %s40
      %s43 = ssub.s32 %s23, %s42
      %s44 = ssub.s32 %s24, %s38
      %s45 = sor.u32 %s43, %s44
      %p46 = scmp.eq.s32.totalorder %s45, 0
      %s48 = sadd.s32 %s47, 1
      %s49 = scalar_select %p46, %s47, %s48
      %p52 = pneg %p46
      %p53 = scmp.eq.s32.totalorder %s16, 7
      %p54 = por %p52, %p53
      %p55 = scmp.ne.s32.totalorder %s47, %s50
      %p56 = scmp.eq.s32.totalorder %s16, 0
      %p57 = por %p55, %p56
      %p58 = scmp.ne.s32.totalorder %s47, %s50
      %p59 = scmp.eq.s32.totalorder %s21, 7
      %p60 = por %p58, %p59
      %p61 = scmp.ne.s32.totalorder %s50, %s51
      %p62 = scmp.eq.s32.totalorder %s21, 0
      %p63 = por %p61, %p62
      %p64 = scmp.ne.s32.totalorder %s50, %s51
      %p65 = scmp.eq.s32.totalorder %s22, 7
      %p66 = por %p64, %p65
      %p68 = scmp.ne.s32.totalorder %s51, %s67
      %p69 = scmp.eq.s32.totalorder %s22, 0
      %p70 = por %p68, %p69
      %s71 = ssub.s32 %s23, %s42
      %s72 = ssub.s32 %s25, %s34
      %s73 = sor.u32 %s71, %s72
      %p74 = scmp.eq.s32.totalorder %s73, 0
      %s76 = sadd.s32 %s75, 1
      %s77 = scalar_select %p74, %s75, %s76
      %p80 = pneg %p74
      %p81 = scmp.eq.s32.totalorder %s16, 7
      %p82 = por %p80, %p81
      %p83 = scmp.ne.s32.totalorder %s75, %s78
      %p84 = scmp.eq.s32.totalorder %s16, 0
      %p85 = por %p83, %p84
      %p86 = scmp.ne.s32.totalorder %s75, %s78
      %p87 = scmp.eq.s32.totalorder %s21, 7
      %p88 = por %p86, %p87
      %p89 = scmp.ne.s32.totalorder %s78, %s79
      %p90 = scmp.eq.s32.totalorder %s21, 0
      %p91 = por %p89, %p90
      %p92 = scmp.ne.s32.totalorder %s78, %s79
      %p93 = scmp.eq.s32.totalorder %s22, 7
      %p94 = por %p92, %p93
      %p96 = scmp.ne.s32.totalorder %s79, %s95
      %p97 = scmp.eq.s32.totalorder %s22, 0
      %p98 = por %p96, %p97
      %s99 = ssub.s32 %s23, %s42
      %s100 = ssub.s32 %s24, %s38
      %s101 = sor.u32 %s99, %s100
      %s102 = ssub.s32 %s25, %s34
      %s103 = sor.u32 %s101, %s102
      %p104 = scmp.eq.s32.totalorder %s103, 0
      %s106 = sadd.s32 %s105, 1
      %s107 = scalar_select %p104, %s105, %s106
      %p110 = pneg %p104
      %p111 = scmp.eq.s32.totalorder %s16, 7
      %p112 = por %p110, %p111
      %p113 = scmp.ne.s32.totalorder %s105, %s108
      %p114 = scmp.eq.s32.totalorder %s16, 0
      %p115 = por %p113, %p114
      %p116 = scmp.ne.s32.totalorder %s105, %s108
      %p117 = scmp.eq.s32.totalorder %s21, 7
      %p118 = por %p116, %p117
      %p119 = scmp.ne.s32.totalorder %s108, %s109
      %p120 = scmp.eq.s32.totalorder %s21, 0
      %p121 = por %p119, %p120
      %p122 = scmp.ne.s32.totalorder %s108, %s109
      %p123 = scmp.eq.s32.totalorder %s22, 7
      %p124 = por %p122, %p123
      %p126 = scmp.ne.s32.totalorder %s109, %s125
      %p127 = scmp.eq.s32.totalorder %s22, 0
      %p128 = por %p126, %p127
      %s130 = sadd.s32 %s129, 1
      %p133 = scmp.eq.s32.totalorder %s16, 7
      %p134 = scmp.ne.s32.totalorder %s129, %s131
      %p135 = scmp.eq.s32.totalorder %s16, 0
      %p136 = por %p134, %p135
      %p137 = scmp.ne.s32.totalorder %s129, %s131
      %p138 = scmp.eq.s32.totalorder %s21, 7
      %p139 = por %p137, %p138
      %p140 = scmp.ne.s32.totalorder %s131, %s132
      %p141 = scmp.eq.s32.totalorder %s21, 0
      %p142 = por %p140, %p141
      %p143 = scmp.ne.s32.totalorder %s131, %s132
      %p144 = scmp.eq.s32.totalorder %s22, 7
      %p145 = por %p143, %p144
      %p147 = scmp.ne.s32.totalorder %s132, %s146
      %p148 = scmp.eq.s32.totalorder %s22, 0
      %p149 = por %p147, %p148
      %s151 = sadd.s32 %s150, 1
      %p154 = scmp.eq.s32.totalorder %s16, 7
      %p155 = scmp.ne.s32.totalorder %s150, %s152
      %p156 = scmp.eq.s32.totalorder %s16, 0
      %p157 = por %p155, %p156
      %p158 = scmp.ne.s32.totalorder %s150, %s152
      %p159 = scmp.eq.s32.totalorder %s21, 7
      %p160 = por %p158, %p159
      %p161 = scmp.ne.s32.totalorder %s152, %s153
      %p162 = scmp.eq.s32.totalorder %s21, 0
      %p163 = por %p161, %p162
      %p164 = scmp.ne.s32.totalorder %s152, %s153
      %p165 = scmp.eq.s32.totalorder %s22, 7
      %p166 = por %p164, %p165
      %p168 = scmp.ne.s32.totalorder %s153, %s167
      %p169 = scmp.eq.s32.totalorder %s22, 0
      %p170 = por %p168, %p169
      %s172 = sadd.s32 %s171, 1
      %p175 = scmp.eq.s32.totalorder %s16, 7
      %p176 = scmp.ne.s32.totalorder %s171, %s173
      %p177 = scmp.eq.s32.totalorder %s16, 0
      %p178 = por %p176, %p177
      %p179 = scmp.ne.s32.totalorder %s171, %s173
      %p180 = scmp.eq.s32.totalorder %s21, 7
      %p181 = por %p179, %p180
      %p182 = scmp.ne.s32.totalorder %s173, %s174
      %p183 = scmp.eq.s32.totalorder %s21, 0
      %p184 = por %p182, %p183
      %p185 = scmp.ne.s32.totalorder %s173, %s174
      %p186 = scmp.eq.s32.totalorder %s22, 7
      %p187 = por %p185, %p186
      %p189 = scmp.ne.s32.totalorder %s174, %s188
      %p190 = scmp.eq.s32.totalorder %s22, 0
      %p191 = por %p189, %p190
      %s193 = sadd.s32 %s192, 1
      %p196 = scmp.eq.s32.totalorder %s16, 7
      %p197 = scmp.ne.s32.totalorder %s192, %s194
      %p198 = scmp.eq.s32.totalorder %s16, 0
      %p199 = por %p197, %p198
      %p200 = scmp.ne.s32.totalorder %s192, %s194
      %p201 = scmp.eq.s32.totalorder %s21, 7
      %p202 = por %p200, %p201
      %p203 = scmp.ne.s32.totalorder %s194, %s195
      %p204 = scmp.eq.s32.totalorder %s21, 0
      %p205 = por %p203, %p204
      %p206 = scmp.ne.s32.totalorder %s194, %s195
      %p207 = scmp.eq.s32.totalorder %s22, 7
      %p208 = por %p206, %p207
      %p210 = scmp.ne.s32.totalorder %s195, %s209
      %p211 = scmp.eq.s32.totalorder %s22, 0
      %p212 = por %p210, %p211
      %s213 = ssub.s32 %s23, %s42
      %s214 = ssub.s32 %s24, %s38
      %s215 = sor.u32 %s213, %s214
      %p216 = scmp.eq.s32.totalorder %s215, 0
      %s218 = sadd.s32 %s217, 1
      %s219 = scalar_select %p216, %s217, %s218
      %p222 = pneg %p216
      %p223 = scmp.eq.s32.totalorder %s16, 7
      %p224 = por %p222, %p223
      %p225 = scmp.ne.s32.totalorder %s217, %s220
      %p226 = scmp.eq.s32.totalorder %s16, 0
      %p227 = por %p225, %p226
      %p228 = scmp.ne.s32.totalorder %s217, %s220
      %p229 = scmp.eq.s32.totalorder %s21, 7
      %p230 = por %p228, %p229
      %p231 = scmp.ne.s32.totalorder %s220, %s221
      %p232 = scmp.eq.s32.totalorder %s21, 0
      %p233 = por %p231, %p232
      %p234 = scmp.ne.s32.totalorder %s220, %s221
      %p235 = scmp.eq.s32.totalorder %s22, 7
      %p236 = por %p234, %p235
      %p238 = scmp.ne.s32.totalorder %s221, %s237
      %p239 = scmp.eq.s32.totalorder %s22, 0
      %p240 = por %p238, %p239
      %p241 = scmp.le.s32.totalorder 1, %s16
      %p242 = scmp.lt.s32.totalorder %s16, 9
      %p243 = pnand %p241, %p242
      %p244 = pneg %p243
      // Predicated region
      $region9: #{attention_forward.1} parent=5 // pred_check
        _
      $region10: #{attention_forward.1} parent=5 // pred_check_branch
        %246 = sbr.rel (%p243) target = $region12
      $region11: #{attention_forward.1} parent=5 // pred_region
        %s247 = ssub.s32 %s16, 1
        // Predicated region
        $region13: #{attention_forward.1} parent=11 // pred_check
          %p248 = pneg %p142
        $region14: #{attention_forward.1} parent=11 // pred_check_branch
          %250 = sbr.rel (%p248) target = $region16
        $region15: #{attention_forward.1} parent=11 // pred_region
          _
        $region16: #{attention_forward.1} parent=11 // pred_fallthru
          _
        // Predicated region
        $region17: #{attention_forward.1} parent=11 // pred_check
          %p251 = pneg %p163
        $region18: #{attention_forward.1} parent=11 // pred_check_branch
          %253 = sbr.rel (%p251) target = $region20
        $region19: #{attention_forward.1} parent=11 // pred_region
          _
        $region20: #{attention_forward.1} parent=11 // pred_fallthru
          _
        // Predicated region
        $region21: #{attention_forward.1} parent=11 // pred_check
          %p254 = pneg %p184
        $region22: #{attention_forward.1} parent=11 // pred_check_branch
          %256 = sbr.rel (%p254) target = $region24
        $region23: #{attention_forward.1} parent=11 // pred_region
          _
        $region24: #{attention_forward.1} parent=11 // pred_fallthru
          _
        // Predicated region
        $region25: #{attention_forward.1} parent=11 // pred_check
          %p257 = pneg %p205
        $region26: #{attention_forward.1} parent=11 // pred_check_branch
          %259 = sbr.rel (%p257) target = $region28
        $region27: #{attention_forward.1} parent=11 // pred_region
          _
        $region28: #{attention_forward.1} parent=11 // pred_fallthru
          _
      $region12: #{attention_forward.1} parent=5 // pred_fallthru
        _
      %p260 = scmp.lt.s32.totalorder %s16, 8
      // Predicated region
      $region29: #{attention_forward.1} parent=5 // pred_check
        %p261 = pneg %p260
      $region30: #{attention_forward.1} parent=5 // pred_check_branch
        %263 = sbr.rel (%p261) target = $region32
      $region31: #{attention_forward.1} parent=5 // pred_region
        // Predicated region
        $region33: #{attention_forward.1} parent=31 // pred_check
          %p264 = pneg %p57
        $region34: #{attention_forward.1} parent=31 // pred_check_branch
          %266 = sbr.rel (%p264) target = $region36
        $region35: #{attention_forward.1} parent=31 // pred_region
          %s267 = smul.u32 2, %s24
          %p268 = scmp.lt.s32.totalorder %s23, 1
          %s269 = scalar_select %p268, %s23, 1
          %p270 = scmp.lt.s32.totalorder %s267, 3
          %s271 = scalar_select %p270, %s267, 3
          %s272 = smul.addr %s269, 4
          %s273 = sadd.s32 %s271, %s272
          %s274 = smul.addr %s273, 4
          %s275 = scalar_lea.vmem %s0, %s274
          %s276 = smul.u32 2, %s24
        $region36: #{attention_forward.1} parent=31 // pred_fallthru
          _
        // Predicated region
        $region37: #{attention_forward.1} parent=31 // pred_check
          %p277 = pneg %p85
        $region38: #{attention_forward.1} parent=31 // pred_check_branch
          %279 = sbr.rel (%p277) target = $region40
        $region39: #{attention_forward.1} parent=31 // pred_region
          %s280 = smul.u32 16, %s25
          %p281 = scmp.lt.s32.totalorder %s23, 1
          %s282 = scalar_select %p281, %s23, 1
          %p283 = scmp.lt.s32.totalorder %s280, 31
          %s284 = scalar_select %p283, %s280, 31
          %s285 = smul.addr %s282, 32
          %s286 = sadd.s32 %s284, %s285
          %s287 = smul.addr %s286, 4
          %s288 = scalar_lea.vmem %s1, %s287
          %s289 = smul.u32 16, %s25
        $region40: #{attention_forward.1} parent=31 // pred_fallthru
          _
        // Predicated region
        $region41: #{attention_forward.1} parent=31 // pred_check
          %p290 = pneg %p115
        $region42: #{attention_forward.1} parent=31 // pred_check_branch
          %292 = sbr.rel (%p290) target = $region44
        $region43: #{attention_forward.1} parent=31 // pred_region
          %s293 = sand.u32 %s105, 1
          %s294 = sand.u32 %s105, 1
          %s295 = smul.addr %s294, 16
          %s296 = scalar_lea.vmem [#allocation6], %s295
          %s297 = smul.u32 2, %s24
          %s298 = smul.addr %s297, 2
          %s299 = sadd.s32 %s25, %s298
          %s300 = smul.addr %s23, 8
          %s301 = sadd.s32 %s299, %s300
          %s302 = smul.addr %s301, 8
          %s303 = scalar_lea.vmem %s2, %s302
          // Predicated region
          $region45: #{attention_forward.1} parent=43 // pred_check
            _
          $region46: #{attention_forward.1} parent=43 // pred_check_branch
            %305 = sbr.rel (0) target = $region48
          $region47: #{attention_forward.1} parent=43 // pred_region
            // Predicated region
            $region49: #{attention_forward.1} parent=47 // pred_check
              _
            $region50: #{attention_forward.1} parent=47 // pred_check_branch
              %307 = sbr.rel (0) target = $region52
            $region51: #{attention_forward.1} parent=47 // pred_region
              // Predicated region
              $region64: #{attention_forward.1} parent=51 // pred_check
                _
              $region65: #{attention_forward.1} parent=51 // pred_check_branch
                %324 = sbr.rel (0) target = $region67
              $region66: #{attention_forward.1} parent=51 // pred_region
                loop: start=0, step=1, limit=1
                $region68: #{attention_forward.1} parent=66 // loop_pre_header
                  _
                $region69: #{attention_forward.1} parent=66 // loop_header
                  %s326 = sphi 0, %s330
                  %p327 = scmp.ge.s32.totalorder %s326, 1
                  %s331 = sphi %s303, %s303
                  %s332 = sphi %s296, %s296
                $region70: #{attention_forward.1} parent=66 // loop_header_branch
                  %329 = sbr.rel (%p327) target = $region74
                $region71: #{attention_forward.1} parent=66 // loop_body
                  %v333 = vld [vmem:[%s331] sm:$0xff]
                  %334 = vst [vmem:[%s332] sm:$0xff] %v333
                  %v335 = vld [vmem:[%s331 + $0x10] sm:$0xff]
                  %336 = vst [vmem:[%s332 + $0x8] sm:$0xff] %v335
                $region72: #{attention_forward.1} parent=66 // loop_footer
                  %s330 = sadd.s32 1, %s326
                $region73: #{attention_forward.1} parent=66 // loop_footer_branch
                  %325 = sbr.rel target = $region69
                $region74: #{attention_forward.1} parent=66 // loop_exit
                  _
              $region67: #{attention_forward.1} parent=51 // pred_fallthru
                _
              // Predicated region
              $region75: #{attention_forward.1} parent=51 // pred_check
                _
              $region76: #{attention_forward.1} parent=51 // pred_check_branch
                %338 = sbr.rel target = $region78
              $region77: #{attention_forward.1} parent=51 // pred_region
                _
              $region78: #{attention_forward.1} parent=51 // pred_fallthru
                _
            $region52: #{attention_forward.1} parent=47 // pred_fallthru
              _
            // Predicated region
            $region53: #{attention_forward.1} parent=47 // pred_check
              _
            $region54: #{attention_forward.1} parent=47 // pred_check_branch
              %309 = sbr.rel target = $region56
            $region55: #{attention_forward.1} parent=47 // pred_region
              loop: start=0, step=1, limit=1
              $region57: #{attention_forward.1} parent=55 // loop_pre_header
                _
              $region58: #{attention_forward.1} parent=55 // loop_header
                %s312 = sphi 0, %s316
                %p313 = scmp.ge.s32.totalorder %s312, 1
                %s317 = sphi %s303, %s303
                %s318 = sphi %s296, %s296
              $region59: #{attention_forward.1} parent=55 // loop_header_branch
                %315 = sbr.rel (%p313) target = $region63
              $region60: #{attention_forward.1} parent=55 // loop_body
                %v319 = vld [vmem:[%s317] sm:$0xff]
                %320 = vst [vmem:[%s318] sm:$0xff] %v319
                %v321 = vld [vmem:[%s317 + $0x10] sm:$0xff]
                %322 = vst [vmem:[%s318 + $0x8] sm:$0xff] %v321
              $region61: #{attention_forward.1} parent=55 // loop_footer
                %s316 = sadd.s32 1, %s312
              $region62: #{attention_forward.1} parent=55 // loop_footer_branch
                %311 = sbr.rel target = $region58
              $region63: #{attention_forward.1} parent=55 // loop_exit
                _
            $region56: #{attention_forward.1} parent=47 // pred_fallthru
              _
          $region48: #{attention_forward.1} parent=43 // pred_fallthru
            _
          %339 = vnop
        $region44: #{attention_forward.1} parent=31 // pred_fallthru
          _
      $region32: #{attention_forward.1} parent=5 // pred_fallthru
        _
      %p340 = scmp.le.s32.totalorder 1, %s16
      %p341 = scmp.lt.s32.totalorder %s16, 9
      %p342 = pnand %p340, %p341
      %p343 = pneg %p342
      // Predicated region
      $region79: #{attention_forward.1} parent=5 // pred_check
        _
      $region80: #{attention_forward.1} parent=5 // pred_check_branch
        %345 = sbr.rel (%p342) target = $region82
      $region81: #{attention_forward.1} parent=5 // pred_region
        %s346 = ssub.s32 %s16, 1
        %s347 = sand.u32 %s108, 1
        %s348 = sand.u32 %s108, 1
        %s349 = smul.addr %s348, 16
        %s350 = scalar_lea.vmem [#allocation6], %s349
        // Predicated region
        $region83: #{attention_forward.1} parent=81 // pred_check
          %p351 = pneg %p121
        $region84: #{attention_forward.1} parent=81 // pred_check_branch
          %353 = sbr.rel (%p351) target = $region86
        $region85: #{attention_forward.1} parent=81 // pred_region
          _
        $region86: #{attention_forward.1} parent=81 // pred_fallthru
          _
        %s354 = smul.u32 2, %s27
        %p355 = scmp.lt.s32.totalorder %s26, 1
        %s356 = scalar_select %p355, %s26, 1
        %p357 = scmp.lt.s32.totalorder %s354, 3
        %s358 = scalar_select %p357, %s354, 3
        %s359 = smul.addr %s356, 4
        %s360 = sadd.s32 %s358, %s359
        %s361 = smul.addr %s360, 4
        %s362 = scalar_lea.vmem %s0, %s361
        %p363 = pneg %p63
        %p364 = pneg %p60
        %s365 = smul.u32 16, %s28
        %p366 = scmp.lt.s32.totalorder %s26, 1
        %s367 = scalar_select %p366, %s26, 1
        %p368 = scmp.lt.s32.totalorder %s365, 31
        %s369 = scalar_select %p368, %s365, 31
        %s370 = smul.addr %s367, 32
        %s371 = sadd.s32 %s369, %s370
        %s372 = smul.addr %s371, 4
        %s373 = scalar_lea.vmem %s1, %s372
        %p374 = pneg %p91
        %p375 = pneg %p88
        %s376 = sand.u32 %s108, 1
        %s377 = sand.u32 %s108, 1
        %s378 = smul.addr %s377, 16
        %s379 = scalar_lea.vmem [#allocation6], %s378
        %p380 = pneg %p121
        %p381 = pneg %p118
        %p382 = pneg %p142
        %p383 = pneg %p139
        %p384 = pneg %p163
        %p385 = pneg %p160
        %p386 = pneg %p184
        %p387 = pneg %p181
        %p388 = pneg %p205
        %p389 = pneg %p202
        %p390 = pneg %p233
        %p391 = pneg %p230
        %s392 = sand.u32 %s220, 1
        %s393 = scalar_lea.sflag [#allocation8], %s392
        %s394 = sand.u32 %s220, 1
        %s395 = smul.addr %s394, 16
        %s396 = scalar_lea.vmem [#allocation7], %s395
        %s397 = smul.u32 2, %s27
        %p398 = scmp.lt.s32.totalorder %s26, 1
        %s399 = scalar_select %p398, %s26, 1
        %p400 = scmp.lt.s32.totalorder %s397, 3
        %s401 = scalar_select %p400, %s397, 3
        %s402 = smul.addr %s399, 4
        %s403 = sadd.s32 %s401, %s402
        %s404 = smul.addr %s403, 4
        %s405 = scalar_lea.vmem %s0, %s404
        %s406 = smul.u32 2, %s27
        %s407 = smul.u32 16, %s28
        %p408 = scmp.lt.s32.totalorder %s26, 1
        %s409 = scalar_select %p408, %s26, 1
        %p410 = scmp.lt.s32.totalorder %s407, 31
        %s411 = scalar_select %p410, %s407, 31
        %s412 = smul.addr %s409, 32
        %s413 = sadd.s32 %s411, %s412
        %s414 = smul.addr %s413, 4
        %s415 = scalar_lea.vmem %s1, %s414
        %s416 = smul.u32 16, %s28
        %s417 = smul.u32 2, %s27
        %s418 = smul.u32 2, %s27
        %p420 = scmp.eq.s32.totalorder %s28, 0
        // Predicated region
        $region87: #{attention_forward.1} parent=81 // pred_check
          %p421 = pneg %p420
        $region88: #{attention_forward.1} parent=81 // pred_check_branch
          %423 = sbr.rel (%p421) target = $region90
        $region89: #{attention_forward.1} parent=81 // pred_region
          %v424 = vld [vmem:[%s405] sm:$0xf]
          %v425 = vld [vmem:[%s405 + $0x4] sm:$0xf]
          %v426 = vld [vmem:[%s3] sm:$0xf]
          %v427 = vld [vmem:[%s3 + $0x4] sm:$0xf]
          %v428 = vld [vmem:[%s3 + $0x8] sm:$0xf]
          %v429 = vld [vmem:[%s3 + $0xc] sm:$0xf]
          %v430 = vld [vmem:[%s4] sm:$0x1]
          %v432 = vlaneseq
          %v433 = vshrl.u32 %v432, 7
          %v434 = vsub.s32 0, %v433
          %v435 = vrot.slane %v430, %v434
          %v439 = vunpack.c.l.b16 %v424
          %v440 = vunpack.c.l.b16 %v425
          %v441 = vpack.c.b16 %v440, %v439
          %v446 = vunpack.c.l.b16 %v426
          %v447 = vunpack.c.l.b16 %v427
          %v448 = vunpack.c.l.b16 %v428
          %v449 = vunpack.c.l.b16 %v429
          %v450 = vpack.c.b16 %v447, %v446
          %v451 = vpack.c.b16 %v449, %v448
          %vm454 = vcmask 261120
          %v456 = vsel %vm454, %v441, 0
          %458 = vmatprep.subr.bf16.mxu0 0
          %459 = vmatpush1.bf16.msra.mxu0 %v450
          %460 = vmatprep.subr.bf16.mxu0 0
          %461 = vmatpush1.bf16.msra.mxu0 %v451
          %462 = vmatprep.subr.bf16.mxu0 0
          %463 = vmatpush1.bf16.msra.mxu0 0
          %464 = vmatprep.subr.bf16.mxu0 0
          %465 = vmatpush1.bf16.msra.mxu0 0
          %466 = vmatprep.subr.bf16.mxu0 0
          %467 = vmatpush1.bf16.msra.mxu0 0
          %468 = vmatprep.subr.bf16.mxu0 0
          %469 = vmatpush1.bf16.msra.mxu0 0
          %470 = vmatprep.subr.bf16.mxu0 0
          %471 = vmatpush1.bf16.msra.mxu0 0
          %472 = vmatprep.subr.bf16.mxu0 0
          %473 = vmatpush1.bf16.msra.mxu0 0
          %474 = vmatprep.subr.bf16.mxu0 0
          %475 = vmatpush1.bf16.msra.mxu0 0
          %476 = vmatprep.subr.bf16.mxu0 0
          %477 = vmatpush1.bf16.msra.mxu0 0
          %478 = vmatprep.subr.bf16.mxu0 0
          %479 = vmatpush1.bf16.msra.mxu0 0
          %480 = vmatprep.subr.bf16.mxu0 0
          %481 = vmatpush1.bf16.msra.mxu0 0
          %482 = vmatprep.subr.bf16.mxu0 0
          %483 = vmatpush1.bf16.msra.mxu0 0
          %484 = vmatprep.subr.bf16.mxu0 0
          %485 = vmatpush1.bf16.msra.mxu0 0
          %486 = vmatprep.subr.bf16.mxu0 0
          %487 = vmatpush1.bf16.msra.mxu0 0
          %488 = vmatprep.subr.bf16.mxu0 0
          %489 = vmatpush1.bf16.msra.mxu0 0
          %490 = vmatprep.mubr.bf16.mxu0 0
          %491 = vmatmul.mubr.bf16.gmra.mrb[0].mxu0 %v456
          %v492 = vpop.f32.mrb[0].mxu0
          %v493 = vadd.f32 %v435, %v492
          %v494 = vpop.f32.mrb[0].mxu0
          %v495 = vpop.f32.mrb[0].mxu0
          %v496 = vadd.f32 %v435, %v495
          %v497 = vpop.f32.mrb[0].mxu0
          %498 = vdwg.mxu0
          %501 = vrot.lane.b32.xlu0 %v493, 120
          %v502 = vpop.permute.xlu0 %501
          %503 = vrot.lane.b32.xlu0 %v496, 120
          %v504 = vpop.permute.xlu0 %503
          %507 = vrot.lane.b32.xlu0 %v493, 112
          %v508 = vpop.permute.xlu0 %507
          %509 = vrot.lane.b32.xlu0 %v496, 112
          %v510 = vpop.permute.xlu0 %509
          %513 = vrot.lane.b32.xlu0 %v493, 104
          %v514 = vpop.permute.xlu0 %513
          %515 = vrot.lane.b32.xlu0 %v496, 104
          %v516 = vpop.permute.xlu0 %515
          %v519 = vcombine.low %v493, %v508
          %v520 = vcombine.high %v493, %v508
          %v522 = vunpack.c.l.s4 1983009808
          %v523 = vunpack.c.0.s8 %v522
          %v524 = vlaneseq
          %v525 = vshrl.u32 %v524, 7
          %v526 = vsub.s32 %v523, %v525
          %v527 = vrot.slane %v519, %v526
          %v529 = vunpack.c.l.s4 1983009808
          %v530 = vunpack.c.0.s8 %v529
          %v531 = vlaneseq
          %v532 = vshrl.u32 %v531, 7
          %v533 = vsub.s32 %v530, %v532
          %v534 = vrot.slane %v520, %v533
          %v535 = vcombine.low %v502, %v514
          %v536 = vcombine.high %v502, %v514
          %v538 = vunpack.c.l.s4 1983009808
          %v539 = vunpack.c.0.s8 %v538
          %v540 = vlaneseq
          %v541 = vshrl.u32 %v540, 7
          %v542 = vsub.s32 %v539, %v541
          %v543 = vrot.slane %v535, %v542
          %v545 = vunpack.c.l.s4 1983009808
          %v546 = vunpack.c.0.s8 %v545
          %v547 = vlaneseq
          %v548 = vshrl.u32 %v547, 7
          %v549 = vsub.s32 %v546, %v548
          %v550 = vrot.slane %v536, %v549
          %v551 = vcombine.low %v527, %v543
          %v552 = vcombine.high %v527, %v543
          %v554 = vunpack.c.l.s4 1934713408
          %v555 = vunpack.c.0.s8 %v554
          %v556 = vlaneseq
          %v557 = vshrl.u32 %v556, 7
          %v558 = vsub.s32 %v555, %v557
          %v559 = vrot.slane %v551, %v558
          %v561 = vunpack.c.l.s4 1934713408
          %v562 = vunpack.c.0.s8 %v561
          %v563 = vlaneseq
          %v564 = vshrl.u32 %v563, 7
          %v565 = vsub.s32 %v562, %v564
          %v566 = vrot.slane %v552, %v565
          %v567 = vcombine.low %v534, %v550
          %v568 = vcombine.high %v534, %v550
          %v570 = vunpack.c.l.s4 1934713408
          %v571 = vunpack.c.0.s8 %v570
          %v572 = vlaneseq
          %v573 = vshrl.u32 %v572, 7
          %v574 = vsub.s32 %v571, %v573
          %v575 = vrot.slane %v567, %v574
          %v577 = vunpack.c.l.s4 1934713408
          %v578 = vunpack.c.0.s8 %v577
          %v579 = vlaneseq
          %v580 = vshrl.u32 %v579, 7
          %v581 = vsub.s32 %v578, %v580
          %v582 = vrot.slane %v568, %v581
          %v583 = vcombine.high %v559, 0.0
          %v584 = vcombine.high %v566, 0.0
          %v585 = vcombine.high %v575, 0.0
          %v586 = vcombine.high %v582, 0.0
          %v587 = vcombine.low %v496, %v510
          %v588 = vcombine.high %v496, %v510
          %v590 = vunpack.c.l.s4 1983009808
          %v591 = vunpack.c.0.s8 %v590
          %v592 = vlaneseq
          %v593 = vshrl.u32 %v592, 7
          %v594 = vsub.s32 %v591, %v593
          %v595 = vrot.slane %v587, %v594
          %v597 = vunpack.c.l.s4 1983009808
          %v598 = vunpack.c.0.s8 %v597
          %v599 = vlaneseq
          %v600 = vshrl.u32 %v599, 7
          %v601 = vsub.s32 %v598, %v600
          %v602 = vrot.slane %v588, %v601
          %v603 = vcombine.low %v504, %v516
          %v604 = vcombine.high %v504, %v516
          %v606 = vunpack.c.l.s4 1983009808
          %v607 = vunpack.c.0.s8 %v606
          %v608 = vlaneseq
          %v609 = vshrl.u32 %v608, 7
          %v610 = vsub.s32 %v607, %v609
          %v611 = vrot.slane %v603, %v610
          %v613 = vunpack.c.l.s4 1983009808
          %v614 = vunpack.c.0.s8 %v613
          %v615 = vlaneseq
          %v616 = vshrl.u32 %v615, 7
          %v617 = vsub.s32 %v614, %v616
          %v618 = vrot.slane %v604, %v617
          %v619 = vcombine.low %v595, %v611
          %v620 = vcombine.high %v595, %v611
          %v622 = vunpack.c.l.s4 1934713408
          %v623 = vunpack.c.0.s8 %v622
          %v624 = vlaneseq
          %v625 = vshrl.u32 %v624, 7
          %v626 = vsub.s32 %v623, %v625
          %v627 = vrot.slane %v619, %v626
          %v629 = vunpack.c.l.s4 1934713408
          %v630 = vunpack.c.0.s8 %v629
          %v631 = vlaneseq
          %v632 = vshrl.u32 %v631, 7
          %v633 = vsub.s32 %v630, %v632
          %v634 = vrot.slane %v620, %v633
          %v635 = vcombine.low %v602, %v618
          %v636 = vcombine.high %v602, %v618
          %v638 = vunpack.c.l.s4 1934713408
          %v639 = vunpack.c.0.s8 %v638
          %v640 = vlaneseq
          %v641 = vshrl.u32 %v640, 7
          %v642 = vsub.s32 %v639, %v641
          %v643 = vrot.slane %v635, %v642
          %v645 = vunpack.c.l.s4 1934713408
          %v646 = vunpack.c.0.s8 %v645
          %v647 = vlaneseq
          %v648 = vshrl.u32 %v647, 7
          %v649 = vsub.s32 %v646, %v648
          %v650 = vrot.slane %v636, %v649
          %v651 = vcombine.high %v627, 0.0
          %v652 = vcombine.high %v634, 0.0
          %v653 = vcombine.high %v643, 0.0
          %v654 = vcombine.high %v650, 0.0
          %v655 = vcombine.low %v559, %v566
          %v657 = vunpack.c.l.s4 1983009808
          %v658 = vunpack.c.0.s8 %v657
          %v659 = vlaneseq
          %v660 = vshrl.u32 %v659, 7
          %v661 = vsub.s32 %v658, %v660
          %v662 = vrot.slane %v655, %v661
          %v663 = vcombine.low %v583, %v584
          %v665 = vunpack.c.l.s4 1983009808
          %v666 = vunpack.c.0.s8 %v665
          %v667 = vlaneseq
          %v668 = vshrl.u32 %v667, 7
          %v669 = vsub.s32 %v666, %v668
          %v670 = vrot.slane %v663, %v669
          %v671 = vcombine.low %v575, %v582
          %v673 = vunpack.c.l.s4 1983009808
          %v674 = vunpack.c.0.s8 %v673
          %v675 = vlaneseq
          %v676 = vshrl.u32 %v675, 7
          %v677 = vsub.s32 %v674, %v676
          %v678 = vrot.slane %v671, %v677
          %v679 = vcombine.low %v585, %v586
          %v681 = vunpack.c.l.s4 1983009808
          %v682 = vunpack.c.0.s8 %v681
          %v683 = vlaneseq
          %v684 = vshrl.u32 %v683, 7
          %v685 = vsub.s32 %v682, %v684
          %v686 = vrot.slane %v679, %v685
          %v687 = vcombine.low %v662, %v670
          %v688 = vcombine.high %v662, %v670
          %v690 = vunpack.c.l.s4 1934713408
          %v691 = vunpack.c.0.s8 %v690
          %v692 = vlaneseq
          %v693 = vshrl.u32 %v692, 7
          %v694 = vsub.s32 %v691, %v693
          %v695 = vrot.slane %v687, %v694
          %v697 = vunpack.c.l.s4 1934713408
          %v698 = vunpack.c.0.s8 %v697
          %v699 = vlaneseq
          %v700 = vshrl.u32 %v699, 7
          %v701 = vsub.s32 %v698, %v700
          %v702 = vrot.slane %v688, %v701
          %v703 = vcombine.low %v678, %v686
          %v704 = vcombine.high %v678, %v686
          %v706 = vunpack.c.l.s4 1934713408
          %v707 = vunpack.c.0.s8 %v706
          %v708 = vlaneseq
          %v709 = vshrl.u32 %v708, 7
          %v710 = vsub.s32 %v707, %v709
          %v711 = vrot.slane %v703, %v710
          %v713 = vunpack.c.l.s4 1934713408
          %v714 = vunpack.c.0.s8 %v713
          %v715 = vlaneseq
          %v716 = vshrl.u32 %v715, 7
          %v717 = vsub.s32 %v714, %v716
          %v718 = vrot.slane %v704, %v717
          %v719 = vcombine.low %v695, %v711
          %v720 = vcombine.high %v695, %v711
          %v721 = vcombine.low %v702, %v718
          %v722 = vcombine.high %v702, %v718
          %v723 = vcombine.low %v627, %v634
          %v725 = vunpack.c.l.s4 1983009808
          %v726 = vunpack.c.0.s8 %v725
          %v727 = vlaneseq
          %v728 = vshrl.u32 %v727, 7
          %v729 = vsub.s32 %v726, %v728
          %v730 = vrot.slane %v723, %v729
          %v731 = vcombine.low %v651, %v652
          %v733 = vunpack.c.l.s4 1983009808
          %v734 = vunpack.c.0.s8 %v733
          %v735 = vlaneseq
          %v736 = vshrl.u32 %v735, 7
          %v737 = vsub.s32 %v734, %v736
          %v738 = vrot.slane %v731, %v737
          %v739 = vcombine.low %v643, %v650
          %v741 = vunpack.c.l.s4 1983009808
          %v742 = vunpack.c.0.s8 %v741
          %v743 = vlaneseq
          %v744 = vshrl.u32 %v743, 7
          %v745 = vsub.s32 %v742, %v744
          %v746 = vrot.slane %v739, %v745
          %v747 = vcombine.low %v653, %v654
          %v749 = vunpack.c.l.s4 1983009808
          %v750 = vunpack.c.0.s8 %v749
          %v751 = vlaneseq
          %v752 = vshrl.u32 %v751, 7
          %v753 = vsub.s32 %v750, %v752
          %v754 = vrot.slane %v747, %v753
          %v755 = vcombine.low %v730, %v738
          %v756 = vcombine.high %v730, %v738
          %v758 = vunpack.c.l.s4 1934713408
          %v759 = vunpack.c.0.s8 %v758
          %v760 = vlaneseq
          %v761 = vshrl.u32 %v760, 7
          %v762 = vsub.s32 %v759, %v761
          %v763 = vrot.slane %v755, %v762
          %v765 = vunpack.c.l.s4 1934713408
          %v766 = vunpack.c.0.s8 %v765
          %v767 = vlaneseq
          %v768 = vshrl.u32 %v767, 7
          %v769 = vsub.s32 %v766, %v768
          %v770 = vrot.slane %v756, %v769
          %v771 = vcombine.low %v746, %v754
          %v772 = vcombine.high %v746, %v754
          %v774 = vunpack.c.l.s4 1934713408
          %v775 = vunpack.c.0.s8 %v774
          %v776 = vlaneseq
          %v777 = vshrl.u32 %v776, 7
          %v778 = vsub.s32 %v775, %v777
          %v779 = vrot.slane %v771, %v778
          %v781 = vunpack.c.l.s4 1934713408
          %v782 = vunpack.c.0.s8 %v781
          %v783 = vlaneseq
          %v784 = vshrl.u32 %v783, 7
          %v785 = vsub.s32 %v782, %v784
          %v786 = vrot.slane %v772, %v785
          %v787 = vcombine.low %v763, %v779
          %v788 = vcombine.high %v763, %v779
          %v789 = vcombine.low %v770, %v786
          %v790 = vcombine.high %v770, %v786
          %v791 = vpack.c.bf16 %v787, %v719
          %v792 = vpack.c.bf16 %v788, %v720
          %v793 = vpack.c.bf16 %v789, %v721
          %v794 = vpack.c.bf16 %v790, %v722
          %vm795 = vcmask 64512
          %796 = vst.msk [vmem:[#allocation2] sm:$0xff] %vm795, %v791
          %797 = vst.msk [vmem:[#allocation2 + $0x8] sm:$0xff] %vm795, %v792
          %798 = vst.msk [vmem:[#allocation2 + $0x10] sm:$0xff] %vm795, %v793
          %799 = vst.msk [vmem:[#allocation2 + $0x18] sm:$0xff] %vm795, %v794
          %vm800 = vcmask 7168
          %801 = vst.msk [vmem:[#allocation3] sm:$0xff] %vm800, -inf
          %802 = vst.msk [vmem:[#allocation3 + $0x8] sm:$0xff] %vm800, -inf
          %803 = vst.msk [vmem:[#allocation3 + $0x10] sm:$0xff] %vm800, -inf
          %804 = vst.msk [vmem:[#allocation3 + $0x18] sm:$0xff] %vm800, -inf
          %805 = vst.msk [vmem:[#allocation3 + $0x20] sm:$0xff] %vm800, -inf
          %806 = vst.msk [vmem:[#allocation3 + $0x28] sm:$0xff] %vm800, -inf
          %807 = vst.msk [vmem:[#allocation3 + $0x30] sm:$0xff] %vm800, -inf
          %808 = vst.msk [vmem:[#allocation3 + $0x38] sm:$0xff] %vm800, -inf
          %809 = vst.msk [vmem:[#allocation4] sm:$0xff] %vm800, 0.0
          %810 = vst.msk [vmem:[#allocation4 + $0x8] sm:$0xff] %vm800, 0.0
          %811 = vst.msk [vmem:[#allocation4 + $0x10] sm:$0xff] %vm800, 0.0
          %812 = vst.msk [vmem:[#allocation4 + $0x18] sm:$0xff] %vm800, 0.0
          %813 = vst.msk [vmem:[#allocation4 + $0x20] sm:$0xff] %vm800, 0.0
          %814 = vst.msk [vmem:[#allocation4 + $0x28] sm:$0xff] %vm800, 0.0
          %815 = vst.msk [vmem:[#allocation4 + $0x30] sm:$0xff] %vm800, 0.0
          %816 = vst.msk [vmem:[#allocation4 + $0x38] sm:$0xff] %vm800, 0.0
          %817 = vst.msk [vmem:[#allocation5] sm:$0xff] %vm795, 0.0
          %818 = vst.msk [vmem:[#allocation5 + $0x8] sm:$0xff] %vm795, 0.0
          %819 = vst.msk [vmem:[#allocation5 + $0x10] sm:$0xff] %vm795, 0.0
          %820 = vst.msk [vmem:[#allocation5 + $0x18] sm:$0xff] %vm795, 0.0
          %821 = vst.msk [vmem:[#allocation5 + $0x20] sm:$0xff] %vm795, 0.0
          %822 = vst.msk [vmem:[#allocation5 + $0x28] sm:$0xff] %vm795, 0.0
          %823 = vst.msk [vmem:[#allocation5 + $0x30] sm:$0xff] %vm795, 0.0
          %824 = vst.msk [vmem:[#allocation5 + $0x38] sm:$0xff] %vm795, 0.0
        $region90: #{attention_forward.1} parent=81 // pred_fallthru
          _
        %v825 = vld [vmem:[%s415] sm:$0xf]
        %v826 = vld [vmem:[%s415 + $0x4] sm:$0xf]
        %v827 = vld [vmem:[%s415 + $0x8] sm:$0xf]
        %v828 = vld [vmem:[%s415 + $0xc] sm:$0xf]
        %v829 = vld [vmem:[%s415 + $0x10] sm:$0xf]
        %v830 = vld [vmem:[%s415 + $0x14] sm:$0xf]
        %v831 = vld [vmem:[%s415 + $0x18] sm:$0xf]
        %v832 = vld [vmem:[%s415 + $0x1c] sm:$0xf]
        %v833 = vld [vmem:[%s415 + $0x20] sm:$0xf]
        %v834 = vld [vmem:[%s415 + $0x24] sm:$0xf]
        %v835 = vld [vmem:[%s415 + $0x28] sm:$0xf]
        %v836 = vld [vmem:[%s415 + $0x2c] sm:$0xf]
        %v837 = vld [vmem:[%s415 + $0x30] sm:$0xf]
        %v838 = vld [vmem:[%s415 + $0x34] sm:$0xf]
        %v839 = vld [vmem:[%s415 + $0x38] sm:$0xf]
        %v840 = vld [vmem:[%s415 + $0x3c] sm:$0xf]
        %v841 = vld [vmem:[%s5] sm:$0xf]
        %v842 = vld [vmem:[%s5 + $0x4] sm:$0xf]
        %v843 = vld [vmem:[%s5 + $0x8] sm:$0xf]
        %v844 = vld [vmem:[%s5 + $0xc] sm:$0xf]
        %v845 = vld [vmem:[%s6] sm:$0x1]
        %v847 = vlaneseq
        %v848 = vshrl.u32 %v847, 7
        %v849 = vsub.s32 0, %v848
        %v850 = vrot.slane %v845, %v849
        %v868 = vunpack.c.l.b16 %v825
        %v869 = vunpack.c.l.b16 %v826
        %v870 = vunpack.c.l.b16 %v827
        %v871 = vunpack.c.l.b16 %v828
        %v872 = vunpack.c.l.b16 %v829
        %v873 = vunpack.c.l.b16 %v830
        %v874 = vunpack.c.l.b16 %v831
        %v875 = vunpack.c.l.b16 %v832
        %v876 = vunpack.c.l.b16 %v833
        %v877 = vunpack.c.l.b16 %v834
        %v878 = vunpack.c.l.b16 %v835
        %v879 = vunpack.c.l.b16 %v836
        %v880 = vunpack.c.l.b16 %v837
        %v881 = vunpack.c.l.b16 %v838
        %v882 = vunpack.c.l.b16 %v839
        %v883 = vunpack.c.l.b16 %v840
        %v884 = vpack.c.b16 %v869, %v868
        %v885 = vpack.c.b16 %v871, %v870
        %v886 = vpack.c.b16 %v873, %v872
        %v887 = vpack.c.b16 %v875, %v874
        %v888 = vpack.c.b16 %v877, %v876
        %v889 = vpack.c.b16 %v879, %v878
        %v890 = vpack.c.b16 %v881, %v880
        %v891 = vpack.c.b16 %v883, %v882
        %v896 = vunpack.c.l.b16 %v841
        %v897 = vunpack.c.l.b16 %v842
        %v898 = vunpack.c.l.b16 %v843
        %v899 = vunpack.c.l.b16 %v844
        %v900 = vpack.c.b16 %v897, %v896
        %v901 = vpack.c.b16 %v899, %v898
        %vm904 = vcmask 261120
        %v906 = vsel %vm904, %v884, 0
        %v909 = vsel %vm904, %v885, 0
        %v912 = vsel %vm904, %v886, 0
        %v915 = vsel %vm904, %v887, 0
        %v918 = vsel %vm904, %v888, 0
        %v921 = vsel %vm904, %v889, 0
        %v924 = vsel %vm904, %v890, 0
        %v927 = vsel %vm904, %v891, 0
        %929 = vmatprep.subr.bf16.mxu0 0
        %930 = vmatpush1.bf16.msra.mxu0 %v900
        %931 = vmatprep.subr.bf16.mxu0 0
        %932 = vmatpush1.bf16.msra.mxu0 %v901
        %933 = vmatprep.subr.bf16.mxu0 0
        %934 = vmatpush1.bf16.msra.mxu0 0
        %935 = vmatprep.subr.bf16.mxu0 0
        %936 = vmatpush1.bf16.msra.mxu0 0
        %937 = vmatprep.subr.bf16.mxu0 0
        %938 = vmatpush1.bf16.msra.mxu0 0
        %939 = vmatprep.subr.bf16.mxu0 0
        %940 = vmatpush1.bf16.msra.mxu0 0
        %941 = vmatprep.subr.bf16.mxu0 0
        %942 = vmatpush1.bf16.msra.mxu0 0
        %943 = vmatprep.subr.bf16.mxu0 0
        %944 = vmatpush1.bf16.msra.mxu0 0
        %945 = vmatprep.subr.bf16.mxu0 0
        %946 = vmatpush1.bf16.msra.mxu0 0
        %947 = vmatprep.subr.bf16.mxu0 0
        %948 = vmatpush1.bf16.msra.mxu0 0
        %949 = vmatprep.subr.bf16.mxu0 0
        %950 = vmatpush1.bf16.msra.mxu0 0
        %951 = vmatprep.subr.bf16.mxu0 0
        %952 = vmatpush1.bf16.msra.mxu0 0
        %953 = vmatprep.subr.bf16.mxu0 0
        %954 = vmatpush1.bf16.msra.mxu0 0
        %955 = vmatprep.subr.bf16.mxu0 0
        %956 = vmatpush1.bf16.msra.mxu0 0
        %957 = vmatprep.subr.bf16.mxu0 0
        %958 = vmatpush1.bf16.msra.mxu0 0
        %959 = vmatprep.subr.bf16.mxu0 0
        %960 = vmatpush1.bf16.msra.mxu0 0
        %961 = vmatprep.mubr.bf16.mxu0 0
        %962 = vmatmul.mubr.bf16.gmra.mrb[0].mxu0 %v906
        %v963 = vpop.f32.mrb[0].mxu0
        %v964 = vadd.f32 %v850, %v963
        %v965 = vpop.f32.mrb[0].mxu0
        %v966 = vpop.f32.mrb[0].mxu0
        %v967 = vadd.f32 %v850, %v966
        %v968 = vpop.f32.mrb[0].mxu0
        %969 = vmatprep.mubr.bf16.mxu0 0
        %970 = vmatmul.mubr.bf16.gmra.mrb[0].mxu0 %v909
        %v971 = vpop.f32.mrb[0].mxu0
        %v972 = vadd.f32 %v850, %v971
        %v973 = vpop.f32.mrb[0].mxu0
        %v974 = vpop.f32.mrb[0].mxu0
        %v975 = vadd.f32 %v850, %v974
        %v976 = vpop.f32.mrb[0].mxu0
        %977 = vmatprep.mubr.bf16.mxu0 0
        %978 = vmatmul.mubr.bf16.gmra.mrb[0].mxu0 %v912
        %v979 = vpop.f32.mrb[0].mxu0
        %v980 = vadd.f32 %v850, %v979
        %v981 = vpop.f32.mrb[0].mxu0
        %v982 = vpop.f32.mrb[0].mxu0
        %v983 = vadd.f32 %v850, %v982
        %v984 = vpop.f32.mrb[0].mxu0
        %985 = vmatprep.mubr.bf16.mxu0 0
        %986 = vmatmul.mubr.bf16.gmra.mrb[0].mxu0 %v915
        %v987 = vpop.f32.mrb[0].mxu0
        %v988 = vadd.f32 %v850, %v987
        %v989 = vpop.f32.mrb[0].mxu0
        %v990 = vpop.f32.mrb[0].mxu0
        %v991 = vadd.f32 %v850, %v990
        %v992 = vpop.f32.mrb[0].mxu0
        %993 = vmatprep.mubr.bf16.mxu0 0
        %994 = vmatmul.mubr.bf16.gmra.mrb[0].mxu0 %v918
        %v995 = vpop.f32.mrb[0].mxu0
        %v996 = vadd.f32 %v850, %v995
        %v997 = vpop.f32.mrb[0].mxu0
        %v998 = vpop.f32.mrb[0].mxu0
        %v999 = vadd.f32 %v850, %v998
        %v1000 = vpop.f32.mrb[0].mxu0
        %1001 = vmatprep.mubr.bf16.mxu0 0
        %1002 = vmatmul.mubr.bf16.gmra.mrb[0].mxu0 %v921
        %v1003 = vpop.f32.mrb[0].mxu0
        %v1004 = vadd.f32 %v850, %v1003
        %v1005 = vpop.f32.mrb[0].mxu0
        %v1006 = vpop.f32.mrb[0].mxu0
        %v1007 = vadd.f32 %v850, %v1006
        %v1008 = vpop.f32.mrb[0].mxu0
        %1009 = vmatprep.mubr.bf16.mxu0 0
        %1010 = vmatmul.mubr.bf16.gmra.mrb[0].mxu0 %v924
        %v1011 = vpop.f32.mrb[0].mxu0
        %v1012 = vadd.f32 %v850, %v1011
        %v1013 = vpop.f32.mrb[0].mxu0
        %v1014 = vpop.f32.mrb[0].mxu0
        %v1015 = vadd.f32 %v850, %v1014
        %v1016 = vpop.f32.mrb[0].mxu0
        %1017 = vmatprep.mubr.bf16.mxu0 0
        %1018 = vmatmul.mubr.bf16.gmra.mrb[0].mxu0 %v927
        %v1019 = vpop.f32.mrb[0].mxu0
        %v1020 = vadd.f32 %v850, %v1019
        %v1021 = vpop.f32.mrb[0].mxu0
        %v1022 = vpop.f32.mrb[0].mxu0
        %v1023 = vadd.f32 %v850, %v1022
        %v1024 = vpop.f32.mrb[0].mxu0
        %1025 = vdwg.mxu0
        %1042 = vrot.lane.b32.xlu0 %v964, 120
        %v1043 = vpop.permute.xlu0 %1042
        %1044 = vrot.lane.b32.xlu0 %v967, 120
        %v1045 = vpop.permute.xlu0 %1044
        %1046 = vrot.lane.b32.xlu0 %v972, 120
        %v1047 = vpop.permute.xlu0 %1046
        %1048 = vrot.lane.b32.xlu0 %v975, 120
        %v1049 = vpop.permute.xlu0 %1048
        %1050 = vrot.lane.b32.xlu0 %v980, 120
        %v1051 = vpop.permute.xlu0 %1050
        %1052 = vrot.lane.b32.xlu0 %v983, 120
        %v1053 = vpop.permute.xlu0 %1052
        %1054 = vrot.lane.b32.xlu0 %v988, 120
        %v1055 = vpop.permute.xlu0 %1054
        %1056 = vrot.lane.b32.xlu0 %v991, 120
        %v1057 = vpop.permute.xlu0 %1056
        %1058 = vrot.lane.b32.xlu0 %v996, 120
        %v1059 = vpop.permute.xlu0 %1058
        %1060 = vrot.lane.b32.xlu0 %v999, 120
        %v1061 = vpop.permute.xlu0 %1060
        %1062 = vrot.lane.b32.xlu0 %v1004, 120
        %v1063 = vpop.permute.xlu0 %1062
        %1064 = vrot.lane.b32.xlu0 %v1007, 120
        %v1065 = vpop.permute.xlu0 %1064
        %1066 = vrot.lane.b32.xlu0 %v1012, 120
        %v1067 = vpop.permute.xlu0 %1066
        %1068 = vrot.lane.b32.xlu0 %v1015, 120
        %v1069 = vpop.permute.xlu0 %1068
        %1070 = vrot.lane.b32.xlu0 %v1020, 120
        %v1071 = vpop.permute.xlu0 %1070
        %1072 = vrot.lane.b32.xlu0 %v1023, 120
        %v1073 = vpop.permute.xlu0 %1072
        %1090 = vrot.lane.b32.xlu0 %v964, 112
        %v1091 = vpop.permute.xlu0 %1090
        %1092 = vrot.lane.b32.xlu0 %v967, 112
        %v1093 = vpop.permute.xlu0 %1092
        %1094 = vrot.lane.b32.xlu0 %v972, 112
        %v1095 = vpop.permute.xlu0 %1094
        %1096 = vrot.lane.b32.xlu0 %v975, 112
        %v1097 = vpop.permute.xlu0 %1096
        %1098 = vrot.lane.b32.xlu0 %v980, 112
        %v1099 = vpop.permute.xlu0 %1098
        %1100 = vrot.lane.b32.xlu0 %v983, 112
        %v1101 = vpop.permute.xlu0 %1100
        %1102 = vrot.lane.b32.xlu0 %v988, 112
        %v1103 = vpop.permute.xlu0 %1102
        %1104 = vrot.lane.b32.xlu0 %v991, 112
        %v1105 = vpop.permute.xlu0 %1104
        %1106 = vrot.lane.b32.xlu0 %v996, 112
        %v1107 = vpop.permute.xlu0 %1106
        %1108 = vrot.lane.b32.xlu0 %v999, 112
        %v1109 = vpop.permute.xlu0 %1108
        %1110 = vrot.lane.b32.xlu0 %v1004, 112
        %v1111 = vpop.permute.xlu0 %1110
        %1112 = vrot.lane.b32.xlu0 %v1007, 112
        %v1113 = vpop.permute.xlu0 %1112
        %1114 = vrot.lane.b32.xlu0 %v1012, 112
        %v1115 = vpop.permute.xlu0 %1114
        %1116 = vrot.lane.b32.xlu0 %v1015, 112
        %v1117 = vpop.permute.xlu0 %1116
        %1118 = vrot.lane.b32.xlu0 %v1020, 112
        %v1119 = vpop.permute.xlu0 %1118
        %1120 = vrot.lane.b32.xlu0 %v1023, 112
        %v1121 = vpop.permute.xlu0 %1120
        %1138 = vrot.lane.b32.xlu0 %v964, 104
        %v1139 = vpop.permute.xlu0 %1138
        %1140 = vrot.lane.b32.xlu0 %v967, 104
        %v1141 = vpop.permute.xlu0 %1140
        %1142 = vrot.lane.b32.xlu0 %v972, 104
        %v1143 = vpop.permute.xlu0 %1142
        %1144 = vrot.lane.b32.xlu0 %v975, 104
        %v1145 = vpop.permute.xlu0 %1144
        %1146 = vrot.lane.b32.xlu0 %v980, 104
        %v1147 = vpop.permute.xlu0 %1146
        %1148 = vrot.lane.b32.xlu0 %v983, 104
        %v1149 = vpop.permute.xlu0 %1148
        %1150 = vrot.lane.b32.xlu0 %v988, 104
        %v1151 = vpop.permute.xlu0 %1150
        %1152 = vrot.lane.b32.xlu0 %v991, 104
        %v1153 = vpop.permute.xlu0 %1152
        %1154 = vrot.lane.b32.xlu0 %v996, 104
        %v1155 = vpop.permute.xlu0 %1154
        %1156 = vrot.lane.b32.xlu0 %v999, 104
        %v1157 = vpop.permute.xlu0 %1156
        %1158 = vrot.lane.b32.xlu0 %v1004, 104
        %v1159 = vpop.permute.xlu0 %1158
        %1160 = vrot.lane.b32.xlu0 %v1007, 104
        %v1161 = vpop.permute.xlu0 %1160
        %1162 = vrot.lane.b32.xlu0 %v1012, 104
        %v1163 = vpop.permute.xlu0 %1162
        %1164 = vrot.lane.b32.xlu0 %v1015, 104
        %v1165 = vpop.permute.xlu0 %1164
        %1166 = vrot.lane.b32.xlu0 %v1020, 104
        %v1167 = vpop.permute.xlu0 %1166
        %1168 = vrot.lane.b32.xlu0 %v1023, 104
        %v1169 = vpop.permute.xlu0 %1168
        %v1186 = vcombine.low %v964, %v1091
        %v1187 = vcombine.high %v964, %v1091
        %v1189 = vunpack.c.l.s4 1983009808
        %v1190 = vunpack.c.0.s8 %v1189
        %v1191 = vlaneseq
        %v1192 = vshrl.u32 %v1191, 7
        %v1193 = vsub.s32 %v1190, %v1192
        %v1194 = vrot.slane %v1186, %v1193
        %v1196 = vunpack.c.l.s4 1983009808
        %v1197 = vunpack.c.0.s8 %v1196
        %v1198 = vlaneseq
        %v1199 = vshrl.u32 %v1198, 7
        %v1200 = vsub.s32 %v1197, %v1199
        %v1201 = vrot.slane %v1187, %v1200
        %v1202 = vcombine.low %v1043, %v1139
        %v1203 = vcombine.high %v1043, %v1139
        %v1205 = vunpack.c.l.s4 1983009808
        %v1206 = vunpack.c.0.s8 %v1205
        %v1207 = vlaneseq
        %v1208 = vshrl.u32 %v1207, 7
        %v1209 = vsub.s32 %v1206, %v1208
        %v1210 = vrot.slane %v1202, %v1209
        %v1212 = vunpack.c.l.s4 1983009808
        %v1213 = vunpack.c.0.s8 %v1212
        %v1214 = vlaneseq
        %v1215 = vshrl.u32 %v1214, 7
        %v1216 = vsub.s32 %v1213, %v1215
        %v1217 = vrot.slane %v1203, %v1216
        %v1218 = vcombine.low %v1194, %v1210
        %v1219 = vcombine.high %v1194, %v1210
        %v1221 = vunpack.c.l.s4 1934713408
        %v1222 = vunpack.c.0.s8 %v1221
        %v1223 = vlaneseq
        %v1224 = vshrl.u32 %v1223, 7
        %v1225 = vsub.s32 %v1222, %v1224
        %v1226 = vrot.slane %v1218, %v1225
        %v1228 = vunpack.c.l.s4 1934713408
        %v1229 = vunpack.c.0.s8 %v1228
        %v1230 = vlaneseq
        %v1231 = vshrl.u32 %v1230, 7
        %v1232 = vsub.s32 %v1229, %v1231
        %v1233 = vrot.slane %v1219, %v1232
        %v1234 = vcombine.low %v1201, %v1217
        %v1235 = vcombine.high %v1201, %v1217
        %v1237 = vunpack.c.l.s4 1934713408
        %v1238 = vunpack.c.0.s8 %v1237
        %v1239 = vlaneseq
        %v1240 = vshrl.u32 %v1239, 7
        %v1241 = vsub.s32 %v1238, %v1240
        %v1242 = vrot.slane %v1234, %v1241
        %v1244 = vunpack.c.l.s4 1934713408
        %v1245 = vunpack.c.0.s8 %v1244
        %v1246 = vlaneseq
        %v1247 = vshrl.u32 %v1246, 7
        %v1248 = vsub.s32 %v1245, %v1247
        %v1249 = vrot.slane %v1235, %v1248
        %v1250 = vcombine.high %v1226, 0.0
        %v1251 = vcombine.high %v1233, 0.0
        %v1252 = vcombine.high %v1242, 0.0
        %v1253 = vcombine.high %v1249, 0.0
        %v1254 = vcombine.low %v967, %v1093
        %v1255 = vcombine.high %v967, %v1093
        %v1257 = vunpack.c.l.s4 1983009808
        %v1258 = vunpack.c.0.s8 %v1257
        %v1259 = vlaneseq
        %v1260 = vshrl.u32 %v1259, 7
        %v1261 = vsub.s32 %v1258, %v1260
        %v1262 = vrot.slane %v1254, %v1261
        %v1264 = vunpack.c.l.s4 1983009808
        %v1265 = vunpack.c.0.s8 %v1264
        %v1266 = vlaneseq
        %v1267 = vshrl.u32 %v1266, 7
        %v1268 = vsub.s32 %v1265, %v1267
        %v1269 = vrot.slane %v1255, %v1268
        %v1270 = vcombine.low %v1045, %v1141
        %v1271 = vcombine.high %v1045, %v1141
        %v1273 = vunpack.c.l.s4 1983009808
        %v1274 = vunpack.c.0.s8 %v1273
        %v1275 = vlaneseq
        %v1276 = vshrl.u32 %v1275, 7
        %v1277 = vsub.s32 %v1274, %v1276
        %v1278 = vrot.slane %v1270, %v1277
        %v1280 = vunpack.c.l.s4 1983009808
        %v1281 = vunpack.c.0.s8 %v1280
        %v1282 = vlaneseq
        %v1283 = vshrl.u32 %v1282, 7
        %v1284 = vsub.s32 %v1281, %v1283
        %v1285 = vrot.slane %v1271, %v1284
        %v1286 = vcombine.low %v1262, %v1278
        %v1287 = vcombine.high %v1262, %v1278
        %v1289 = vunpack.c.l.s4 1934713408
        %v1290 = vunpack.c.0.s8 %v1289
        %v1291 = vlaneseq
        %v1292 = vshrl.u32 %v1291, 7
        %v1293 = vsub.s32 %v1290, %v1292
        %v1294 = vrot.slane %v1286, %v1293
        %v1296 = vunpack.c.l.s4 1934713408
        %v1297 = vunpack.c.0.s8 %v1296
        %v1298 = vlaneseq
        %v1299 = vshrl.u32 %v1298, 7
        %v1300 = vsub.s32 %v1297, %v1299
        %v1301 = vrot.slane %v1287, %v1300
        %v1302 = vcombine.low %v1269, %v1285
        %v1303 = vcombine.high %v1269, %v1285
        %v1305 = vunpack.c.l.s4 1934713408
        %v1306 = vunpack.c.0.s8 %v1305
        %v1307 = vlaneseq
        %v1308 = vshrl.u32 %v1307, 7
        %v1309 = vsub.s32 %v1306, %v1308
        %v1310 = vrot.slane %v1302, %v1309
        %v1312 = vunpack.c.l.s4 1934713408
        %v1313 = vunpack.c.0.s8 %v1312
        %v1314 = vlaneseq
        %v1315 = vshrl.u32 %v1314, 7
        %v1316 = vsub.s32 %v1313, %v1315
        %v1317 = vrot.slane %v1303, %v1316
        %v1318 = vcombine.high %v1294, 0.0
        %v1319 = vcombine.high %v1301, 0.0
        %v1320 = vcombine.high %v1310, 0.0
        %v1321 = vcombine.high %v1317, 0.0
        %v1322 = vcombine.low %v972, %v1095
        %v1323 = vcombine.high %v972, %v1095
        %v1325 = vunpack.c.l.s4 1983009808
        %v1326 = vunpack.c.0.s8 %v1325
        %v1327 = vlaneseq
        %v1328 = vshrl.u32 %v1327, 7
        %v1329 = vsub.s32 %v1326, %v1328
        %v1330 = vrot.slane %v1322, %v1329
        %v1332 = vunpack.c.l.s4 1983009808
        %v1333 = vunpack.c.0.s8 %v1332
        %v1334 = vlaneseq
        %v1335 = vshrl.u32 %v1334, 7
        %v1336 = vsub.s32 %v1333, %v1335
        %v1337 = vrot.slane %v1323, %v1336
        %v1338 = vcombine.low %v1047, %v1143
        %v1339 = vcombine.high %v1047, %v1143
        %v1341 = vunpack.c.l.s4 1983009808
        %v1342 = vunpack.c.0.s8 %v1341
        %v1343 = vlaneseq
        %v1344 = vshrl.u32 %v1343, 7
        %v1345 = vsub.s32 %v1342, %v1344
        %v1346 = vrot.slane %v1338, %v1345
        %v1348 = vunpack.c.l.s4 1983009808
        %v1349 = vunpack.c.0.s8 %v1348
        %v1350 = vlaneseq
        %v1351 = vshrl.u32 %v1350, 7
        %v1352 = vsub.s32 %v1349, %v1351
        %v1353 = vrot.slane %v1339, %v1352
        %v1354 = vcombine.low %v1330, %v1346
        %v1355 = vcombine.high %v1330, %v1346
        %v1357 = vunpack.c.l.s4 1934713408
        %v1358 = vunpack.c.0.s8 %v1357
        %v1359 = vlaneseq
        %v1360 = vshrl.u32 %v1359, 7
        %v1361 = vsub.s32 %v1358, %v1360
        %v1362 = vrot.slane %v1354, %v1361
        %v1364 = vunpack.c.l.s4 1934713408
        %v1365 = vunpack.c.0.s8 %v1364
        %v1366 = vlaneseq
        %v1367 = vshrl.u32 %v1366, 7
        %v1368 = vsub.s32 %v1365, %v1367
        %v1369 = vrot.slane %v1355, %v1368
        %v1370 = vcombine.low %v1337, %v1353
        %v1371 = vcombine.high %v1337, %v1353
        %v1373 = vunpack.c.l.s4 1934713408
        %v1374 = vunpack.c.0.s8 %v1373
        %v1375 = vlaneseq
        %v1376 = vshrl.u32 %v1375, 7
        %v1377 = vsub.s32 %v1374, %v1376
        %v1378 = vrot.slane %v1370, %v1377
        %v1380 = vunpack.c.l.s4 1934713408
        %v1381 = vunpack.c.0.s8 %v1380
        %v1382 = vlaneseq
        %v1383 = vshrl.u32 %v1382, 7
        %v1384 = vsub.s32 %v1381, %v1383
        %v1385 = vrot.slane %v1371, %v1384
        %v1386 = vcombine.high %v1362, 0.0
        %v1387 = vcombine.high %v1369, 0.0
        %v1388 = vcombine.high %v1378, 0.0
        %v1389 = vcombine.high %v1385, 0.0
        %v1390 = vcombine.low %v975, %v1097
        %v1391 = vcombine.high %v975, %v1097
        %v1393 = vunpack.c.l.s4 1983009808
        %v1394 = vunpack.c.0.s8 %v1393
        %v1395 = vlaneseq
        %v1396 = vshrl.u32 %v1395, 7
        %v1397 = vsub.s32 %v1394, %v1396
        %v1398 = vrot.slane %v1390, %v1397
        %v1400 = vunpack.c.l.s4 1983009808
        %v1401 = vunpack.c.0.s8 %v1400
        %v1402 = vlaneseq
        %v1403 = vshrl.u32 %v1402, 7
        %v1404 = vsub.s32 %v1401, %v1403
        %v1405 = vrot.slane %v1391, %v1404
        %v1406 = vcombine.low %v1049, %v1145
        %v1407 = vcombine.high %v1049, %v1145
        %v1409 = vunpack.c.l.s4 1983009808
        %v1410 = vunpack.c.0.s8 %v1409
        %v1411 = vlaneseq
        %v1412 = vshrl.u32 %v1411, 7
        %v1413 = vsub.s32 %v1410, %v1412
        %v1414 = vrot.slane %v1406, %v1413
        %v1416 = vunpack.c.l.s4 1983009808
        %v1417 = vunpack.c.0.s8 %v1416
        %v1418 = vlaneseq
        %v1419 = vshrl.u32 %v1418, 7
        %v1420 = vsub.s32 %v1417, %v1419
        %v1421 = vrot.slane %v1407, %v1420
        %v1422 = vcombine.low %v1398, %v1414
        %v1423 = vcombine.high %v1398, %v1414
        %v1425 = vunpack.c.l.s4 1934713408
        %v1426 = vunpack.c.0.s8 %v1425
        %v1427 = vlaneseq
        %v1428 = vshrl.u32 %v1427, 7
        %v1429 = vsub.s32 %v1426, %v1428
        %v1430 = vrot.slane %v1422, %v1429
        %v1432 = vunpack.c.l.s4 1934713408
        %v1433 = vunpack.c.0.s8 %v1432
        %v1434 = vlaneseq
        %v1435 = vshrl.u32 %v1434, 7
        %v1436 = vsub.s32 %v1433, %v1435
        %v1437 = vrot.slane %v1423, %v1436
        %v1438 = vcombine.low %v1405, %v1421
        %v1439 = vcombine.high %v1405, %v1421
        %v1441 = vunpack.c.l.s4 1934713408
        %v1442 = vunpack.c.0.s8 %v1441
        %v1443 = vlaneseq
        %v1444 = vshrl.u32 %v1443, 7
        %v1445 = vsub.s32 %v1442, %v1444
        %v1446 = vrot.slane %v1438, %v1445
        %v1448 = vunpack.c.l.s4 1934713408
        %v1449 = vunpack.c.0.s8 %v1448
        %v1450 = vlaneseq
        %v1451 = vshrl.u32 %v1450, 7
        %v1452 = vsub.s32 %v1449, %v1451
        %v1453 = vrot.slane %v1439, %v1452
        %v1454 = vcombine.high %v1430, 0.0
        %v1455 = vcombine.high %v1437, 0.0
        %v1456 = vcombine.high %v1446, 0.0
        %v1457 = vcombine.high %v1453, 0.0
        %v1458 = vcombine.low %v980, %v1099
        %v1459 = vcombine.high %v980, %v1099
        %v1461 = vunpack.c.l.s4 1983009808
        %v1462 = vunpack.c.0.s8 %v1461
        %v1463 = vlaneseq
        %v1464 = vshrl.u32 %v1463, 7
        %v1465 = vsub.s32 %v1462, %v1464
        %v1466 = vrot.slane %v1458, %v1465
        %v1468 = vunpack.c.l.s4 1983009808
        %v1469 = vunpack.c.0.s8 %v1468
        %v1470 = vlaneseq
        %v1471 = vshrl.u32 %v1470, 7
        %v1472 = vsub.s32 %v1469, %v1471
        %v1473 = vrot.slane %v1459, %v1472
        %v1474 = vcombine.low %v1051, %v1147
        %v1475 = vcombine.high %v1051, %v1147
        %v1477 = vunpack.c.l.s4 1983009808
        %v1478 = vunpack.c.0.s8 %v1477
        %v1479 = vlaneseq
        %v1480 = vshrl.u32 %v1479, 7
        %v1481 = vsub.s32 %v1478, %v1480
        %v1482 = vrot.slane %v1474, %v1481
        %v1484 = vunpack.c.l.s4 1983009808
        %v1485 = vunpack.c.0.s8 %v1484
        %v1486 = vlaneseq
        %v1487 = vshrl.u32 %v1486, 7
        %v1488 = vsub.s32 %v1485, %v1487
        %v1489 = vrot.slane %v1475, %v1488
        %v1490 = vcombine.low %v1466, %v1482
        %v1491 = vcombine.high %v1466, %v1482
        %v1493 = vunpack.c.l.s4 1934713408
        %v1494 = vunpack.c.0.s8 %v1493
        %v1495 = vlaneseq
        %v1496 = vshrl.u32 %v1495, 7
        %v1497 = vsub.s32 %v1494, %v1496
        %v1498 = vrot.slane %v1490, %v1497
        %v1500 = vunpack.c.l.s4 1934713408
        %v1501 = vunpack.c.0.s8 %v1500
        %v1502 = vlaneseq
        %v1503 = vshrl.u32 %v1502, 7
        %v1504 = vsub.s32 %v1501, %v1503
        %v1505 = vrot.slane %v1491, %v1504
        %v1506 = vcombine.low %v1473, %v1489
        %v1507 = vcombine.high %v1473, %v1489
        %v1509 = vunpack.c.l.s4 1934713408
        %v1510 = vunpack.c.0.s8 %v1509
        %v1511 = vlaneseq
        %v1512 = vshrl.u32 %v1511, 7
        %v1513 = vsub.s32 %v1510, %v1512
        %v1514 = vrot.slane %v1506, %v1513
        %v1516 = vunpack.c.l.s4 1934713408
        %v1517 = vunpack.c.0.s8 %v1516
        %v1518 = vlaneseq
        %v1519 = vshrl.u32 %v1518, 7
        %v1520 = vsub.s32 %v1517, %v1519
        %v1521 = vrot.slane %v1507, %v1520
        %v1522 = vcombine.high %v1498, 0.0
        %v1523 = vcombine.high %v1505, 0.0
        %v1524 = vcombine.high %v1514, 0.0
        %v1525 = vcombine.high %v1521, 0.0
        %v1526 = vcombine.low %v983, %v1101
        %v1527 = vcombine.high %v983, %v1101
        %v1529 = vunpack.c.l.s4 1983009808
        %v1530 = vunpack.c.0.s8 %v1529
        %v1531 = vlaneseq
        %v1532 = vshrl.u32 %v1531, 7
        %v1533 = vsub.s32 %v1530, %v1532
        %v1534 = vrot.slane %v1526, %v1533
        %v1536 = vunpack.c.l.s4 1983009808
        %v1537 = vunpack.c.0.s8 %v1536
        %v1538 = vlaneseq
        %v1539 = vshrl.u32 %v1538, 7
        %v1540 = vsub.s32 %v1537, %v1539
        %v1541 = vrot.slane %v1527, %v1540
        %v1542 = vcombine.low %v1053, %v1149
        %v1543 = vcombine.high %v1053, %v1149
        %v1545 = vunpack.c.l.s4 1983009808
        %v1546 = vunpack.c.0.s8 %v1545
        %v1547 = vlaneseq
        %v1548 = vshrl.u32 %v1547, 7
        %v1549 = vsub.s32 %v1546, %v1548
        %v1550 = vrot.slane %v1542, %v1549
        %v1552 = vunpack.c.l.s4 1983009808
        %v1553 = vunpack.c.0.s8 %v1552
        %v1554 = vlaneseq
        %v1555 = vshrl.u32 %v1554, 7
        %v1556 = vsub.s32 %v1553, %v1555
        %v1557 = vrot.slane %v1543, %v1556
        %v1558 = vcombine.low %v1534, %v1550
        %v1559 = vcombine.high %v1534, %v1550
        %v1561 = vunpack.c.l.s4 1934713408
        %v1562 = vunpack.c.0.s8 %v1561
        %v1563 = vlaneseq
        %v1564 = vshrl.u32 %v1563, 7
        %v1565 = vsub.s32 %v1562, %v1564
        %v1566 = vrot.slane %v1558, %v1565
        %v1568 = vunpack.c.l.s4 1934713408
        %v1569 = vunpack.c.0.s8 %v1568
        %v1570 = vlaneseq
        %v1571 = vshrl.u32 %v1570, 7
        %v1572 = vsub.s32 %v1569, %v1571
        %v1573 = vrot.slane %v1559, %v1572
        %v1574 = vcombine.low %v1541, %v1557
        %v1575 = vcombine.high %v1541, %v1557
        %v1577 = vunpack.c.l.s4 1934713408
        %v1578 = vunpack.c.0.s8 %v1577
        %v1579 = vlaneseq
        %v1580 = vshrl.u32 %v1579, 7
        %v1581 = vsub.s32 %v1578, %v1580
        %v1582 = vrot.slane %v1574, %v1581
        %v1584 = vunpack.c.l.s4 1934713408
        %v1585 = vunpack.c.0.s8 %v1584
        %v1586 = vlaneseq
        %v1587 = vshrl.u32 %v1586, 7
        %v1588 = vsub.s32 %v1585, %v1587
        %v1589 = vrot.slane %v1575, %v1588
        %v1590 = vcombine.high %v1566, 0.0
        %v1591 = vcombine.high %v1573, 0.0
        %v1592 = vcombine.high %v1582, 0.0
        %v1593 = vcombine.high %v1589, 0.0
        %v1594 = vcombine.low %v988, %v1103
        %v1595 = vcombine.high %v988, %v1103
        %v1597 = vunpack.c.l.s4 1983009808
        %v1598 = vunpack.c.0.s8 %v1597
        %v1599 = vlaneseq
        %v1600 = vshrl.u32 %v1599, 7
        %v1601 = vsub.s32 %v1598, %v1600
        %v1602 = vrot.slane %v1594, %v1601
        %v1604 = vunpack.c.l.s4 1983009808
        %v1605 = vunpack.c.0.s8 %v1604
        %v1606 = vlaneseq
        %v1607 = vshrl.u32 %v1606, 7
        %v1608 = vsub.s32 %v1605, %v1607
        %v1609 = vrot.slane %v1595, %v1608
        %v1610 = vcombine.low %v1055, %v1151
        %v1611 = vcombine.high %v1055, %v1151
        %v1613 = vunpack.c.l.s4 1983009808
        %v1614 = vunpack.c.0.s8 %v1613
        %v1615 = vlaneseq
        %v1616 = vshrl.u32 %v1615, 7
        %v1617 = vsub.s32 %v1614, %v1616
        %v1618 = vrot.slane %v1610, %v1617
        %v1620 = vunpack.c.l.s4 1983009808
        %v1621 = vunpack.c.0.s8 %v1620
        %v1622 = vlaneseq
        %v1623 = vshrl.u32 %v1622, 7
        %v1624 = vsub.s32 %v1621, %v1623
        %v1625 = vrot.slane %v1611, %v1624
        %v1626 = vcombine.low %v1602, %v1618
        %v1627 = vcombine.high %v1602, %v1618
        %v1629 = vunpack.c.l.s4 1934713408
        %v1630 = vunpack.c.0.s8 %v1629
        %v1631 = vlaneseq
        %v1632 = vshrl.u32 %v1631, 7
        %v1633 = vsub.s32 %v1630, %v1632
        %v1634 = vrot.slane %v1626, %v1633
        %v1636 = vunpack.c.l.s4 1934713408
        %v1637 = vunpack.c.0.s8 %v1636
        %v1638 = vlaneseq
        %v1639 = vshrl.u32 %v1638, 7
        %v1640 = vsub.s32 %v1637, %v1639
        %v1641 = vrot.slane %v1627, %v1640
        %v1642 = vcombine.low %v1609, %v1625
        %v1643 = vcombine.high %v1609, %v1625
        %v1645 = vunpack.c.l.s4 1934713408
        %v1646 = vunpack.c.0.s8 %v1645
        %v1647 = vlaneseq
        %v1648 = vshrl.u32 %v1647, 7
        %v1649 = vsub.s32 %v1646, %v1648
        %v1650 = vrot.slane %v1642, %v1649
        %v1652 = vunpack.c.l.s4 1934713408
        %v1653 = vunpack.c.0.s8 %v1652
        %v1654 = vlaneseq
        %v1655 = vshrl.u32 %v1654, 7
        %v1656 = vsub.s32 %v1653, %v1655
        %v1657 = vrot.slane %v1643, %v1656
        %v1658 = vcombine.high %v1634, 0.0
        %v1659 = vcombine.high %v1641, 0.0
        %v1660 = vcombine.high %v1650, 0.0
        %v1661 = vcombine.high %v1657, 0.0
        %v1662 = vcombine.low %v991, %v1105
        %v1663 = vcombine.high %v991, %v1105
        %v1665 = vunpack.c.l.s4 1983009808
        %v1666 = vunpack.c.0.s8 %v1665
        %v1667 = vlaneseq
        %v1668 = vshrl.u32 %v1667, 7
        %v1669 = vsub.s32 %v1666, %v1668
        %v1670 = vrot.slane %v1662, %v1669
        %v1672 = vunpack.c.l.s4 1983009808
        %v1673 = vunpack.c.0.s8 %v1672
        %v1674 = vlaneseq
        %v1675 = vshrl.u32 %v1674, 7
        %v1676 = vsub.s32 %v1673, %v1675
        %v1677 = vrot.slane %v1663, %v1676
        %v1678 = vcombine.low %v1057, %v1153
        %v1679 = vcombine.high %v1057, %v1153
        %v1681 = vunpack.c.l.s4 1983009808
        %v1682 = vunpack.c.0.s8 %v1681
        %v1683 = vlaneseq
        %v1684 = vshrl.u32 %v1683, 7
        %v1685 = vsub.s32 %v1682, %v1684
        %v1686 = vrot.slane %v1678, %v1685
        %v1688 = vunpack.c.l.s4 1983009808
        %v1689 = vunpack.c.0.s8 %v1688
        %v1690 = vlaneseq
        %v1691 = vshrl.u32 %v1690, 7
        %v1692 = vsub.s32 %v1689, %v1691
        %v1693 = vrot.slane %v1679, %v1692
        %v1694 = vcombine.low %v1670, %v1686
        %v1695 = vcombine.high %v1670, %v1686
        %v1697 = vunpack.c.l.s4 1934713408
        %v1698 = vunpack.c.0.s8 %v1697
        %v1699 = vlaneseq
        %v1700 = vshrl.u32 %v1699, 7
        %v1701 = vsub.s32 %v1698, %v1700
        %v1702 = vrot.slane %v1694, %v1701
        %v1704 = vunpack.c.l.s4 1934713408
        %v1705 = vunpack.c.0.s8 %v1704
        %v1706 = vlaneseq
        %v1707 = vshrl.u32 %v1706, 7
        %v1708 = vsub.s32 %v1705, %v1707
        %v1709 = vrot.slane %v1695, %v1708
        %v1710 = vcombine.low %v1677, %v1693
        %v1711 = vcombine.high %v1677, %v1693
        %v1713 = vunpack.c.l.s4 1934713408
        %v1714 = vunpack.c.0.s8 %v1713
        %v1715 = vlaneseq
        %v1716 = vshrl.u32 %v1715, 7
        %v1717 = vsub.s32 %v1714, %v1716
        %v1718 = vrot.slane %v1710, %v1717
        %v1720 = vunpack.c.l.s4 1934713408
        %v1721 = vunpack.c.0.s8 %v1720
        %v1722 = vlaneseq
        %v1723 = vshrl.u32 %v1722, 7
        %v1724 = vsub.s32 %v1721, %v1723
        %v1725 = vrot.slane %v1711, %v1724
        %v1726 = vcombine.high %v1702, 0.0
        %v1727 = vcombine.high %v1709, 0.0
        %v1728 = vcombine.high %v1718, 0.0
        %v1729 = vcombine.high %v1725, 0.0
        %v1730 = vcombine.low %v996, %v1107
        %v1731 = vcombine.high %v996, %v1107
        %v1733 = vunpack.c.l.s4 1983009808
        %v1734 = vunpack.c.0.s8 %v1733
        %v1735 = vlaneseq
        %v1736 = vshrl.u32 %v1735, 7
        %v1737 = vsub.s32 %v1734, %v1736
        %v1738 = vrot.slane %v1730, %v1737
        %v1740 = vunpack.c.l.s4 1983009808
        %v1741 = vunpack.c.0.s8 %v1740
        %v1742 = vlaneseq
        %v1743 = vshrl.u32 %v1742, 7
        %v1744 = vsub.s32 %v1741, %v1743
        %v1745 = vrot.slane %v1731, %v1744
        %v1746 = vcombine.low %v1059, %v1155
        %v1747 = vcombine.high %v1059, %v1155
        %v1749 = vunpack.c.l.s4 1983009808
        %v1750 = vunpack.c.0.s8 %v1749
        %v1751 = vlaneseq
        %v1752 = vshrl.u32 %v1751, 7
        %v1753 = vsub.s32 %v1750, %v1752
        %v1754 = vrot.slane %v1746, %v1753
        %v1756 = vunpack.c.l.s4 1983009808
        %v1757 = vunpack.c.0.s8 %v1756
        %v1758 = vlaneseq
        %v1759 = vshrl.u32 %v1758, 7
        %v1760 = vsub.s32 %v1757, %v1759
        %v1761 = vrot.slane %v1747, %v1760
        %v1762 = vcombine.low %v1738, %v1754
        %v1763 = vcombine.high %v1738, %v1754
        %v1765 = vunpack.c.l.s4 1934713408
        %v1766 = vunpack.c.0.s8 %v1765
        %v1767 = vlaneseq
        %v1768 = vshrl.u32 %v1767, 7
        %v1769 = vsub.s32 %v1766, %v1768
        %v1770 = vrot.slane %v1762, %v1769
        %v1772 = vunpack.c.l.s4 1934713408
        %v1773 = vunpack.c.0.s8 %v1772
        %v1774 = vlaneseq
        %v1775 = vshrl.u32 %v1774, 7
        %v1776 = vsub.s32 %v1773, %v1775
        %v1777 = vrot.slane %v1763, %v1776
        %v1778 = vcombine.low %v1745, %v1761
        %v1779 = vcombine.high %v1745, %v1761
        %v1781 = vunpack.c.l.s4 1934713408
        %v1782 = vunpack.c.0.s8 %v1781
        %v1783 = vlaneseq
        %v1784 = vshrl.u32 %v1783, 7
        %v1785 = vsub.s32 %v1782, %v1784
        %v1786 = vrot.slane %v1778, %v1785
        %v1788 = vunpack.c.l.s4 1934713408
        %v1789 = vunpack.c.0.s8 %v1788
        %v1790 = vlaneseq
        %v1791 = vshrl.u32 %v1790, 7
        %v1792 = vsub.s32 %v1789, %v1791
        %v1793 = vrot.slane %v1779, %v1792
        %v1794 = vcombine.high %v1770, 0.0
        %v1795 = vcombine.high %v1777, 0.0
        %v1796 = vcombine.high %v1786, 0.0
        %v1797 = vcombine.high %v1793, 0.0
        %v1798 = vcombine.low %v999, %v1109
        %v1799 = vcombine.high %v999, %v1109
        %v1801 = vunpack.c.l.s4 1983009808
        %v1802 = vunpack.c.0.s8 %v1801
        %v1803 = vlaneseq
        %v1804 = vshrl.u32 %v1803, 7
        %v1805 = vsub.s32 %v1802, %v1804
        %v1806 = vrot.slane %v1798, %v1805
        %v1808 = vunpack.c.l.s4 1983009808
        %v1809 = vunpack.c.0.s8 %v1808
        %v1810 = vlaneseq
        %v1811 = vshrl.u32 %v1810, 7
        %v1812 = vsub.s32 %v1809, %v1811
        %v1813 = vrot.slane %v1799, %v1812
        %v1814 = vcombine.low %v1061, %v1157
        %v1815 = vcombine.high %v1061, %v1157
        %v1817 = vunpack.c.l.s4 1983009808
        %v1818 = vunpack.c.0.s8 %v1817
        %v1819 = vlaneseq
        %v1820 = vshrl.u32 %v1819, 7
        %v1821 = vsub.s32 %v1818, %v1820
        %v1822 = vrot.slane %v1814, %v1821
        %v1824 = vunpack.c.l.s4 1983009808
        %v1825 = vunpack.c.0.s8 %v1824
        %v1826 = vlaneseq
        %v1827 = vshrl.u32 %v1826, 7
        %v1828 = vsub.s32 %v1825, %v1827
        %v1829 = vrot.slane %v1815, %v1828
        %v1830 = vcombine.low %v1806, %v1822
        %v1831 = vcombine.high %v1806, %v1822
        %v1833 = vunpack.c.l.s4 1934713408
        %v1834 = vunpack.c.0.s8 %v1833
        %v1835 = vlaneseq
        %v1836 = vshrl.u32 %v1835, 7
        %v1837 = vsub.s32 %v1834, %v1836
        %v1838 = vrot.slane %v1830, %v1837
        %v1840 = vunpack.c.l.s4 1934713408
        %v1841 = vunpack.c.0.s8 %v1840
        %v1842 = vlaneseq
        %v1843 = vshrl.u32 %v1842, 7
        %v1844 = vsub.s32 %v1841, %v1843
        %v1845 = vrot.slane %v1831, %v1844
        %v1846 = vcombine.low %v1813, %v1829
        %v1847 = vcombine.high %v1813, %v1829
        %v1849 = vunpack.c.l.s4 1934713408
        %v1850 = vunpack.c.0.s8 %v1849
        %v1851 = vlaneseq
        %v1852 = vshrl.u32 %v1851, 7
        %v1853 = vsub.s32 %v1850, %v1852
        %v1854 = vrot.slane %v1846, %v1853
        %v1856 = vunpack.c.l.s4 1934713408
        %v1857 = vunpack.c.0.s8 %v1856
        %v1858 = vlaneseq
        %v1859 = vshrl.u32 %v1858, 7
        %v1860 = vsub.s32 %v1857, %v1859
        %v1861 = vrot.slane %v1847, %v1860
        %v1862 = vcombine.high %v1838, 0.0
        %v1863 = vcombine.high %v1845, 0.0
        %v1864 = vcombine.high %v1854, 0.0
        %v1865 = vcombine.high %v1861, 0.0
        %v1866 = vcombine.low %v1004, %v1111
        %v1867 = vcombine.high %v1004, %v1111
        %v1869 = vunpack.c.l.s4 1983009808
        %v1870 = vunpack.c.0.s8 %v1869
        %v1871 = vlaneseq
        %v1872 = vshrl.u32 %v1871, 7
        %v1873 = vsub.s32 %v1870, %v1872
        %v1874 = vrot.slane %v1866, %v1873
        %v1876 = vunpack.c.l.s4 1983009808
        %v1877 = vunpack.c.0.s8 %v1876
        %v1878 = vlaneseq
        %v1879 = vshrl.u32 %v1878, 7
        %v1880 = vsub.s32 %v1877, %v1879
        %v1881 = vrot.slane %v1867, %v1880
        %v1882 = vcombine.low %v1063, %v1159
        %v1883 = vcombine.high %v1063, %v1159
        %v1885 = vunpack.c.l.s4 1983009808
        %v1886 = vunpack.c.0.s8 %v1885
        %v1887 = vlaneseq
        %v1888 = vshrl.u32 %v1887, 7
        %v1889 = vsub.s32 %v1886, %v1888
        %v1890 = vrot.slane %v1882, %v1889
        %v1892 = vunpack.c.l.s4 1983009808
        %v1893 = vunpack.c.0.s8 %v1892
        %v1894 = vlaneseq
        %v1895 = vshrl.u32 %v1894, 7
        %v1896 = vsub.s32 %v1893, %v1895
        %v1897 = vrot.slane %v1883, %v1896
        %v1898 = vcombine.low %v1874, %v1890
        %v1899 = vcombine.high %v1874, %v1890
        %v1901 = vunpack.c.l.s4 1934713408
        %v1902 = vunpack.c.0.s8 %v1901
        %v1903 = vlaneseq
        %v1904 = vshrl.u32 %v1903, 7
        %v1905 = vsub.s32 %v1902, %v1904
        %v1906 = vrot.slane %v1898, %v1905
        %v1908 = vunpack.c.l.s4 1934713408
        %v1909 = vunpack.c.0.s8 %v1908
        %v1910 = vlaneseq
        %v1911 = vshrl.u32 %v1910, 7
        %v1912 = vsub.s32 %v1909, %v1911
        %v1913 = vrot.slane %v1899, %v1912
        %v1914 = vcombine.low %v1881, %v1897
        %v1915 = vcombine.high %v1881, %v1897
        %v1917 = vunpack.c.l.s4 1934713408
        %v1918 = vunpack.c.0.s8 %v1917
        %v1919 = vlaneseq
        %v1920 = vshrl.u32 %v1919, 7
        %v1921 = vsub.s32 %v1918, %v1920
        %v1922 = vrot.slane %v1914, %v1921
        %v1924 = vunpack.c.l.s4 1934713408
        %v1925 = vunpack.c.0.s8 %v1924
        %v1926 = vlaneseq
        %v1927 = vshrl.u32 %v1926, 7
        %v1928 = vsub.s32 %v1925, %v1927
        %v1929 = vrot.slane %v1915, %v1928
        %v1930 = vcombine.high %v1906, 0.0
        %v1931 = vcombine.high %v1913, 0.0
        %v1932 = vcombine.high %v1922, 0.0
        %v1933 = vcombine.high %v1929, 0.0
        %v1934 = vcombine.low %v1007, %v1113
        %v1935 = vcombine.high %v1007, %v1113
        %v1937 = vunpack.c.l.s4 1983009808
        %v1938 = vunpack.c.0.s8 %v1937
        %v1939 = vlaneseq
        %v1940 = vshrl.u32 %v1939, 7
        %v1941 = vsub.s32 %v1938, %v1940
        %v1942 = vrot.slane %v1934, %v1941
        %v1944 = vunpack.c.l.s4 1983009808
        %v1945 = vunpack.c.0.s8 %v1944
        %v1946 = vlaneseq
        %v1947 = vshrl.u32 %v1946, 7
        %v1948 = vsub.s32 %v1945, %v1947
        %v1949 = vrot.slane %v1935, %v1948
        %v1950 = vcombine.low %v1065, %v1161
        %v1951 = vcombine.high %v1065, %v1161
        %v1953 = vunpack.c.l.s4 1983009808
        %v1954 = vunpack.c.0.s8 %v1953
        %v1955 = vlaneseq
        %v1956 = vshrl.u32 %v1955, 7
        %v1957 = vsub.s32 %v1954, %v1956
        %v1958 = vrot.slane %v1950, %v1957
        %v1960 = vunpack.c.l.s4 1983009808
        %v1961 = vunpack.c.0.s8 %v1960
        %v1962 = vlaneseq
        %v1963 = vshrl.u32 %v1962, 7
        %v1964 = vsub.s32 %v1961, %v1963
        %v1965 = vrot.slane %v1951, %v1964
        %v1966 = vcombine.low %v1942, %v1958
        %v1967 = vcombine.high %v1942, %v1958
        %v1969 = vunpack.c.l.s4 1934713408
        %v1970 = vunpack.c.0.s8 %v1969
        %v1971 = vlaneseq
        %v1972 = vshrl.u32 %v1971, 7
        %v1973 = vsub.s32 %v1970, %v1972
        %v1974 = vrot.slane %v1966, %v1973
        %v1976 = vunpack.c.l.s4 1934713408
        %v1977 = vunpack.c.0.s8 %v1976
        %v1978 = vlaneseq
        %v1979 = vshrl.u32 %v1978, 7
        %v1980 = vsub.s32 %v1977, %v1979
        %v1981 = vrot.slane %v1967, %v1980
        %v1982 = vcombine.low %v1949, %v1965
        %v1983 = vcombine.high %v1949, %v1965
        %v1985 = vunpack.c.l.s4 1934713408
        %v1986 = vunpack.c.0.s8 %v1985
        %v1987 = vlaneseq
        %v1988 = vshrl.u32 %v1987, 7
        %v1989 = vsub.s32 %v1986, %v1988
        %v1990 = vrot.slane %v1982, %v1989
        %v1992 = vunpack.c.l.s4 1934713408
        %v1993 = vunpack.c.0.s8 %v1992
        %v1994 = vlaneseq
        %v1995 = vshrl.u32 %v1994, 7
        %v1996 = vsub.s32 %v1993, %v1995
        %v1997 = vrot.slane %v1983, %v1996
        %v1998 = vcombine.high %v1974, 0.0
        %v1999 = vcombine.high %v1981, 0.0
        %v2000 = vcombine.high %v1990, 0.0
        %v2001 = vcombine.high %v1997, 0.0
        %v2002 = vcombine.low %v1012, %v1115
        %v2003 = vcombine.high %v1012, %v1115
        %v2005 = vunpack.c.l.s4 1983009808
        %v2006 = vunpack.c.0.s8 %v2005
        %v2007 = vlaneseq
        %v2008 = vshrl.u32 %v2007, 7
        %v2009 = vsub.s32 %v2006, %v2008
        %v2010 = vrot.slane %v2002, %v2009
        %v2012 = vunpack.c.l.s4 1983009808
        %v2013 = vunpack.c.0.s8 %v2012
        %v2014 = vlaneseq
        %v2015 = vshrl.u32 %v2014, 7
        %v2016 = vsub.s32 %v2013, %v2015
        %v2017 = vrot.slane %v2003, %v2016
        %v2018 = vcombine.low %v1067, %v1163
        %v2019 = vcombine.high %v1067, %v1163
        %v2021 = vunpack.c.l.s4 1983009808
        %v2022 = vunpack.c.0.s8 %v2021
        %v2023 = vlaneseq
        %v2024 = vshrl.u32 %v2023, 7
        %v2025 = vsub.s32 %v2022, %v2024
        %v2026 = vrot.slane %v2018, %v2025
        %v2028 = vunpack.c.l.s4 1983009808
        %v2029 = vunpack.c.0.s8 %v2028
        %v2030 = vlaneseq
        %v2031 = vshrl.u32 %v2030, 7
        %v2032 = vsub.s32 %v2029, %v2031
        %v2033 = vrot.slane %v2019, %v2032
        %v2034 = vcombine.low %v2010, %v2026
        %v2035 = vcombine.high %v2010, %v2026
        %v2037 = vunpack.c.l.s4 1934713408
        %v2038 = vunpack.c.0.s8 %v2037
        %v2039 = vlaneseq
        %v2040 = vshrl.u32 %v2039, 7
        %v2041 = vsub.s32 %v2038, %v2040
        %v2042 = vrot.slane %v2034, %v2041
        %v2044 = vunpack.c.l.s4 1934713408
        %v2045 = vunpack.c.0.s8 %v2044
        %v2046 = vlaneseq
        %v2047 = vshrl.u32 %v2046, 7
        %v2048 = vsub.s32 %v2045, %v2047
        %v2049 = vrot.slane %v2035, %v2048
        %v2050 = vcombine.low %v2017, %v2033
        %v2051 = vcombine.high %v2017, %v2033
        %v2053 = vunpack.c.l.s4 1934713408
        %v2054 = vunpack.c.0.s8 %v2053
        %v2055 = vlaneseq
        %v2056 = vshrl.u32 %v2055, 7
        %v2057 = vsub.s32 %v2054, %v2056
        %v2058 = vrot.slane %v2050, %v2057
        %v2060 = vunpack.c.l.s4 1934713408
        %v2061 = vunpack.c.0.s8 %v2060
        %v2062 = vlaneseq
        %v2063 = vshrl.u32 %v2062, 7
        %v2064 = vsub.s32 %v2061, %v2063
        %v2065 = vrot.slane %v2051, %v2064
        %v2066 = vcombine.high %v2042, 0.0
        %v2067 = vcombine.high %v2049, 0.0
        %v2068 = vcombine.high %v2058, 0.0
        %v2069 = vcombine.high %v2065, 0.0
        %v2070 = vcombine.low %v1015, %v1117
        %v2071 = vcombine.high %v1015, %v1117
        %v2073 = vunpack.c.l.s4 1983009808
        %v2074 = vunpack.c.0.s8 %v2073
        %v2075 = vlaneseq
        %v2076 = vshrl.u32 %v2075, 7
        %v2077 = vsub.s32 %v2074, %v2076
        %v2078 = vrot.slane %v2070, %v2077
        %v2080 = vunpack.c.l.s4 1983009808
        %v2081 = vunpack.c.0.s8 %v2080
        %v2082 = vlaneseq
        %v2083 = vshrl.u32 %v2082, 7
        %v2084 = vsub.s32 %v2081, %v2083
        %v2085 = vrot.slane %v2071, %v2084
        %v2086 = vcombine.low %v1069, %v1165
        %v2087 = vcombine.high %v1069, %v1165
        %v2089 = vunpack.c.l.s4 1983009808
        %v2090 = vunpack.c.0.s8 %v2089
        %v2091 = vlaneseq
        %v2092 = vshrl.u32 %v2091, 7
        %v2093 = vsub.s32 %v2090, %v2092
        %v2094 = vrot.slane %v2086, %v2093
        %v2096 = vunpack.c.l.s4 1983009808
        %v2097 = vunpack.c.0.s8 %v2096
        %v2098 = vlaneseq
        %v2099 = vshrl.u32 %v2098, 7
        %v2100 = vsub.s32 %v2097, %v2099
        %v2101 = vrot.slane %v2087, %v2100
        %v2102 = vcombine.low %v2078, %v2094
        %v2103 = vcombine.high %v2078, %v2094
        %v2105 = vunpack.c.l.s4 1934713408
        %v2106 = vunpack.c.0.s8 %v2105
        %v2107 = vlaneseq
        %v2108 = vshrl.u32 %v2107, 7
        %v2109 = vsub.s32 %v2106, %v2108
        %v2110 = vrot.slane %v2102, %v2109
        %v2112 = vunpack.c.l.s4 1934713408
        %v2113 = vunpack.c.0.s8 %v2112
        %v2114 = vlaneseq
        %v2115 = vshrl.u32 %v2114, 7
        %v2116 = vsub.s32 %v2113, %v2115
        %v2117 = vrot.slane %v2103, %v2116
        %v2118 = vcombine.low %v2085, %v2101
        %v2119 = vcombine.high %v2085, %v2101
        %v2121 = vunpack.c.l.s4 1934713408
        %v2122 = vunpack.c.0.s8 %v2121
        %v2123 = vlaneseq
        %v2124 = vshrl.u32 %v2123, 7
        %v2125 = vsub.s32 %v2122, %v2124
        %v2126 = vrot.slane %v2118, %v2125
        %v2128 = vunpack.c.l.s4 1934713408
        %v2129 = vunpack.c.0.s8 %v2128
        %v2130 = vlaneseq
        %v2131 = vshrl.u32 %v2130, 7
        %v2132 = vsub.s32 %v2129, %v2131
        %v2133 = vrot.slane %v2119, %v2132
        %v2134 = vcombine.high %v2110, 0.0
        %v2135 = vcombine.high %v2117, 0.0
        %v2136 = vcombine.high %v2126, 0.0
        %v2137 = vcombine.high %v2133, 0.0
        %v2138 = vcombine.low %v1020, %v1119
        %v2139 = vcombine.high %v1020, %v1119
        %v2141 = vunpack.c.l.s4 1983009808
        %v2142 = vunpack.c.0.s8 %v2141
        %v2143 = vlaneseq
        %v2144 = vshrl.u32 %v2143, 7
        %v2145 = vsub.s32 %v2142, %v2144
        %v2146 = vrot.slane %v2138, %v2145
        %v2148 = vunpack.c.l.s4 1983009808
        %v2149 = vunpack.c.0.s8 %v2148
        %v2150 = vlaneseq
        %v2151 = vshrl.u32 %v2150, 7
        %v2152 = vsub.s32 %v2149, %v2151
        %v2153 = vrot.slane %v2139, %v2152
        %v2154 = vcombine.low %v1071, %v1167
        %v2155 = vcombine.high %v1071, %v1167
        %v2157 = vunpack.c.l.s4 1983009808
        %v2158 = vunpack.c.0.s8 %v2157
        %v2159 = vlaneseq
        %v2160 = vshrl.u32 %v2159, 7
        %v2161 = vsub.s32 %v2158, %v2160
        %v2162 = vrot.slane %v2154, %v2161
        %v2164 = vunpack.c.l.s4 1983009808
        %v2165 = vunpack.c.0.s8 %v2164
        %v2166 = vlaneseq
        %v2167 = vshrl.u32 %v2166, 7
        %v2168 = vsub.s32 %v2165, %v2167
        %v2169 = vrot.slane %v2155, %v2168
        %v2170 = vcombine.low %v2146, %v2162
        %v2171 = vcombine.high %v2146, %v2162
        %v2173 = vunpack.c.l.s4 1934713408
        %v2174 = vunpack.c.0.s8 %v2173
        %v2175 = vlaneseq
        %v2176 = vshrl.u32 %v2175, 7
        %v2177 = vsub.s32 %v2174, %v2176
        %v2178 = vrot.slane %v2170, %v2177
        %v2180 = vunpack.c.l.s4 1934713408
        %v2181 = vunpack.c.0.s8 %v2180
        %v2182 = vlaneseq
        %v2183 = vshrl.u32 %v2182, 7
        %v2184 = vsub.s32 %v2181, %v2183
        %v2185 = vrot.slane %v2171, %v2184
        %v2186 = vcombine.low %v2153, %v2169
        %v2187 = vcombine.high %v2153, %v2169
        %v2189 = vunpack.c.l.s4 1934713408
        %v2190 = vunpack.c.0.s8 %v2189
        %v2191 = vlaneseq
        %v2192 = vshrl.u32 %v2191, 7
        %v2193 = vsub.s32 %v2190, %v2192
        %v2194 = vrot.slane %v2186, %v2193
        %v2196 = vunpack.c.l.s4 1934713408
        %v2197 = vunpack.c.0.s8 %v2196
        %v2198 = vlaneseq
        %v2199 = vshrl.u32 %v2198, 7
        %v2200 = vsub.s32 %v2197, %v2199
        %v2201 = vrot.slane %v2187, %v2200
        %v2202 = vcombine.high %v2178, 0.0
        %v2203 = vcombine.high %v2185, 0.0
        %v2204 = vcombine.high %v2194, 0.0
        %v2205 = vcombine.high %v2201, 0.0
        %v2206 = vcombine.low %v1023, %v1121
        %v2207 = vcombine.high %v1023, %v1121
        %v2209 = vunpack.c.l.s4 1983009808
        %v2210 = vunpack.c.0.s8 %v2209
        %v2211 = vlaneseq
        %v2212 = vshrl.u32 %v2211, 7
        %v2213 = vsub.s32 %v2210, %v2212
        %v2214 = vrot.slane %v2206, %v2213
        %v2216 = vunpack.c.l.s4 1983009808
        %v2217 = vunpack.c.0.s8 %v2216
        %v2218 = vlaneseq
        %v2219 = vshrl.u32 %v2218, 7
        %v2220 = vsub.s32 %v2217, %v2219
        %v2221 = vrot.slane %v2207, %v2220
        %v2222 = vcombine.low %v1073, %v1169
        %v2223 = vcombine.high %v1073, %v1169
        %v2225 = vunpack.c.l.s4 1983009808
        %v2226 = vunpack.c.0.s8 %v2225
        %v2227 = vlaneseq
        %v2228 = vshrl.u32 %v2227, 7
        %v2229 = vsub.s32 %v2226, %v2228
        %v2230 = vrot.slane %v2222, %v2229
        %v2232 = vunpack.c.l.s4 1983009808
        %v2233 = vunpack.c.0.s8 %v2232
        %v2234 = vlaneseq
        %v2235 = vshrl.u32 %v2234, 7
        %v2236 = vsub.s32 %v2233, %v2235
        %v2237 = vrot.slane %v2223, %v2236
        %v2238 = vcombine.low %v2214, %v2230
        %v2239 = vcombine.high %v2214, %v2230
        %v2241 = vunpack.c.l.s4 1934713408
        %v2242 = vunpack.c.0.s8 %v2241
        %v2243 = vlaneseq
        %v2244 = vshrl.u32 %v2243, 7
        %v2245 = vsub.s32 %v2242, %v2244
        %v2246 = vrot.slane %v2238, %v2245
        %v2248 = vunpack.c.l.s4 1934713408
        %v2249 = vunpack.c.0.s8 %v2248
        %v2250 = vlaneseq
        %v2251 = vshrl.u32 %v2250, 7
        %v2252 = vsub.s32 %v2249, %v2251
        %v2253 = vrot.slane %v2239, %v2252
        %v2254 = vcombine.low %v2221, %v2237
        %v2255 = vcombine.high %v2221, %v2237
        %v2257 = vunpack.c.l.s4 1934713408
        %v2258 = vunpack.c.0.s8 %v2257
        %v2259 = vlaneseq
        %v2260 = vshrl.u32 %v2259, 7
        %v2261 = vsub.s32 %v2258, %v2260
        %v2262 = vrot.slane %v2254, %v2261
        %v2264 = vunpack.c.l.s4 1934713408
        %v2265 = vunpack.c.0.s8 %v2264
        %v2266 = vlaneseq
        %v2267 = vshrl.u32 %v2266, 7
        %v2268 = vsub.s32 %v2265, %v2267
        %v2269 = vrot.slane %v2255, %v2268
        %v2270 = vcombine.high %v2246, 0.0
        %v2271 = vcombine.high %v2253, 0.0
        %v2272 = vcombine.high %v2262, 0.0
        %v2273 = vcombine.high %v2269, 0.0
        %v2274 = vcombine.low %v1226, %v1233
        %v2276 = vunpack.c.l.s4 1983009808
        %v2277 = vunpack.c.0.s8 %v2276
        %v2278 = vlaneseq
        %v2279 = vshrl.u32 %v2278, 7
        %v2280 = vsub.s32 %v2277, %v2279
        %v2281 = vrot.slane %v2274, %v2280
        %v2282 = vcombine.low %v1250, %v1251
        %v2284 = vunpack.c.l.s4 1983009808
        %v2285 = vunpack.c.0.s8 %v2284
        %v2286 = vlaneseq
        %v2287 = vshrl.u32 %v2286, 7
        %v2288 = vsub.s32 %v2285, %v2287
        %v2289 = vrot.slane %v2282, %v2288
        %v2290 = vcombine.low %v1242, %v1249
        %v2292 = vunpack.c.l.s4 1983009808
        %v2293 = vunpack.c.0.s8 %v2292
        %v2294 = vlaneseq
        %v2295 = vshrl.u32 %v2294, 7
        %v2296 = vsub.s32 %v2293, %v2295
        %v2297 = vrot.slane %v2290, %v2296
        %v2298 = vcombine.low %v1252, %v1253
        %v2300 = vunpack.c.l.s4 1983009808
        %v2301 = vunpack.c.0.s8 %v2300
        %v2302 = vlaneseq
        %v2303 = vshrl.u32 %v2302, 7
        %v2304 = vsub.s32 %v2301, %v2303
        %v2305 = vrot.slane %v2298, %v2304
        %v2306 = vcombine.low %v2281, %v2289
        %v2307 = vcombine.high %v2281, %v2289
        %v2309 = vunpack.c.l.s4 1934713408
        %v2310 = vunpack.c.0.s8 %v2309
        %v2311 = vlaneseq
        %v2312 = vshrl.u32 %v2311, 7
        %v2313 = vsub.s32 %v2310, %v2312
        %v2314 = vrot.slane %v2306, %v2313
        %v2316 = vunpack.c.l.s4 1934713408
        %v2317 = vunpack.c.0.s8 %v2316
        %v2318 = vlaneseq
        %v2319 = vshrl.u32 %v2318, 7
        %v2320 = vsub.s32 %v2317, %v2319
        %v2321 = vrot.slane %v2307, %v2320
        %v2322 = vcombine.low %v2297, %v2305
        %v2323 = vcombine.high %v2297, %v2305
        %v2325 = vunpack.c.l.s4 1934713408
        %v2326 = vunpack.c.0.s8 %v2325
        %v2327 = vlaneseq
        %v2328 = vshrl.u32 %v2327, 7
        %v2329 = vsub.s32 %v2326, %v2328
        %v2330 = vrot.slane %v2322, %v2329
        %v2332 = vunpack.c.l.s4 1934713408
        %v2333 = vunpack.c.0.s8 %v2332
        %v2334 = vlaneseq
        %v2335 = vshrl.u32 %v2334, 7
        %v2336 = vsub.s32 %v2333, %v2335
        %v2337 = vrot.slane %v2323, %v2336
        %v2338 = vcombine.low %v2314, %v2330
        %v2339 = vcombine.high %v2314, %v2330
        %v2340 = vcombine.low %v2321, %v2337
        %v2341 = vcombine.high %v2321, %v2337
        %v2342 = vcombine.low %v1294, %v1301
        %v2344 = vunpack.c.l.s4 1983009808
        %v2345 = vunpack.c.0.s8 %v2344
        %v2346 = vlaneseq
        %v2347 = vshrl.u32 %v2346, 7
        %v2348 = vsub.s32 %v2345, %v2347
        %v2349 = vrot.slane %v2342, %v2348
        %v2350 = vcombine.low %v1318, %v1319
        %v2352 = vunpack.c.l.s4 1983009808
        %v2353 = vunpack.c.0.s8 %v2352
        %v2354 = vlaneseq
        %v2355 = vshrl.u32 %v2354, 7
        %v2356 = vsub.s32 %v2353, %v2355
        %v2357 = vrot.slane %v2350, %v2356
        %v2358 = vcombine.low %v1310, %v1317
        %v2360 = vunpack.c.l.s4 1983009808
        %v2361 = vunpack.c.0.s8 %v2360
        %v2362 = vlaneseq
        %v2363 = vshrl.u32 %v2362, 7
        %v2364 = vsub.s32 %v2361, %v2363
        %v2365 = vrot.slane %v2358, %v2364
        %v2366 = vcombine.low %v1320, %v1321
        %v2368 = vunpack.c.l.s4 1983009808
        %v2369 = vunpack.c.0.s8 %v2368
        %v2370 = vlaneseq
        %v2371 = vshrl.u32 %v2370, 7
        %v2372 = vsub.s32 %v2369, %v2371
        %v2373 = vrot.slane %v2366, %v2372
        %v2374 = vcombine.low %v2349, %v2357
        %v2375 = vcombine.high %v2349, %v2357
        %v2377 = vunpack.c.l.s4 1934713408
        %v2378 = vunpack.c.0.s8 %v2377
        %v2379 = vlaneseq
        %v2380 = vshrl.u32 %v2379, 7
        %v2381 = vsub.s32 %v2378, %v2380
        %v2382 = vrot.slane %v2374, %v2381
        %v2384 = vunpack.c.l.s4 1934713408
        %v2385 = vunpack.c.0.s8 %v2384
        %v2386 = vlaneseq
        %v2387 = vshrl.u32 %v2386, 7
        %v2388 = vsub.s32 %v2385, %v2387
        %v2389 = vrot.slane %v2375, %v2388
        %v2390 = vcombine.low %v2365, %v2373
        %v2391 = vcombine.high %v2365, %v2373
        %v2393 = vunpack.c.l.s4 1934713408
        %v2394 = vunpack.c.0.s8 %v2393
        %v2395 = vlaneseq
        %v2396 = vshrl.u32 %v2395, 7
        %v2397 = vsub.s32 %v2394, %v2396
        %v2398 = vrot.slane %v2390, %v2397
        %v2400 = vunpack.c.l.s4 1934713408
        %v2401 = vunpack.c.0.s8 %v2400
        %v2402 = vlaneseq
        %v2403 = vshrl.u32 %v2402, 7
        %v2404 = vsub.s32 %v2401, %v2403
        %v2405 = vrot.slane %v2391, %v2404
        %v2406 = vcombine.low %v2382, %v2398
        %v2407 = vcombine.high %v2382, %v2398
        %v2408 = vcombine.low %v2389, %v2405
        %v2409 = vcombine.high %v2389, %v2405
        %v2410 = vcombine.low %v1362, %v1369
        %v2412 = vunpack.c.l.s4 1983009808
        %v2413 = vunpack.c.0.s8 %v2412
        %v2414 = vlaneseq
        %v2415 = vshrl.u32 %v2414, 7
        %v2416 = vsub.s32 %v2413, %v2415
        %v2417 = vrot.slane %v2410, %v2416
        %v2418 = vcombine.low %v1386, %v1387
        %v2420 = vunpack.c.l.s4 1983009808
        %v2421 = vunpack.c.0.s8 %v2420
        %v2422 = vlaneseq
        %v2423 = vshrl.u32 %v2422, 7
        %v2424 = vsub.s32 %v2421, %v2423
        %v2425 = vrot.slane %v2418, %v2424
        %v2426 = vcombine.low %v1378, %v1385
        %v2428 = vunpack.c.l.s4 1983009808
        %v2429 = vunpack.c.0.s8 %v2428
        %v2430 = vlaneseq
        %v2431 = vshrl.u32 %v2430, 7
        %v2432 = vsub.s32 %v2429, %v2431
        %v2433 = vrot.slane %v2426, %v2432
        %v2434 = vcombine.low %v1388, %v1389
        %v2436 = vunpack.c.l.s4 1983009808
        %v2437 = vunpack.c.0.s8 %v2436
        %v2438 = vlaneseq
        %v2439 = vshrl.u32 %v2438, 7
        %v2440 = vsub.s32 %v2437, %v2439
        %v2441 = vrot.slane %v2434, %v2440
        %v2442 = vcombine.low %v2417, %v2425
        %v2443 = vcombine.high %v2417, %v2425
        %v2445 = vunpack.c.l.s4 1934713408
        %v2446 = vunpack.c.0.s8 %v2445
        %v2447 = vlaneseq
        %v2448 = vshrl.u32 %v2447, 7
        %v2449 = vsub.s32 %v2446, %v2448
        %v2450 = vrot.slane %v2442, %v2449
        %v2452 = vunpack.c.l.s4 1934713408
        %v2453 = vunpack.c.0.s8 %v2452
        %v2454 = vlaneseq
        %v2455 = vshrl.u32 %v2454, 7
        %v2456 = vsub.s32 %v2453, %v2455
        %v2457 = vrot.slane %v2443, %v2456
        %v2458 = vcombine.low %v2433, %v2441
        %v2459 = vcombine.high %v2433, %v2441
        %v2461 = vunpack.c.l.s4 1934713408
        %v2462 = vunpack.c.0.s8 %v2461
        %v2463 = vlaneseq
        %v2464 = vshrl.u32 %v2463, 7
        %v2465 = vsub.s32 %v2462, %v2464
        %v2466 = vrot.slane %v2458, %v2465
        %v2468 = vunpack.c.l.s4 1934713408
        %v2469 = vunpack.c.0.s8 %v2468
        %v2470 = vlaneseq
        %v2471 = vshrl.u32 %v2470, 7
        %v2472 = vsub.s32 %v2469, %v2471
        %v2473 = vrot.slane %v2459, %v2472
        %v2474 = vcombine.low %v2450, %v2466
        %v2475 = vcombine.high %v2450, %v2466
        %v2476 = vcombine.low %v2457, %v2473
        %v2477 = vcombine.high %v2457, %v2473
        %v2478 = vcombine.low %v1430, %v1437
        %v2480 = vunpack.c.l.s4 1983009808
        %v2481 = vunpack.c.0.s8 %v2480
        %v2482 = vlaneseq
        %v2483 = vshrl.u32 %v2482, 7
        %v2484 = vsub.s32 %v2481, %v2483
        %v2485 = vrot.slane %v2478, %v2484
        %v2486 = vcombine.low %v1454, %v1455
        %v2488 = vunpack.c.l.s4 1983009808
        %v2489 = vunpack.c.0.s8 %v2488
        %v2490 = vlaneseq
        %v2491 = vshrl.u32 %v2490, 7
        %v2492 = vsub.s32 %v2489, %v2491
        %v2493 = vrot.slane %v2486, %v2492
        %v2494 = vcombine.low %v1446, %v1453
        %v2496 = vunpack.c.l.s4 1983009808
        %v2497 = vunpack.c.0.s8 %v2496
        %v2498 = vlaneseq
        %v2499 = vshrl.u32 %v2498, 7
        %v2500 = vsub.s32 %v2497, %v2499
        %v2501 = vrot.slane %v2494, %v2500
        %v2502 = vcombine.low %v1456, %v1457
        %v2504 = vunpack.c.l.s4 1983009808
        %v2505 = vunpack.c.0.s8 %v2504
        %v2506 = vlaneseq
        %v2507 = vshrl.u32 %v2506, 7
        %v2508 = vsub.s32 %v2505, %v2507
        %v2509 = vrot.slane %v2502, %v2508
        %v2510 = vcombine.low %v2485, %v2493
        %v2511 = vcombine.high %v2485, %v2493
        %v2513 = vunpack.c.l.s4 1934713408
        %v2514 = vunpack.c.0.s8 %v2513
        %v2515 = vlaneseq
        %v2516 = vshrl.u32 %v2515, 7
        %v2517 = vsub.s32 %v2514, %v2516
        %v2518 = vrot.slane %v2510, %v2517
        %v2520 = vunpack.c.l.s4 1934713408
        %v2521 = vunpack.c.0.s8 %v2520
        %v2522 = vlaneseq
        %v2523 = vshrl.u32 %v2522, 7
        %v2524 = vsub.s32 %v2521, %v2523
        %v2525 = vrot.slane %v2511, %v2524
        %v2526 = vcombine.low %v2501, %v2509
        %v2527 = vcombine.high %v2501, %v2509
        %v2529 = vunpack.c.l.s4 1934713408
        %v2530 = vunpack.c.0.s8 %v2529
        %v2531 = vlaneseq
        %v2532 = vshrl.u32 %v2531, 7
        %v2533 = vsub.s32 %v2530, %v2532
        %v2534 = vrot.slane %v2526, %v2533
        %v2536 = vunpack.c.l.s4 1934713408
        %v2537 = vunpack.c.0.s8 %v2536
        %v2538 = vlaneseq
        %v2539 = vshrl.u32 %v2538, 7
        %v2540 = vsub.s32 %v2537, %v2539
        %v2541 = vrot.slane %v2527, %v2540
        %v2542 = vcombine.low %v2518, %v2534
        %v2543 = vcombine.high %v2518, %v2534
        %v2544 = vcombine.low %v2525, %v2541
        %v2545 = vcombine.high %v2525, %v2541
        %v2546 = vcombine.low %v1498, %v1505
        %v2548 = vunpack.c.l.s4 1983009808
        %v2549 = vunpack.c.0.s8 %v2548
        %v2550 = vlaneseq
        %v2551 = vshrl.u32 %v2550, 7
        %v2552 = vsub.s32 %v2549, %v2551
        %v2553 = vrot.slane %v2546, %v2552
        %v2554 = vcombine.low %v1522, %v1523
        %v2556 = vunpack.c.l.s4 1983009808
        %v2557 = vunpack.c.0.s8 %v2556
        %v2558 = vlaneseq
        %v2559 = vshrl.u32 %v2558, 7
        %v2560 = vsub.s32 %v2557, %v2559
        %v2561 = vrot.slane %v2554, %v2560
        %v2562 = vcombine.low %v1514, %v1521
        %v2564 = vunpack.c.l.s4 1983009808
        %v2565 = vunpack.c.0.s8 %v2564
        %v2566 = vlaneseq
        %v2567 = vshrl.u32 %v2566, 7
        %v2568 = vsub.s32 %v2565, %v2567
        %v2569 = vrot.slane %v2562, %v2568
        %v2570 = vcombine.low %v1524, %v1525
        %v2572 = vunpack.c.l.s4 1983009808
        %v2573 = vunpack.c.0.s8 %v2572
        %v2574 = vlaneseq
        %v2575 = vshrl.u32 %v2574, 7
        %v2576 = vsub.s32 %v2573, %v2575
        %v2577 = vrot.slane %v2570, %v2576
        %v2578 = vcombine.low %v2553, %v2561
        %v2579 = vcombine.high %v2553, %v2561
        %v2581 = vunpack.c.l.s4 1934713408
        %v2582 = vunpack.c.0.s8 %v2581
        %v2583 = vlaneseq
        %v2584 = vshrl.u32 %v2583, 7
        %v2585 = vsub.s32 %v2582, %v2584
        %v2586 = vrot.slane %v2578, %v2585
        %v2588 = vunpack.c.l.s4 1934713408
        %v2589 = vunpack.c.0.s8 %v2588
        %v2590 = vlaneseq
        %v2591 = vshrl.u32 %v2590, 7
        %v2592 = vsub.s32 %v2589, %v2591
        %v2593 = vrot.slane %v2579, %v2592
        %v2594 = vcombine.low %v2569, %v2577
        %v2595 = vcombine.high %v2569, %v2577
        %v2597 = vunpack.c.l.s4 1934713408
        %v2598 = vunpack.c.0.s8 %v2597
        %v2599 = vlaneseq
        %v2600 = vshrl.u32 %v2599, 7
        %v2601 = vsub.s32 %v2598, %v2600
        %v2602 = vrot.slane %v2594, %v2601
        %v2604 = vunpack.c.l.s4 1934713408
        %v2605 = vunpack.c.0.s8 %v2604
        %v2606 = vlaneseq
        %v2607 = vshrl.u32 %v2606, 7
        %v2608 = vsub.s32 %v2605, %v2607
        %v2609 = vrot.slane %v2595, %v2608
        %v2610 = vcombine.low %v2586, %v2602
        %v2611 = vcombine.high %v2586, %v2602
        %v2612 = vcombine.low %v2593, %v2609
        %v2613 = vcombine.high %v2593, %v2609
        %v2614 = vcombine.low %v1566, %v1573
        %v2616 = vunpack.c.l.s4 1983009808
        %v2617 = vunpack.c.0.s8 %v2616
        %v2618 = vlaneseq
        %v2619 = vshrl.u32 %v2618, 7
        %v2620 = vsub.s32 %v2617, %v2619
        %v2621 = vrot.slane %v2614, %v2620
        %v2622 = vcombine.low %v1590, %v1591
        %v2624 = vunpack.c.l.s4 1983009808
        %v2625 = vunpack.c.0.s8 %v2624
        %v2626 = vlaneseq
        %v2627 = vshrl.u32 %v2626, 7
        %v2628 = vsub.s32 %v2625, %v2627
        %v2629 = vrot.slane %v2622, %v2628
        %v2630 = vcombine.low %v1582, %v1589
        %v2632 = vunpack.c.l.s4 1983009808
        %v2633 = vunpack.c.0.s8 %v2632
        %v2634 = vlaneseq
        %v2635 = vshrl.u32 %v2634, 7
        %v2636 = vsub.s32 %v2633, %v2635
        %v2637 = vrot.slane %v2630, %v2636
        %v2638 = vcombine.low %v1592, %v1593
        %v2640 = vunpack.c.l.s4 1983009808
        %v2641 = vunpack.c.0.s8 %v2640
        %v2642 = vlaneseq
        %v2643 = vshrl.u32 %v2642, 7
        %v2644 = vsub.s32 %v2641, %v2643
        %v2645 = vrot.slane %v2638, %v2644
        %v2646 = vcombine.low %v2621, %v2629
        %v2647 = vcombine.high %v2621, %v2629
        %v2649 = vunpack.c.l.s4 1934713408
        %v2650 = vunpack.c.0.s8 %v2649
        %v2651 = vlaneseq
        %v2652 = vshrl.u32 %v2651, 7
        %v2653 = vsub.s32 %v2650, %v2652
        %v2654 = vrot.slane %v2646, %v2653
        %v2656 = vunpack.c.l.s4 1934713408
        %v2657 = vunpack.c.0.s8 %v2656
        %v2658 = vlaneseq
        %v2659 = vshrl.u32 %v2658, 7
        %v2660 = vsub.s32 %v2657, %v2659
        %v2661 = vrot.slane %v2647, %v2660
        %v2662 = vcombine.low %v2637, %v2645
        %v2663 = vcombine.high %v2637, %v2645
        %v2665 = vunpack.c.l.s4 1934713408
        %v2666 = vunpack.c.0.s8 %v2665
        %v2667 = vlaneseq
        %v2668 = vshrl.u32 %v2667, 7
        %v2669 = vsub.s32 %v2666, %v2668
        %v2670 = vrot.slane %v2662, %v2669
        %v2672 = vunpack.c.l.s4 1934713408
        %v2673 = vunpack.c.0.s8 %v2672
        %v2674 = vlaneseq
        %v2675 = vshrl.u32 %v2674, 7
        %v2676 = vsub.s32 %v2673, %v2675
        %v2677 = vrot.slane %v2663, %v2676
        %v2678 = vcombine.low %v2654, %v2670
        %v2679 = vcombine.high %v2654, %v2670
        %v2680 = vcombine.low %v2661, %v2677
        %v2681 = vcombine.high %v2661, %v2677
        %v2682 = vcombine.low %v1634, %v1641
        %v2684 = vunpack.c.l.s4 1983009808
        %v2685 = vunpack.c.0.s8 %v2684
        %v2686 = vlaneseq
        %v2687 = vshrl.u32 %v2686, 7
        %v2688 = vsub.s32 %v2685, %v2687
        %v2689 = vrot.slane %v2682, %v2688
        %v2690 = vcombine.low %v1658, %v1659
        %v2692 = vunpack.c.l.s4 1983009808
        %v2693 = vunpack.c.0.s8 %v2692
        %v2694 = vlaneseq
        %v2695 = vshrl.u32 %v2694, 7
        %v2696 = vsub.s32 %v2693, %v2695
        %v2697 = vrot.slane %v2690, %v2696
        %v2698 = vcombine.low %v1650, %v1657
        %v2700 = vunpack.c.l.s4 1983009808
        %v2701 = vunpack.c.0.s8 %v2700
        %v2702 = vlaneseq
        %v2703 = vshrl.u32 %v2702, 7
        %v2704 = vsub.s32 %v2701, %v2703
        %v2705 = vrot.slane %v2698, %v2704
        %v2706 = vcombine.low %v1660, %v1661
        %v2708 = vunpack.c.l.s4 1983009808
        %v2709 = vunpack.c.0.s8 %v2708
        %v2710 = vlaneseq
        %v2711 = vshrl.u32 %v2710, 7
        %v2712 = vsub.s32 %v2709, %v2711
        %v2713 = vrot.slane %v2706, %v2712
        %v2714 = vcombine.low %v2689, %v2697
        %v2715 = vcombine.high %v2689, %v2697
        %v2717 = vunpack.c.l.s4 1934713408
        %v2718 = vunpack.c.0.s8 %v2717
        %v2719 = vlaneseq
        %v2720 = vshrl.u32 %v2719, 7
        %v2721 = vsub.s32 %v2718, %v2720
        %v2722 = vrot.slane %v2714, %v2721
        %v2724 = vunpack.c.l.s4 1934713408
        %v2725 = vunpack.c.0.s8 %v2724
        %v2726 = vlaneseq
        %v2727 = vshrl.u32 %v2726, 7
        %v2728 = vsub.s32 %v2725, %v2727
        %v2729 = vrot.slane %v2715, %v2728
        %v2730 = vcombine.low %v2705, %v2713
        %v2731 = vcombine.high %v2705, %v2713
        %v2733 = vunpack.c.l.s4 1934713408
        %v2734 = vunpack.c.0.s8 %v2733
        %v2735 = vlaneseq
        %v2736 = vshrl.u32 %v2735, 7
        %v2737 = vsub.s32 %v2734, %v2736
        %v2738 = vrot.slane %v2730, %v2737
        %v2740 = vunpack.c.l.s4 1934713408
        %v2741 = vunpack.c.0.s8 %v2740
        %v2742 = vlaneseq
        %v2743 = vshrl.u32 %v2742, 7
        %v2744 = vsub.s32 %v2741, %v2743
        %v2745 = vrot.slane %v2731, %v2744
        %v2746 = vcombine.low %v2722, %v2738
        %v2747 = vcombine.high %v2722, %v2738
        %v2748 = vcombine.low %v2729, %v2745
        %v2749 = vcombine.high %v2729, %v2745
        %v2750 = vcombine.low %v1702, %v1709
        %v2752 = vunpack.c.l.s4 1983009808
        %v2753 = vunpack.c.0.s8 %v2752
        %v2754 = vlaneseq
        %v2755 = vshrl.u32 %v2754, 7
        %v2756 = vsub.s32 %v2753, %v2755
        %v2757 = vrot.slane %v2750, %v2756
        %v2758 = vcombine.low %v1726, %v1727
        %v2760 = vunpack.c.l.s4 1983009808
        %v2761 = vunpack.c.0.s8 %v2760
        %v2762 = vlaneseq
        %v2763 = vshrl.u32 %v2762, 7
        %v2764 = vsub.s32 %v2761, %v2763
        %v2765 = vrot.slane %v2758, %v2764
        %v2766 = vcombine.low %v1718, %v1725
        %v2768 = vunpack.c.l.s4 1983009808
        %v2769 = vunpack.c.0.s8 %v2768
        %v2770 = vlaneseq
        %v2771 = vshrl.u32 %v2770, 7
        %v2772 = vsub.s32 %v2769, %v2771
        %v2773 = vrot.slane %v2766, %v2772
        %v2774 = vcombine.low %v1728, %v1729
        %v2776 = vunpack.c.l.s4 1983009808
        %v2777 = vunpack.c.0.s8 %v2776
        %v2778 = vlaneseq
        %v2779 = vshrl.u32 %v2778, 7
        %v2780 = vsub.s32 %v2777, %v2779
        %v2781 = vrot.slane %v2774, %v2780
        %v2782 = vcombine.low %v2757, %v2765
        %v2783 = vcombine.high %v2757, %v2765
        %v2785 = vunpack.c.l.s4 1934713408
        %v2786 = vunpack.c.0.s8 %v2785
        %v2787 = vlaneseq
        %v2788 = vshrl.u32 %v2787, 7
        %v2789 = vsub.s32 %v2786, %v2788
        %v2790 = vrot.slane %v2782, %v2789
        %v2792 = vunpack.c.l.s4 1934713408
        %v2793 = vunpack.c.0.s8 %v2792
        %v2794 = vlaneseq
        %v2795 = vshrl.u32 %v2794, 7
        %v2796 = vsub.s32 %v2793, %v2795
        %v2797 = vrot.slane %v2783, %v2796
        %v2798 = vcombine.low %v2773, %v2781
        %v2799 = vcombine.high %v2773, %v2781
        %v2801 = vunpack.c.l.s4 1934713408
        %v2802 = vunpack.c.0.s8 %v2801
        %v2803 = vlaneseq
        %v2804 = vshrl.u32 %v2803, 7
        %v2805 = vsub.s32 %v2802, %v2804
        %v2806 = vrot.slane %v2798, %v2805
        %v2808 = vunpack.c.l.s4 1934713408
        %v2809 = vunpack.c.0.s8 %v2808
        %v2810 = vlaneseq
        %v2811 = vshrl.u32 %v2810, 7
        %v2812 = vsub.s32 %v2809, %v2811
        %v2813 = vrot.slane %v2799, %v2812
        %v2814 = vcombine.low %v2790, %v2806
        %v2815 = vcombine.high %v2790, %v2806
        %v2816 = vcombine.low %v2797, %v2813
        %v2817 = vcombine.high %v2797, %v2813
        %v2818 = vcombine.low %v1770, %v1777
        %v2820 = vunpack.c.l.s4 1983009808
        %v2821 = vunpack.c.0.s8 %v2820
        %v2822 = vlaneseq
        %v2823 = vshrl.u32 %v2822, 7
        %v2824 = vsub.s32 %v2821, %v2823
        %v2825 = vrot.slane %v2818, %v2824
        %v2826 = vcombine.low %v1794, %v1795
        %v2828 = vunpack.c.l.s4 1983009808
        %v2829 = vunpack.c.0.s8 %v2828
        %v2830 = vlaneseq
        %v2831 = vshrl.u32 %v2830, 7
        %v2832 = vsub.s32 %v2829, %v2831
        %v2833 = vrot.slane %v2826, %v2832
        %v2834 = vcombine.low %v1786, %v1793
        %v2836 = vunpack.c.l.s4 1983009808
        %v2837 = vunpack.c.0.s8 %v2836
        %v2838 = vlaneseq
        %v2839 = vshrl.u32 %v2838, 7
        %v2840 = vsub.s32 %v2837, %v2839
        %v2841 = vrot.slane %v2834, %v2840
        %v2842 = vcombine.low %v1796, %v1797
        %v2844 = vunpack.c.l.s4 1983009808
        %v2845 = vunpack.c.0.s8 %v2844
        %v2846 = vlaneseq
        %v2847 = vshrl.u32 %v2846, 7
        %v2848 = vsub.s32 %v2845, %v2847
        %v2849 = vrot.slane %v2842, %v2848
        %v2850 = vcombine.low %v2825, %v2833
        %v2851 = vcombine.high %v2825, %v2833
        %v2853 = vunpack.c.l.s4 1934713408
        %v2854 = vunpack.c.0.s8 %v2853
        %v2855 = vlaneseq
        %v2856 = vshrl.u32 %v2855, 7
        %v2857 = vsub.s32 %v2854, %v2856
        %v2858 = vrot.slane %v2850, %v2857
        %v2860 = vunpack.c.l.s4 1934713408
        %v2861 = vunpack.c.0.s8 %v2860
        %v2862 = vlaneseq
        %v2863 = vshrl.u32 %v2862, 7
        %v2864 = vsub.s32 %v2861, %v2863
        %v2865 = vrot.slane %v2851, %v2864
        %v2866 = vcombine.low %v2841, %v2849
        %v2867 = vcombine.high %v2841, %v2849
        %v2869 = vunpack.c.l.s4 1934713408
        %v2870 = vunpack.c.0.s8 %v2869
        %v2871 = vlaneseq
        %v2872 = vshrl.u32 %v2871, 7
        %v2873 = vsub.s32 %v2870, %v2872
        %v2874 = vrot.slane %v2866, %v2873
        %v2876 = vunpack.c.l.s4 1934713408
        %v2877 = vunpack.c.0.s8 %v2876
        %v2878 = vlaneseq
        %v2879 = vshrl.u32 %v2878, 7
        %v2880 = vsub.s32 %v2877, %v2879
        %v2881 = vrot.slane %v2867, %v2880
        %v2882 = vcombine.low %v2858, %v2874
        %v2883 = vcombine.high %v2858, %v2874
        %v2884 = vcombine.low %v2865, %v2881
        %v2885 = vcombine.high %v2865, %v2881
        %v2886 = vcombine.low %v1838, %v1845
        %v2888 = vunpack.c.l.s4 1983009808
        %v2889 = vunpack.c.0.s8 %v2888
        %v2890 = vlaneseq
        %v2891 = vshrl.u32 %v2890, 7
        %v2892 = vsub.s32 %v2889, %v2891
        %v2893 = vrot.slane %v2886, %v2892
        %v2894 = vcombine.low %v1862, %v1863
        %v2896 = vunpack.c.l.s4 1983009808
        %v2897 = vunpack.c.0.s8 %v2896
        %v2898 = vlaneseq
        %v2899 = vshrl.u32 %v2898, 7
        %v2900 = vsub.s32 %v2897, %v2899
        %v2901 = vrot.slane %v2894, %v2900
        %v2902 = vcombine.low %v1854, %v1861
        %v2904 = vunpack.c.l.s4 1983009808
        %v2905 = vunpack.c.0.s8 %v2904
        %v2906 = vlaneseq
        %v2907 = vshrl.u32 %v2906, 7
        %v2908 = vsub.s32 %v2905, %v2907
        %v2909 = vrot.slane %v2902, %v2908
        %v2910 = vcombine.low %v1864, %v1865
        %v2912 = vunpack.c.l.s4 1983009808
        %v2913 = vunpack.c.0.s8 %v2912
        %v2914 = vlaneseq
        %v2915 = vshrl.u32 %v2914, 7
        %v2916 = vsub.s32 %v2913, %v2915
        %v2917 = vrot.slane %v2910, %v2916
        %v2918 = vcombine.low %v2893, %v2901
        %v2919 = vcombine.high %v2893, %v2901
        %v2921 = vunpack.c.l.s4 1934713408
        %v2922 = vunpack.c.0.s8 %v2921
        %v2923 = vlaneseq
        %v2924 = vshrl.u32 %v2923, 7
        %v2925 = vsub.s32 %v2922, %v2924
        %v2926 = vrot.slane %v2918, %v2925
        %v2928 = vunpack.c.l.s4 1934713408
        %v2929 = vunpack.c.0.s8 %v2928
        %v2930 = vlaneseq
        %v2931 = vshrl.u32 %v2930, 7
        %v2932 = vsub.s32 %v2929, %v2931
        %v2933 = vrot.slane %v2919, %v2932
        %v2934 = vcombine.low %v2909, %v2917
        %v2935 = vcombine.high %v2909, %v2917
        %v2937 = vunpack.c.l.s4 1934713408
        %v2938 = vunpack.c.0.s8 %v2937
        %v2939 = vlaneseq
        %v2940 = vshrl.u32 %v2939, 7
        %v2941 = vsub.s32 %v2938, %v2940
        %v2942 = vrot.slane %v2934, %v2941
        %v2944 = vunpack.c.l.s4 1934713408
        %v2945 = vunpack.c.0.s8 %v2944
        %v2946 = vlaneseq
        %v2947 = vshrl.u32 %v2946, 7
        %v2948 = vsub.s32 %v2945, %v2947
        %v2949 = vrot.slane %v2935, %v2948
        %v2950 = vcombine.low %v2926, %v2942
        %v2951 = vcombine.high %v2926, %v2942
        %v2952 = vcombine.low %v2933, %v2949
        %v2953 = vcombine.high %v2933, %v2949
        %v2954 = vcombine.low %v1906, %v1913
        %v2956 = vunpack.c.l.s4 1983009808
        %v2957 = vunpack.c.0.s8 %v2956
        %v2958 = vlaneseq
        %v2959 = vshrl.u32 %v2958, 7
        %v2960 = vsub.s32 %v2957, %v2959
        %v2961 = vrot.slane %v2954, %v2960
        %v2962 = vcombine.low %v1930, %v1931
        %v2964 = vunpack.c.l.s4 1983009808
        %v2965 = vunpack.c.0.s8 %v2964
        %v2966 = vlaneseq
        %v2967 = vshrl.u32 %v2966, 7
        %v2968 = vsub.s32 %v2965, %v2967
        %v2969 = vrot.slane %v2962, %v2968
        %v2970 = vcombine.low %v1922, %v1929
        %v2972 = vunpack.c.l.s4 1983009808
        %v2973 = vunpack.c.0.s8 %v2972
        %v2974 = vlaneseq
        %v2975 = vshrl.u32 %v2974, 7
        %v2976 = vsub.s32 %v2973, %v2975
        %v2977 = vrot.slane %v2970, %v2976
        %v2978 = vcombine.low %v1932, %v1933
        %v2980 = vunpack.c.l.s4 1983009808
        %v2981 = vunpack.c.0.s8 %v2980
        %v2982 = vlaneseq
        %v2983 = vshrl.u32 %v2982, 7
        %v2984 = vsub.s32 %v2981, %v2983
        %v2985 = vrot.slane %v2978, %v2984
        %v2986 = vcombine.low %v2961, %v2969
        %v2987 = vcombine.high %v2961, %v2969
        %v2989 = vunpack.c.l.s4 1934713408
        %v2990 = vunpack.c.0.s8 %v2989
        %v2991 = vlaneseq
        %v2992 = vshrl.u32 %v2991, 7
        %v2993 = vsub.s32 %v2990, %v2992
        %v2994 = vrot.slane %v2986, %v2993
        %v2996 = vunpack.c.l.s4 1934713408
        %v2997 = vunpack.c.0.s8 %v2996
        %v2998 = vlaneseq
        %v2999 = vshrl.u32 %v2998, 7
        %v3000 = vsub.s32 %v2997, %v2999
        %v3001 = vrot.slane %v2987, %v3000
        %v3002 = vcombine.low %v2977, %v2985
        %v3003 = vcombine.high %v2977, %v2985
        %v3005 = vunpack.c.l.s4 1934713408
        %v3006 = vunpack.c.0.s8 %v3005
        %v3007 = vlaneseq
        %v3008 = vshrl.u32 %v3007, 7
        %v3009 = vsub.s32 %v3006, %v3008
        %v3010 = vrot.slane %v3002, %v3009
        %v3012 = vunpack.c.l.s4 1934713408
        %v3013 = vunpack.c.0.s8 %v3012
        %v3014 = vlaneseq
        %v3015 = vshrl.u32 %v3014, 7
        %v3016 = vsub.s32 %v3013, %v3015
        %v3017 = vrot.slane %v3003, %v3016
        %v3018 = vcombine.low %v2994, %v3010
        %v3019 = vcombine.high %v2994, %v3010
        %v3020 = vcombine.low %v3001, %v3017
        %v3021 = vcombine.high %v3001, %v3017
        %v3022 = vcombine.low %v1974, %v1981
        %v3024 = vunpack.c.l.s4 1983009808
        %v3025 = vunpack.c.0.s8 %v3024
        %v3026 = vlaneseq
        %v3027 = vshrl.u32 %v3026, 7
        %v3028 = vsub.s32 %v3025, %v3027
        %v3029 = vrot.slane %v3022, %v3028
        %v3030 = vcombine.low %v1998, %v1999
        %v3032 = vunpack.c.l.s4 1983009808
        %v3033 = vunpack.c.0.s8 %v3032
        %v3034 = vlaneseq
        %v3035 = vshrl.u32 %v3034, 7
        %v3036 = vsub.s32 %v3033, %v3035
        %v3037 = vrot.slane %v3030, %v3036
        %v3038 = vcombine.low %v1990, %v1997
        %v3040 = vunpack.c.l.s4 1983009808
        %v3041 = vunpack.c.0.s8 %v3040
        %v3042 = vlaneseq
        %v3043 = vshrl.u32 %v3042, 7
        %v3044 = vsub.s32 %v3041, %v3043
        %v3045 = vrot.slane %v3038, %v3044
        %v3046 = vcombine.low %v2000, %v2001
        %v3048 = vunpack.c.l.s4 1983009808
        %v3049 = vunpack.c.0.s8 %v3048
        %v3050 = vlaneseq
        %v3051 = vshrl.u32 %v3050, 7
        %v3052 = vsub.s32 %v3049, %v3051
        %v3053 = vrot.slane %v3046, %v3052
        %v3054 = vcombine.low %v3029, %v3037
        %v3055 = vcombine.high %v3029, %v3037
        %v3057 = vunpack.c.l.s4 1934713408
        %v3058 = vunpack.c.0.s8 %v3057
        %v3059 = vlaneseq
        %v3060 = vshrl.u32 %v3059, 7
        %v3061 = vsub.s32 %v3058, %v3060
        %v3062 = vrot.slane %v3054, %v3061
        %v3064 = vunpack.c.l.s4 1934713408
        %v3065 = vunpack.c.0.s8 %v3064
        %v3066 = vlaneseq
        %v3067 = vshrl.u32 %v3066, 7
        %v3068 = vsub.s32 %v3065, %v3067
        %v3069 = vrot.slane %v3055, %v3068
        %v3070 = vcombine.low %v3045, %v3053
        %v3071 = vcombine.high %v3045, %v3053
        %v3073 = vunpack.c.l.s4 1934713408
        %v3074 = vunpack.c.0.s8 %v3073
        %v3075 = vlaneseq
        %v3076 = vshrl.u32 %v3075, 7
        %v3077 = vsub.s32 %v3074, %v3076
        %v3078 = vrot.slane %v3070, %v3077
        %v3080 = vunpack.c.l.s4 1934713408
        %v3081 = vunpack.c.0.s8 %v3080
        %v3082 = vlaneseq
        %v3083 = vshrl.u32 %v3082, 7
        %v3084 = vsub.s32 %v3081, %v3083
        %v3085 = vrot.slane %v3071, %v3084
        %v3086 = vcombine.low %v3062, %v3078
        %v3087 = vcombine.high %v3062, %v3078
        %v3088 = vcombine.low %v3069, %v3085
        %v3089 = vcombine.high %v3069, %v3085
        %v3090 = vcombine.low %v2042, %v2049
        %v3092 = vunpack.c.l.s4 1983009808
        %v3093 = vunpack.c.0.s8 %v3092
        %v3094 = vlaneseq
        %v3095 = vshrl.u32 %v3094, 7
        %v3096 = vsub.s32 %v3093, %v3095
        %v3097 = vrot.slane %v3090, %v3096
        %v3098 = vcombine.low %v2066, %v2067
        %v3100 = vunpack.c.l.s4 1983009808
        %v3101 = vunpack.c.0.s8 %v3100
        %v3102 = vlaneseq
        %v3103 = vshrl.u32 %v3102, 7
        %v3104 = vsub.s32 %v3101, %v3103
        %v3105 = vrot.slane %v3098, %v3104
        %v3106 = vcombine.low %v2058, %v2065
        %v3108 = vunpack.c.l.s4 1983009808
        %v3109 = vunpack.c.0.s8 %v3108
        %v3110 = vlaneseq
        %v3111 = vshrl.u32 %v3110, 7
        %v3112 = vsub.s32 %v3109, %v3111
        %v3113 = vrot.slane %v3106, %v3112
        %v3114 = vcombine.low %v2068, %v2069
        %v3116 = vunpack.c.l.s4 1983009808
        %v3117 = vunpack.c.0.s8 %v3116
        %v3118 = vlaneseq
        %v3119 = vshrl.u32 %v3118, 7
        %v3120 = vsub.s32 %v3117, %v3119
        %v3121 = vrot.slane %v3114, %v3120
        %v3122 = vcombine.low %v3097, %v3105
        %v3123 = vcombine.high %v3097, %v3105
        %v3125 = vunpack.c.l.s4 1934713408
        %v3126 = vunpack.c.0.s8 %v3125
        %v3127 = vlaneseq
        %v3128 = vshrl.u32 %v3127, 7
        %v3129 = vsub.s32 %v3126, %v3128
        %v3130 = vrot.slane %v3122, %v3129
        %v3132 = vunpack.c.l.s4 1934713408
        %v3133 = vunpack.c.0.s8 %v3132
        %v3134 = vlaneseq
        %v3135 = vshrl.u32 %v3134, 7
        %v3136 = vsub.s32 %v3133, %v3135
        %v3137 = vrot.slane %v3123, %v3136
        %v3138 = vcombine.low %v3113, %v3121
        %v3139 = vcombine.high %v3113, %v3121
        %v3141 = vunpack.c.l.s4 1934713408
        %v3142 = vunpack.c.0.s8 %v3141
        %v3143 = vlaneseq
        %v3144 = vshrl.u32 %v3143, 7
        %v3145 = vsub.s32 %v3142, %v3144
        %v3146 = vrot.slane %v3138, %v3145
        %v3148 = vunpack.c.l.s4 1934713408
        %v3149 = vunpack.c.0.s8 %v3148
        %v3150 = vlaneseq
        %v3151 = vshrl.u32 %v3150, 7
        %v3152 = vsub.s32 %v3149, %v3151
        %v3153 = vrot.slane %v3139, %v3152
        %v3154 = vcombine.low %v3130, %v3146
        %v3155 = vcombine.high %v3130, %v3146
        %v3156 = vcombine.low %v3137, %v3153
        %v3157 = vcombine.high %v3137, %v3153
        %v3158 = vcombine.low %v2110, %v2117
        %v3160 = vunpack.c.l.s4 1983009808
        %v3161 = vunpack.c.0.s8 %v3160
        %v3162 = vlaneseq
        %v3163 = vshrl.u32 %v3162, 7
        %v3164 = vsub.s32 %v3161, %v3163
        %v3165 = vrot.slane %v3158, %v3164
        %v3166 = vcombine.low %v2134, %v2135
        %v3168 = vunpack.c.l.s4 1983009808
        %v3169 = vunpack.c.0.s8 %v3168
        %v3170 = vlaneseq
        %v3171 = vshrl.u32 %v3170, 7
        %v3172 = vsub.s32 %v3169, %v3171
        %v3173 = vrot.slane %v3166, %v3172
        %v3174 = vcombine.low %v2126, %v2133
        %v3176 = vunpack.c.l.s4 1983009808
        %v3177 = vunpack.c.0.s8 %v3176
        %v3178 = vlaneseq
        %v3179 = vshrl.u32 %v3178, 7
        %v3180 = vsub.s32 %v3177, %v3179
        %v3181 = vrot.slane %v3174, %v3180
        %v3182 = vcombine.low %v2136, %v2137
        %v3184 = vunpack.c.l.s4 1983009808
        %v3185 = vunpack.c.0.s8 %v3184
        %v3186 = vlaneseq
        %v3187 = vshrl.u32 %v3186, 7
        %v3188 = vsub.s32 %v3185, %v3187
        %v3189 = vrot.slane %v3182, %v3188
        %v3190 = vcombine.low %v3165, %v3173
        %v3191 = vcombine.high %v3165, %v3173
        %v3193 = vunpack.c.l.s4 1934713408
        %v3194 = vunpack.c.0.s8 %v3193
        %v3195 = vlaneseq
        %v3196 = vshrl.u32 %v3195, 7
        %v3197 = vsub.s32 %v3194, %v3196
        %v3198 = vrot.slane %v3190, %v3197
        %v3200 = vunpack.c.l.s4 1934713408
        %v3201 = vunpack.c.0.s8 %v3200
        %v3202 = vlaneseq
        %v3203 = vshrl.u32 %v3202, 7
        %v3204 = vsub.s32 %v3201, %v3203
        %v3205 = vrot.slane %v3191, %v3204
        %v3206 = vcombine.low %v3181, %v3189
        %v3207 = vcombine.high %v3181, %v3189
        %v3209 = vunpack.c.l.s4 1934713408
        %v3210 = vunpack.c.0.s8 %v3209
        %v3211 = vlaneseq
        %v3212 = vshrl.u32 %v3211, 7
        %v3213 = vsub.s32 %v3210, %v3212
        %v3214 = vrot.slane %v3206, %v3213
        %v3216 = vunpack.c.l.s4 1934713408
        %v3217 = vunpack.c.0.s8 %v3216
        %v3218 = vlaneseq
        %v3219 = vshrl.u32 %v3218, 7
        %v3220 = vsub.s32 %v3217, %v3219
        %v3221 = vrot.slane %v3207, %v3220
        %v3222 = vcombine.low %v3198, %v3214
        %v3223 = vcombine.high %v3198, %v3214
        %v3224 = vcombine.low %v3205, %v3221
        %v3225 = vcombine.high %v3205, %v3221
        %v3226 = vcombine.low %v2178, %v2185
        %v3228 = vunpack.c.l.s4 1983009808
        %v3229 = vunpack.c.0.s8 %v3228
        %v3230 = vlaneseq
        %v3231 = vshrl.u32 %v3230, 7
        %v3232 = vsub.s32 %v3229, %v3231
        %v3233 = vrot.slane %v3226, %v3232
        %v3234 = vcombine.low %v2202, %v2203
        %v3236 = vunpack.c.l.s4 1983009808
        %v3237 = vunpack.c.0.s8 %v3236
        %v3238 = vlaneseq
        %v3239 = vshrl.u32 %v3238, 7
        %v3240 = vsub.s32 %v3237, %v3239
        %v3241 = vrot.slane %v3234, %v3240
        %v3242 = vcombine.low %v2194, %v2201
        %v3244 = vunpack.c.l.s4 1983009808
        %v3245 = vunpack.c.0.s8 %v3244
        %v3246 = vlaneseq
        %v3247 = vshrl.u32 %v3246, 7
        %v3248 = vsub.s32 %v3245, %v3247
        %v3249 = vrot.slane %v3242, %v3248
        %v3250 = vcombine.low %v2204, %v2205
        %v3252 = vunpack.c.l.s4 1983009808
        %v3253 = vunpack.c.0.s8 %v3252
        %v3254 = vlaneseq
        %v3255 = vshrl.u32 %v3254, 7
        %v3256 = vsub.s32 %v3253, %v3255
        %v3257 = vrot.slane %v3250, %v3256
        %v3258 = vcombine.low %v3233, %v3241
        %v3259 = vcombine.high %v3233, %v3241
        %v3261 = vunpack.c.l.s4 1934713408
        %v3262 = vunpack.c.0.s8 %v3261
        %v3263 = vlaneseq
        %v3264 = vshrl.u32 %v3263, 7
        %v3265 = vsub.s32 %v3262, %v3264
        %v3266 = vrot.slane %v3258, %v3265
        %v3268 = vunpack.c.l.s4 1934713408
        %v3269 = vunpack.c.0.s8 %v3268
        %v3270 = vlaneseq
        %v3271 = vshrl.u32 %v3270, 7
        %v3272 = vsub.s32 %v3269, %v3271
        %v3273 = vrot.slane %v3259, %v3272
        %v3274 = vcombine.low %v3249, %v3257
        %v3275 = vcombine.high %v3249, %v3257
        %v3277 = vunpack.c.l.s4 1934713408
        %v3278 = vunpack.c.0.s8 %v3277
        %v3279 = vlaneseq
        %v3280 = vshrl.u32 %v3279, 7
        %v3281 = vsub.s32 %v3278, %v3280
        %v3282 = vrot.slane %v3274, %v3281
        %v3284 = vunpack.c.l.s4 1934713408
        %v3285 = vunpack.c.0.s8 %v3284
        %v3286 = vlaneseq
        %v3287 = vshrl.u32 %v3286, 7
        %v3288 = vsub.s32 %v3285, %v3287
        %v3289 = vrot.slane %v3275, %v3288
        %v3290 = vcombine.low %v3266, %v3282
        %v3291 = vcombine.high %v3266, %v3282
        %v3292 = vcombine.low %v3273, %v3289
        %v3293 = vcombine.high %v3273, %v3289
        %v3294 = vcombine.low %v2246, %v2253
        %v3296 = vunpack.c.l.s4 1983009808
        %v3297 = vunpack.c.0.s8 %v3296
        %v3298 = vlaneseq
        %v3299 = vshrl.u32 %v3298, 7
        %v3300 = vsub.s32 %v3297, %v3299
        %v3301 = vrot.slane %v3294, %v3300
        %v3302 = vcombine.low %v2270, %v2271
        %v3304 = vunpack.c.l.s4 1983009808
        %v3305 = vunpack.c.0.s8 %v3304
        %v3306 = vlaneseq
        %v3307 = vshrl.u32 %v3306, 7
        %v3308 = vsub.s32 %v3305, %v3307
        %v3309 = vrot.slane %v3302, %v3308
        %v3310 = vcombine.low %v2262, %v2269
        %v3312 = vunpack.c.l.s4 1983009808
        %v3313 = vunpack.c.0.s8 %v3312
        %v3314 = vlaneseq
        %v3315 = vshrl.u32 %v3314, 7
        %v3316 = vsub.s32 %v3313, %v3315
        %v3317 = vrot.slane %v3310, %v3316
        %v3318 = vcombine.low %v2272, %v2273
        %v3320 = vunpack.c.l.s4 1983009808
        %v3321 = vunpack.c.0.s8 %v3320
        %v3322 = vlaneseq
        %v3323 = vshrl.u32 %v3322, 7
        %v3324 = vsub.s32 %v3321, %v3323
        %v3325 = vrot.slane %v3318, %v3324
        %v3326 = vcombine.low %v3301, %v3309
        %v3327 = vcombine.high %v3301, %v3309
        %v3329 = vunpack.c.l.s4 1934713408
        %v3330 = vunpack.c.0.s8 %v3329
        %v3331 = vlaneseq
        %v3332 = vshrl.u32 %v3331, 7
        %v3333 = vsub.s32 %v3330, %v3332
        %v3334 = vrot.slane %v3326, %v3333
        %v3336 = vunpack.c.l.s4 1934713408
        %v3337 = vunpack.c.0.s8 %v3336
        %v3338 = vlaneseq
        %v3339 = vshrl.u32 %v3338, 7
        %v3340 = vsub.s32 %v3337, %v3339
        %v3341 = vrot.slane %v3327, %v3340
        %v3342 = vcombine.low %v3317, %v3325
        %v3343 = vcombine.high %v3317, %v3325
        %v3345 = vunpack.c.l.s4 1934713408
        %v3346 = vunpack.c.0.s8 %v3345
        %v3347 = vlaneseq
        %v3348 = vshrl.u32 %v3347, 7
        %v3349 = vsub.s32 %v3346, %v3348
        %v3350 = vrot.slane %v3342, %v3349
        %v3352 = vunpack.c.l.s4 1934713408
        %v3353 = vunpack.c.0.s8 %v3352
        %v3354 = vlaneseq
        %v3355 = vshrl.u32 %v3354, 7
        %v3356 = vsub.s32 %v3353, %v3355
        %v3357 = vrot.slane %v3343, %v3356
        %v3358 = vcombine.low %v3334, %v3350
        %v3359 = vcombine.high %v3334, %v3350
        %v3360 = vcombine.low %v3341, %v3357
        %v3361 = vcombine.high %v3341, %v3357
        %v3362 = vpack.c.bf16 %v2406, %v2338
        %v3363 = vpack.c.bf16 %v2542, %v2474
        %v3364 = vpack.c.bf16 %v2678, %v2610
        %v3365 = vpack.c.bf16 %v2814, %v2746
        %v3366 = vpack.c.bf16 %v2950, %v2882
        %v3367 = vpack.c.bf16 %v3086, %v3018
        %v3368 = vpack.c.bf16 %v3222, %v3154
        %v3369 = vpack.c.bf16 %v3358, %v3290
        %v3370 = vpack.c.bf16 %v2407, %v2339
        %v3371 = vpack.c.bf16 %v2543, %v2475
        %v3372 = vpack.c.bf16 %v2679, %v2611
        %v3373 = vpack.c.bf16 %v2815, %v2747
        %v3374 = vpack.c.bf16 %v2951, %v2883
        %v3375 = vpack.c.bf16 %v3087, %v3019
        %v3376 = vpack.c.bf16 %v3223, %v3155
        %v3377 = vpack.c.bf16 %v3359, %v3291
        %v3378 = vpack.c.bf16 %v2408, %v2340
        %v3379 = vpack.c.bf16 %v2544, %v2476
        %v3380 = vpack.c.bf16 %v2680, %v2612
        %v3381 = vpack.c.bf16 %v2816, %v2748
        %v3382 = vpack.c.bf16 %v2952, %v2884
        %v3383 = vpack.c.bf16 %v3088, %v3020
        %v3384 = vpack.c.bf16 %v3224, %v3156
        %v3385 = vpack.c.bf16 %v3360, %v3292
        %v3386 = vpack.c.bf16 %v2409, %v2341
        %v3387 = vpack.c.bf16 %v2545, %v2477
        %v3388 = vpack.c.bf16 %v2681, %v2613
        %v3389 = vpack.c.bf16 %v2817, %v2749
        %v3390 = vpack.c.bf16 %v2953, %v2885
        %v3391 = vpack.c.bf16 %v3089, %v3021
        %v3392 = vpack.c.bf16 %v3225, %v3157
        %v3393 = vpack.c.bf16 %v3361, %v3293
        %3394 = vrot.lane.b32.xlu0 %v964, 96
        %v3395 = vpop.permute.xlu0 %3394
        %3396 = vrot.lane.b32.xlu0 %v967, 96
        %v3397 = vpop.permute.xlu0 %3396
        %3398 = vrot.lane.b32.xlu0 %v972, 96
        %v3399 = vpop.permute.xlu0 %3398
        %3400 = vrot.lane.b32.xlu0 %v975, 96
        %v3401 = vpop.permute.xlu0 %3400
        %3402 = vrot.lane.b32.xlu0 %v980, 96
        %v3403 = vpop.permute.xlu0 %3402
        %3404 = vrot.lane.b32.xlu0 %v983, 96
        %v3405 = vpop.permute.xlu0 %3404
        %3406 = vrot.lane.b32.xlu0 %v988, 96
        %v3407 = vpop.permute.xlu0 %3406
        %3408 = vrot.lane.b32.xlu0 %v991, 96
        %v3409 = vpop.permute.xlu0 %3408
        %3410 = vrot.lane.b32.xlu0 %v996, 96
        %v3411 = vpop.permute.xlu0 %3410
        %3412 = vrot.lane.b32.xlu0 %v999, 96
        %v3413 = vpop.permute.xlu0 %3412
        %3414 = vrot.lane.b32.xlu0 %v1004, 96
        %v3415 = vpop.permute.xlu0 %3414
        %3416 = vrot.lane.b32.xlu0 %v1007, 96
        %v3417 = vpop.permute.xlu0 %3416
        %3418 = vrot.lane.b32.xlu0 %v1012, 96
        %v3419 = vpop.permute.xlu0 %3418
        %3420 = vrot.lane.b32.xlu0 %v1015, 96
        %v3421 = vpop.permute.xlu0 %3420
        %3422 = vrot.lane.b32.xlu0 %v1020, 96
        %v3423 = vpop.permute.xlu0 %3422
        %3424 = vrot.lane.b32.xlu0 %v1023, 96
        %v3425 = vpop.permute.xlu0 %3424
        %3426 = vrot.lane.b32.xlu0 %v1043, 96
        %v3427 = vpop.permute.xlu0 %3426
        %3428 = vrot.lane.b32.xlu0 %v1045, 96
        %v3429 = vpop.permute.xlu0 %3428
        %3430 = vrot.lane.b32.xlu0 %v1047, 96
        %v3431 = vpop.permute.xlu0 %3430
        %3432 = vrot.lane.b32.xlu0 %v1049, 96
        %v3433 = vpop.permute.xlu0 %3432
        %3434 = vrot.lane.b32.xlu0 %v1051, 96
        %v3435 = vpop.permute.xlu0 %3434
        %3436 = vrot.lane.b32.xlu0 %v1053, 96
        %v3437 = vpop.permute.xlu0 %3436
        %3438 = vrot.lane.b32.xlu0 %v1055, 96
        %v3439 = vpop.permute.xlu0 %3438
        %3440 = vrot.lane.b32.xlu0 %v1057, 96
        %v3441 = vpop.permute.xlu0 %3440
        %3442 = vrot.lane.b32.xlu0 %v1059, 96
        %v3443 = vpop.permute.xlu0 %3442
        %3444 = vrot.lane.b32.xlu0 %v1061, 96
        %v3445 = vpop.permute.xlu0 %3444
        %3446 = vrot.lane.b32.xlu0 %v1063, 96
        %v3447 = vpop.permute.xlu0 %3446
        %3448 = vrot.lane.b32.xlu0 %v1065, 96
        %v3449 = vpop.permute.xlu0 %3448
        %3450 = vrot.lane.b32.xlu0 %v1067, 96
        %v3451 = vpop.permute.xlu0 %3450
        %3452 = vrot.lane.b32.xlu0 %v1069, 96
        %v3453 = vpop.permute.xlu0 %3452
        %3454 = vrot.lane.b32.xlu0 %v1071, 96
        %v3455 = vpop.permute.xlu0 %3454
        %3456 = vrot.lane.b32.xlu0 %v1073, 96
        %v3457 = vpop.permute.xlu0 %3456
        %3458 = vrot.lane.b32.xlu0 %v1091, 96
        %v3459 = vpop.permute.xlu0 %3458
        %3460 = vrot.lane.b32.xlu0 %v1093, 96
        %v3461 = vpop.permute.xlu0 %3460
        %3462 = vrot.lane.b32.xlu0 %v1095, 96
        %v3463 = vpop.permute.xlu0 %3462
        %3464 = vrot.lane.b32.xlu0 %v1097, 96
        %v3465 = vpop.permute.xlu0 %3464
        %3466 = vrot.lane.b32.xlu0 %v1099, 96
        %v3467 = vpop.permute.xlu0 %3466
        %3468 = vrot.lane.b32.xlu0 %v1101, 96
        %v3469 = vpop.permute.xlu0 %3468
        %3470 = vrot.lane.b32.xlu0 %v1103, 96
        %v3471 = vpop.permute.xlu0 %3470
        %3472 = vrot.lane.b32.xlu0 %v1105, 96
        %v3473 = vpop.permute.xlu0 %3472
        %3474 = vrot.lane.b32.xlu0 %v1107, 96
        %v3475 = vpop.permute.xlu0 %3474
        %3476 = vrot.lane.b32.xlu0 %v1109, 96
        %v3477 = vpop.permute.xlu0 %3476
        %3478 = vrot.lane.b32.xlu0 %v1111, 96
        %v3479 = vpop.permute.xlu0 %3478
        %3480 = vrot.lane.b32.xlu0 %v1113, 96
        %v3481 = vpop.permute.xlu0 %3480
        %3482 = vrot.lane.b32.xlu0 %v1115, 96
        %v3483 = vpop.permute.xlu0 %3482
        %3484 = vrot.lane.b32.xlu0 %v1117, 96
        %v3485 = vpop.permute.xlu0 %3484
        %3486 = vrot.lane.b32.xlu0 %v1119, 96
        %v3487 = vpop.permute.xlu0 %3486
        %3488 = vrot.lane.b32.xlu0 %v1121, 96
        %v3489 = vpop.permute.xlu0 %3488
        %3490 = vrot.lane.b32.xlu0 %v1139, 96
        %v3491 = vpop.permute.xlu0 %3490
        %3492 = vrot.lane.b32.xlu0 %v1141, 96
        %v3493 = vpop.permute.xlu0 %3492
        %3494 = vrot.lane.b32.xlu0 %v1143, 96
        %v3495 = vpop.permute.xlu0 %3494
        %3496 = vrot.lane.b32.xlu0 %v1145, 96
        %v3497 = vpop.permute.xlu0 %3496
        %3498 = vrot.lane.b32.xlu0 %v1147, 96
        %v3499 = vpop.permute.xlu0 %3498
        %3500 = vrot.lane.b32.xlu0 %v1149, 96
        %v3501 = vpop.permute.xlu0 %3500
        %3502 = vrot.lane.b32.xlu0 %v1151, 96
        %v3503 = vpop.permute.xlu0 %3502
        %3504 = vrot.lane.b32.xlu0 %v1153, 96
        %v3505 = vpop.permute.xlu0 %3504
        %3506 = vrot.lane.b32.xlu0 %v1155, 96
        %v3507 = vpop.permute.xlu0 %3506
        %3508 = vrot.lane.b32.xlu0 %v1157, 96
        %v3509 = vpop.permute.xlu0 %3508
        %3510 = vrot.lane.b32.xlu0 %v1159, 96
        %v3511 = vpop.permute.xlu0 %3510
        %3512 = vrot.lane.b32.xlu0 %v1161, 96
        %v3513 = vpop.permute.xlu0 %3512
        %3514 = vrot.lane.b32.xlu0 %v1163, 96
        %v3515 = vpop.permute.xlu0 %3514
        %3516 = vrot.lane.b32.xlu0 %v1165, 96
        %v3517 = vpop.permute.xlu0 %3516
        %3518 = vrot.lane.b32.xlu0 %v1167, 96
        %v3519 = vpop.permute.xlu0 %3518
        %3520 = vrot.lane.b32.xlu0 %v1169, 96
        %v3521 = vpop.permute.xlu0 %3520
        %v3586 = vcombine.low %v3395, %v3459
        %v3587 = vcombine.high %v3395, %v3459
        %v3589 = vunpack.c.l.s4 1983009808
        %v3590 = vunpack.c.0.s8 %v3589
        %v3591 = vlaneseq
        %v3592 = vshrl.u32 %v3591, 7
        %v3593 = vsub.s32 %v3590, %v3592
        %v3594 = vrot.slane %v3586, %v3593
        %v3596 = vunpack.c.l.s4 1983009808
        %v3597 = vunpack.c.0.s8 %v3596
        %v3598 = vlaneseq
        %v3599 = vshrl.u32 %v3598, 7
        %v3600 = vsub.s32 %v3597, %v3599
        %v3601 = vrot.slane %v3587, %v3600
        %v3602 = vcombine.low %v3427, %v3491
        %v3603 = vcombine.high %v3427, %v3491
        %v3605 = vunpack.c.l.s4 1983009808
        %v3606 = vunpack.c.0.s8 %v3605
        %v3607 = vlaneseq
        %v3608 = vshrl.u32 %v3607, 7
        %v3609 = vsub.s32 %v3606, %v3608
        %v3610 = vrot.slane %v3602, %v3609
        %v3612 = vunpack.c.l.s4 1983009808
        %v3613 = vunpack.c.0.s8 %v3612
        %v3614 = vlaneseq
        %v3615 = vshrl.u32 %v3614, 7
        %v3616 = vsub.s32 %v3613, %v3615
        %v3617 = vrot.slane %v3603, %v3616
        %v3618 = vcombine.low %v3594, %v3610
        %v3619 = vcombine.high %v3594, %v3610
        %v3621 = vunpack.c.l.s4 1934713408
        %v3622 = vunpack.c.0.s8 %v3621
        %v3623 = vlaneseq
        %v3624 = vshrl.u32 %v3623, 7
        %v3625 = vsub.s32 %v3622, %v3624
        %v3626 = vrot.slane %v3618, %v3625
        %v3628 = vunpack.c.l.s4 1934713408
        %v3629 = vunpack.c.0.s8 %v3628
        %v3630 = vlaneseq
        %v3631 = vshrl.u32 %v3630, 7
        %v3632 = vsub.s32 %v3629, %v3631
        %v3633 = vrot.slane %v3619, %v3632
        %v3634 = vcombine.low %v3601, %v3617
        %v3635 = vcombine.high %v3601, %v3617
        %v3637 = vunpack.c.l.s4 1934713408
        %v3638 = vunpack.c.0.s8 %v3637
        %v3639 = vlaneseq
        %v3640 = vshrl.u32 %v3639, 7
        %v3641 = vsub.s32 %v3638, %v3640
        %v3642 = vrot.slane %v3634, %v3641
        %v3644 = vunpack.c.l.s4 1934713408
        %v3645 = vunpack.c.0.s8 %v3644
        %v3646 = vlaneseq
        %v3647 = vshrl.u32 %v3646, 7
        %v3648 = vsub.s32 %v3645, %v3647
        %v3649 = vrot.slane %v3635, %v3648
        %v3650 = vcombine.high %v3626, 0.0
        %v3651 = vcombine.high %v3633, 0.0
        %v3652 = vcombine.high %v3642, 0.0
        %v3653 = vcombine.high %v3649, 0.0
        %v3654 = vcombine.low %v3397, %v3461
        %v3655 = vcombine.high %v3397, %v3461
        %v3657 = vunpack.c.l.s4 1983009808
        %v3658 = vunpack.c.0.s8 %v3657
        %v3659 = vlaneseq
        %v3660 = vshrl.u32 %v3659, 7
        %v3661 = vsub.s32 %v3658, %v3660
        %v3662 = vrot.slane %v3654, %v3661
        %v3664 = vunpack.c.l.s4 1983009808
        %v3665 = vunpack.c.0.s8 %v3664
        %v3666 = vlaneseq
        %v3667 = vshrl.u32 %v3666, 7
        %v3668 = vsub.s32 %v3665, %v3667
        %v3669 = vrot.slane %v3655, %v3668
        %v3670 = vcombine.low %v3429, %v3493
        %v3671 = vcombine.high %v3429, %v3493
        %v3673 = vunpack.c.l.s4 1983009808
        %v3674 = vunpack.c.0.s8 %v3673
        %v3675 = vlaneseq
        %v3676 = vshrl.u32 %v3675, 7
        %v3677 = vsub.s32 %v3674, %v3676
        %v3678 = vrot.slane %v3670, %v3677
        %v3680 = vunpack.c.l.s4 1983009808
        %v3681 = vunpack.c.0.s8 %v3680
        %v3682 = vlaneseq
        %v3683 = vshrl.u32 %v3682, 7
        %v3684 = vsub.s32 %v3681, %v3683
        %v3685 = vrot.slane %v3671, %v3684
        %v3686 = vcombine.low %v3662, %v3678
        %v3687 = vcombine.high %v3662, %v3678
        %v3689 = vunpack.c.l.s4 1934713408
        %v3690 = vunpack.c.0.s8 %v3689
        %v3691 = vlaneseq
        %v3692 = vshrl.u32 %v3691, 7
        %v3693 = vsub.s32 %v3690, %v3692
        %v3694 = vrot.slane %v3686, %v3693
        %v3696 = vunpack.c.l.s4 1934713408
        %v3697 = vunpack.c.0.s8 %v3696
        %v3698 = vlaneseq
        %v3699 = vshrl.u32 %v3698, 7
        %v3700 = vsub.s32 %v3697, %v3699
        %v3701 = vrot.slane %v3687, %v3700
        %v3702 = vcombine.low %v3669, %v3685
        %v3703 = vcombine.high %v3669, %v3685
        %v3705 = vunpack.c.l.s4 1934713408
        %v3706 = vunpack.c.0.s8 %v3705
        %v3707 = vlaneseq
        %v3708 = vshrl.u32 %v3707, 7
        %v3709 = vsub.s32 %v3706, %v3708
        %v3710 = vrot.slane %v3702, %v3709
        %v3712 = vunpack.c.l.s4 1934713408
        %v3713 = vunpack.c.0.s8 %v3712
        %v3714 = vlaneseq
        %v3715 = vshrl.u32 %v3714, 7
        %v3716 = vsub.s32 %v3713, %v3715
        %v3717 = vrot.slane %v3703, %v3716
        %v3718 = vcombine.high %v3694, 0.0
        %v3719 = vcombine.high %v3701, 0.0
        %v3720 = vcombine.high %v3710, 0.0
        %v3721 = vcombine.high %v3717, 0.0
        %v3722 = vcombine.low %v3399, %v3463
        %v3723 = vcombine.high %v3399, %v3463
        %v3725 = vunpack.c.l.s4 1983009808
        %v3726 = vunpack.c.0.s8 %v3725
        %v3727 = vlaneseq
        %v3728 = vshrl.u32 %v3727, 7
        %v3729 = vsub.s32 %v3726, %v3728
        %v3730 = vrot.slane %v3722, %v3729
        %v3732 = vunpack.c.l.s4 1983009808
        %v3733 = vunpack.c.0.s8 %v3732
        %v3734 = vlaneseq
        %v3735 = vshrl.u32 %v3734, 7
        %v3736 = vsub.s32 %v3733, %v3735
        %v3737 = vrot.slane %v3723, %v3736
        %v3738 = vcombine.low %v3431, %v3495
        %v3739 = vcombine.high %v3431, %v3495
        %v3741 = vunpack.c.l.s4 1983009808
        %v3742 = vunpack.c.0.s8 %v3741
        %v3743 = vlaneseq
        %v3744 = vshrl.u32 %v3743, 7
        %v3745 = vsub.s32 %v3742, %v3744
        %v3746 = vrot.slane %v3738, %v3745
        %v3748 = vunpack.c.l.s4 1983009808
        %v3749 = vunpack.c.0.s8 %v3748
        %v3750 = vlaneseq
        %v3751 = vshrl.u32 %v3750, 7
        %v3752 = vsub.s32 %v3749, %v3751
        %v3753 = vrot.slane %v3739, %v3752
        %v3754 = vcombine.low %v3730, %v3746
        %v3755 = vcombine.high %v3730, %v3746
        %v3757 = vunpack.c.l.s4 1934713408
        %v3758 = vunpack.c.0.s8 %v3757
        %v3759 = vlaneseq
        %v3760 = vshrl.u32 %v3759, 7
        %v3761 = vsub.s32 %v3758, %v3760
        %v3762 = vrot.slane %v3754, %v3761
        %v3764 = vunpack.c.l.s4 1934713408
        %v3765 = vunpack.c.0.s8 %v3764
        %v3766 = vlaneseq
        %v3767 = vshrl.u32 %v3766, 7
        %v3768 = vsub.s32 %v3765, %v3767
        %v3769 = vrot.slane %v3755, %v3768
        %v3770 = vcombine.low %v3737, %v3753
        %v3771 = vcombine.high %v3737, %v3753
        %v3773 = vunpack.c.l.s4 1934713408
        %v3774 = vunpack.c.0.s8 %v3773
        %v3775 = vlaneseq
        %v3776 = vshrl.u32 %v3775, 7
        %v3777 = vsub.s32 %v3774, %v3776
        %v3778 = vrot.slane %v3770, %v3777
        %v3780 = vunpack.c.l.s4 1934713408
        %v3781 = vunpack.c.0.s8 %v3780
        %v3782 = vlaneseq
        %v3783 = vshrl.u32 %v3782, 7
        %v3784 = vsub.s32 %v3781, %v3783
        %v3785 = vrot.slane %v3771, %v3784
        %v3786 = vcombine.high %v3762, 0.0
        %v3787 = vcombine.high %v3769, 0.0
        %v3788 = vcombine.high %v3778, 0.0
        %v3789 = vcombine.high %v3785, 0.0
        %v3790 = vcombine.low %v3401, %v3465
        %v3791 = vcombine.high %v3401, %v3465
        %v3793 = vunpack.c.l.s4 1983009808
        %v3794 = vunpack.c.0.s8 %v3793
        %v3795 = vlaneseq
        %v3796 = vshrl.u32 %v3795, 7
        %v3797 = vsub.s32 %v3794, %v3796
        %v3798 = vrot.slane %v3790, %v3797
        %v3800 = vunpack.c.l.s4 1983009808
        %v3801 = vunpack.c.0.s8 %v3800
        %v3802 = vlaneseq
        %v3803 = vshrl.u32 %v3802, 7
        %v3804 = vsub.s32 %v3801, %v3803
        %v3805 = vrot.slane %v3791, %v3804
        %v3806 = vcombine.low %v3433, %v3497
        %v3807 = vcombine.high %v3433, %v3497
        %v3809 = vunpack.c.l.s4 1983009808
        %v3810 = vunpack.c.0.s8 %v3809
        %v3811 = vlaneseq
        %v3812 = vshrl.u32 %v3811, 7
        %v3813 = vsub.s32 %v3810, %v3812
        %v3814 = vrot.slane %v3806, %v3813
        %v3816 = vunpack.c.l.s4 1983009808
        %v3817 = vunpack.c.0.s8 %v3816
        %v3818 = vlaneseq
        %v3819 = vshrl.u32 %v3818, 7
        %v3820 = vsub.s32 %v3817, %v3819
        %v3821 = vrot.slane %v3807, %v3820
        %v3822 = vcombine.low %v3798, %v3814
        %v3823 = vcombine.high %v3798, %v3814
        %v3825 = vunpack.c.l.s4 1934713408
        %v3826 = vunpack.c.0.s8 %v3825
        %v3827 = vlaneseq
        %v3828 = vshrl.u32 %v3827, 7
        %v3829 = vsub.s32 %v3826, %v3828
        %v3830 = vrot.slane %v3822, %v3829
        %v3832 = vunpack.c.l.s4 1934713408
        %v3833 = vunpack.c.0.s8 %v3832
        %v3834 = vlaneseq
        %v3835 = vshrl.u32 %v3834, 7
        %v3836 = vsub.s32 %v3833, %v3835
        %v3837 = vrot.slane %v3823, %v3836
        %v3838 = vcombine.low %v3805, %v3821
        %v3839 = vcombine.high %v3805, %v3821
        %v3841 = vunpack.c.l.s4 1934713408
        %v3842 = vunpack.c.0.s8 %v3841
        %v3843 = vlaneseq
        %v3844 = vshrl.u32 %v3843, 7
        %v3845 = vsub.s32 %v3842, %v3844
        %v3846 = vrot.slane %v3838, %v3845
        %v3848 = vunpack.c.l.s4 1934713408
        %v3849 = vunpack.c.0.s8 %v3848
        %v3850 = vlaneseq
        %v3851 = vshrl.u32 %v3850, 7
        %v3852 = vsub.s32 %v3849, %v3851
        %v3853 = vrot.slane %v3839, %v3852
        %v3854 = vcombine.high %v3830, 0.0
        %v3855 = vcombine.high %v3837, 0.0
        %v3856 = vcombine.high %v3846, 0.0
        %v3857 = vcombine.high %v3853, 0.0
        %v3858 = vcombine.low %v3403, %v3467
        %v3859 = vcombine.high %v3403, %v3467
        %v3861 = vunpack.c.l.s4 1983009808
        %v3862 = vunpack.c.0.s8 %v3861
        %v3863 = vlaneseq
        %v3864 = vshrl.u32 %v3863, 7
        %v3865 = vsub.s32 %v3862, %v3864
        %v3866 = vrot.slane %v3858, %v3865
        %v3868 = vunpack.c.l.s4 1983009808
        %v3869 = vunpack.c.0.s8 %v3868
        %v3870 = vlaneseq
        %v3871 = vshrl.u32 %v3870, 7
        %v3872 = vsub.s32 %v3869, %v3871
        %v3873 = vrot.slane %v3859, %v3872
        %v3874 = vcombine.low %v3435, %v3499
        %v3875 = vcombine.high %v3435, %v3499
        %v3877 = vunpack.c.l.s4 1983009808
        %v3878 = vunpack.c.0.s8 %v3877
        %v3879 = vlaneseq
        %v3880 = vshrl.u32 %v3879, 7
        %v3881 = vsub.s32 %v3878, %v3880
        %v3882 = vrot.slane %v3874, %v3881
        %v3884 = vunpack.c.l.s4 1983009808
        %v3885 = vunpack.c.0.s8 %v3884
        %v3886 = vlaneseq
        %v3887 = vshrl.u32 %v3886, 7
        %v3888 = vsub.s32 %v3885, %v3887
        %v3889 = vrot.slane %v3875, %v3888
        %v3890 = vcombine.low %v3866, %v3882
        %v3891 = vcombine.high %v3866, %v3882
        %v3893 = vunpack.c.l.s4 1934713408
        %v3894 = vunpack.c.0.s8 %v3893
        %v3895 = vlaneseq
        %v3896 = vshrl.u32 %v3895, 7
        %v3897 = vsub.s32 %v3894, %v3896
        %v3898 = vrot.slane %v3890, %v3897
        %v3900 = vunpack.c.l.s4 1934713408
        %v3901 = vunpack.c.0.s8 %v3900
        %v3902 = vlaneseq
        %v3903 = vshrl.u32 %v3902, 7
        %v3904 = vsub.s32 %v3901, %v3903
        %v3905 = vrot.slane %v3891, %v3904
        %v3906 = vcombine.low %v3873, %v3889
        %v3907 = vcombine.high %v3873, %v3889
        %v3909 = vunpack.c.l.s4 1934713408
        %v3910 = vunpack.c.0.s8 %v3909
        %v3911 = vlaneseq
        %v3912 = vshrl.u32 %v3911, 7
        %v3913 = vsub.s32 %v3910, %v3912
        %v3914 = vrot.slane %v3906, %v3913
        %v3916 = vunpack.c.l.s4 1934713408
        %v3917 = vunpack.c.0.s8 %v3916
        %v3918 = vlaneseq
        %v3919 = vshrl.u32 %v3918, 7
        %v3920 = vsub.s32 %v3917, %v3919
        %v3921 = vrot.slane %v3907, %v3920
        %v3922 = vcombine.high %v3898, 0.0
        %v3923 = vcombine.high %v3905, 0.0
        %v3924 = vcombine.high %v3914, 0.0
        %v3925 = vcombine.high %v3921, 0.0
        %v3926 = vcombine.low %v3405, %v3469
        %v3927 = vcombine.high %v3405, %v3469
        %v3929 = vunpack.c.l.s4 1983009808
        %v3930 = vunpack.c.0.s8 %v3929
        %v3931 = vlaneseq
        %v3932 = vshrl.u32 %v3931, 7
        %v3933 = vsub.s32 %v3930, %v3932
        %v3934 = vrot.slane %v3926, %v3933
        %v3936 = vunpack.c.l.s4 1983009808
        %v3937 = vunpack.c.0.s8 %v3936
        %v3938 = vlaneseq
        %v3939 = vshrl.u32 %v3938, 7
        %v3940 = vsub.s32 %v3937, %v3939
        %v3941 = vrot.slane %v3927, %v3940
        %v3942 = vcombine.low %v3437, %v3501
        %v3943 = vcombine.high %v3437, %v3501
        %v3945 = vunpack.c.l.s4 1983009808
        %v3946 = vunpack.c.0.s8 %v3945
        %v3947 = vlaneseq
        %v3948 = vshrl.u32 %v3947, 7
        %v3949 = vsub.s32 %v3946, %v3948
        %v3950 = vrot.slane %v3942, %v3949
        %v3952 = vunpack.c.l.s4 1983009808
        %v3953 = vunpack.c.0.s8 %v3952
        %v3954 = vlaneseq
        %v3955 = vshrl.u32 %v3954, 7
        %v3956 = vsub.s32 %v3953, %v3955
        %v3957 = vrot.slane %v3943, %v3956
        %v3958 = vcombine.low %v3934, %v3950
        %v3959 = vcombine.high %v3934, %v3950
        %v3961 = vunpack.c.l.s4 1934713408
        %v3962 = vunpack.c.0.s8 %v3961
        %v3963 = vlaneseq
        %v3964 = vshrl.u32 %v3963, 7
        %v3965 = vsub.s32 %v3962, %v3964
        %v3966 = vrot.slane %v3958, %v3965
        %v3968 = vunpack.c.l.s4 1934713408
        %v3969 = vunpack.c.0.s8 %v3968
        %v3970 = vlaneseq
        %v3971 = vshrl.u32 %v3970, 7
        %v3972 = vsub.s32 %v3969, %v3971
        %v3973 = vrot.slane %v3959, %v3972
        %v3974 = vcombine.low %v3941, %v3957
        %v3975 = vcombine.high %v3941, %v3957
        %v3977 = vunpack.c.l.s4 1934713408
        %v3978 = vunpack.c.0.s8 %v3977
        %v3979 = vlaneseq
        %v3980 = vshrl.u32 %v3979, 7
        %v3981 = vsub.s32 %v3978, %v3980
        %v3982 = vrot.slane %v3974, %v3981
        %v3984 = vunpack.c.l.s4 1934713408
        %v3985 = vunpack.c.0.s8 %v3984
        %v3986 = vlaneseq
        %v3987 = vshrl.u32 %v3986, 7
        %v3988 = vsub.s32 %v3985, %v3987
        %v3989 = vrot.slane %v3975, %v3988
        %v3990 = vcombine.high %v3966, 0.0
        %v3991 = vcombine.high %v3973, 0.0
        %v3992 = vcombine.high %v3982, 0.0
        %v3993 = vcombine.high %v3989, 0.0
        %v3994 = vcombine.low %v3407, %v3471
        %v3995 = vcombine.high %v3407, %v3471
        %v3997 = vunpack.c.l.s4 1983009808
        %v3998 = vunpack.c.0.s8 %v3997
        %v3999 = vlaneseq
        %v4000 = vshrl.u32 %v3999, 7
        %v4001 = vsub.s32 %v3998, %v4000
        %v4002 = vrot.slane %v3994, %v4001
        %v4004 = vunpack.c.l.s4 1983009808
        %v4005 = vunpack.c.0.s8 %v4004
        %v4006 = vlaneseq
        %v4007 = vshrl.u32 %v4006, 7
        %v4008 = vsub.s32 %v4005, %v4007
        %v4009 = vrot.slane %v3995, %v4008
        %v4010 = vcombine.low %v3439, %v3503
        %v4011 = vcombine.high %v3439, %v3503
        %v4013 = vunpack.c.l.s4 1983009808
        %v4014 = vunpack.c.0.s8 %v4013
        %v4015 = vlaneseq
        %v4016 = vshrl.u32 %v4015, 7
        %v4017 = vsub.s32 %v4014, %v4016
        %v4018 = vrot.slane %v4010, %v4017
        %v4020 = vunpack.c.l.s4 1983009808
        %v4021 = vunpack.c.0.s8 %v4020
        %v4022 = vlaneseq
        %v4023 = vshrl.u32 %v4022, 7
        %v4024 = vsub.s32 %v4021, %v4023
        %v4025 = vrot.slane %v4011, %v4024
        %v4026 = vcombine.low %v4002, %v4018
        %v4027 = vcombine.high %v4002, %v4018
        %v4029 = vunpack.c.l.s4 1934713408
        %v4030 = vunpack.c.0.s8 %v4029
        %v4031 = vlaneseq
        %v4032 = vshrl.u32 %v4031, 7
        %v4033 = vsub.s32 %v4030, %v4032
        %v4034 = vrot.slane %v4026, %v4033
        %v4036 = vunpack.c.l.s4 1934713408
        %v4037 = vunpack.c.0.s8 %v4036
        %v4038 = vlaneseq
        %v4039 = vshrl.u32 %v4038, 7
        %v4040 = vsub.s32 %v4037, %v4039
        %v4041 = vrot.slane %v4027, %v4040
        %v4042 = vcombine.low %v4009, %v4025
        %v4043 = vcombine.high %v4009, %v4025
        %v4045 = vunpack.c.l.s4 1934713408
        %v4046 = vunpack.c.0.s8 %v4045
        %v4047 = vlaneseq
        %v4048 = vshrl.u32 %v4047, 7
        %v4049 = vsub.s32 %v4046, %v4048
        %v4050 = vrot.slane %v4042, %v4049
        %v4052 = vunpack.c.l.s4 1934713408
        %v4053 = vunpack.c.0.s8 %v4052
        %v4054 = vlaneseq
        %v4055 = vshrl.u32 %v4054, 7
        %v4056 = vsub.s32 %v4053, %v4055
        %v4057 = vrot.slane %v4043, %v4056
        %v4058 = vcombine.high %v4034, 0.0
        %v4059 = vcombine.high %v4041, 0.0
        %v4060 = vcombine.high %v4050, 0.0
        %v4061 = vcombine.high %v4057, 0.0
        %v4062 = vcombine.low %v3409, %v3473
        %v4063 = vcombine.high %v3409, %v3473
        %v4065 = vunpack.c.l.s4 1983009808
        %v4066 = vunpack.c.0.s8 %v4065
        %v4067 = vlaneseq
        %v4068 = vshrl.u32 %v4067, 7
        %v4069 = vsub.s32 %v4066, %v4068
        %v4070 = vrot.slane %v4062, %v4069
        %v4072 = vunpack.c.l.s4 1983009808
        %v4073 = vunpack.c.0.s8 %v4072
        %v4074 = vlaneseq
        %v4075 = vshrl.u32 %v4074, 7
        %v4076 = vsub.s32 %v4073, %v4075
        %v4077 = vrot.slane %v4063, %v4076
        %v4078 = vcombine.low %v3441, %v3505
        %v4079 = vcombine.high %v3441, %v3505
        %v4081 = vunpack.c.l.s4 1983009808
        %v4082 = vunpack.c.0.s8 %v4081
        %v4083 = vlaneseq
        %v4084 = vshrl.u32 %v4083, 7
        %v4085 = vsub.s32 %v4082, %v4084
        %v4086 = vrot.slane %v4078, %v4085
        %v4088 = vunpack.c.l.s4 1983009808
        %v4089 = vunpack.c.0.s8 %v4088
        %v4090 = vlaneseq
        %v4091 = vshrl.u32 %v4090, 7
        %v4092 = vsub.s32 %v4089, %v4091
        %v4093 = vrot.slane %v4079, %v4092
        %v4094 = vcombine.low %v4070, %v4086
        %v4095 = vcombine.high %v4070, %v4086
        %v4097 = vunpack.c.l.s4 1934713408
        %v4098 = vunpack.c.0.s8 %v4097
        %v4099 = vlaneseq
        %v4100 = vshrl.u32 %v4099, 7
        %v4101 = vsub.s32 %v4098, %v4100
        %v4102 = vrot.slane %v4094, %v4101
        %v4104 = vunpack.c.l.s4 1934713408
        %v4105 = vunpack.c.0.s8 %v4104
        %v4106 = vlaneseq
        %v4107 = vshrl.u32 %v4106, 7
        %v4108 = vsub.s32 %v4105, %v4107
        %v4109 = vrot.slane %v4095, %v4108
        %v4110 = vcombine.low %v4077, %v4093
        %v4111 = vcombine.high %v4077, %v4093
        %v4113 = vunpack.c.l.s4 1934713408
        %v4114 = vunpack.c.0.s8 %v4113
        %v4115 = vlaneseq
        %v4116 = vshrl.u32 %v4115, 7
        %v4117 = vsub.s32 %v4114, %v4116
        %v4118 = vrot.slane %v4110, %v4117
        %v4120 = vunpack.c.l.s4 1934713408
        %v4121 = vunpack.c.0.s8 %v4120
        %v4122 = vlaneseq
        %v4123 = vshrl.u32 %v4122, 7
        %v4124 = vsub.s32 %v4121, %v4123
        %v4125 = vrot.slane %v4111, %v4124
        %v4126 = vcombine.high %v4102, 0.0
        %v4127 = vcombine.high %v4109, 0.0
        %v4128 = vcombine.high %v4118, 0.0
        %v4129 = vcombine.high %v4125, 0.0
        %v4130 = vcombine.low %v3411, %v3475
        %v4131 = vcombine.high %v3411, %v3475
        %v4133 = vunpack.c.l.s4 1983009808
        %v4134 = vunpack.c.0.s8 %v4133
        %v4135 = vlaneseq
        %v4136 = vshrl.u32 %v4135, 7
        %v4137 = vsub.s32 %v4134, %v4136
        %v4138 = vrot.slane %v4130, %v4137
        %v4140 = vunpack.c.l.s4 1983009808
        %v4141 = vunpack.c.0.s8 %v4140
        %v4142 = vlaneseq
        %v4143 = vshrl.u32 %v4142, 7
        %v4144 = vsub.s32 %v4141, %v4143
        %v4145 = vrot.slane %v4131, %v4144
        %v4146 = vcombine.low %v3443, %v3507
        %v4147 = vcombine.high %v3443, %v3507
        %v4149 = vunpack.c.l.s4 1983009808
        %v4150 = vunpack.c.0.s8 %v4149
        %v4151 = vlaneseq
        %v4152 = vshrl.u32 %v4151, 7
        %v4153 = vsub.s32 %v4150, %v4152
        %v4154 = vrot.slane %v4146, %v4153
        %v4156 = vunpack.c.l.s4 1983009808
        %v4157 = vunpack.c.0.s8 %v4156
        %v4158 = vlaneseq
        %v4159 = vshrl.u32 %v4158, 7
        %v4160 = vsub.s32 %v4157, %v4159
        %v4161 = vrot.slane %v4147, %v4160
        %v4162 = vcombine.low %v4138, %v4154
        %v4163 = vcombine.high %v4138, %v4154
        %v4165 = vunpack.c.l.s4 1934713408
        %v4166 = vunpack.c.0.s8 %v4165
        %v4167 = vlaneseq
        %v4168 = vshrl.u32 %v4167, 7
        %v4169 = vsub.s32 %v4166, %v4168
        %v4170 = vrot.slane %v4162, %v4169
        %v4172 = vunpack.c.l.s4 1934713408
        %v4173 = vunpack.c.0.s8 %v4172
        %v4174 = vlaneseq
        %v4175 = vshrl.u32 %v4174, 7
        %v4176 = vsub.s32 %v4173, %v4175
        %v4177 = vrot.slane %v4163, %v4176
        %v4178 = vcombine.low %v4145, %v4161
        %v4179 = vcombine.high %v4145, %v4161
        %v4181 = vunpack.c.l.s4 1934713408
        %v4182 = vunpack.c.0.s8 %v4181
        %v4183 = vlaneseq
        %v4184 = vshrl.u32 %v4183, 7
        %v4185 = vsub.s32 %v4182, %v4184
        %v4186 = vrot.slane %v4178, %v4185
        %v4188 = vunpack.c.l.s4 1934713408
        %v4189 = vunpack.c.0.s8 %v4188
        %v4190 = vlaneseq
        %v4191 = vshrl.u32 %v4190, 7
        %v4192 = vsub.s32 %v4189, %v4191
        %v4193 = vrot.slane %v4179, %v4192
        %v4194 = vcombine.high %v4170, 0.0
        %v4195 = vcombine.high %v4177, 0.0
        %v4196 = vcombine.high %v4186, 0.0
        %v4197 = vcombine.high %v4193, 0.0
        %v4198 = vcombine.low %v3413, %v3477
        %v4199 = vcombine.high %v3413, %v3477
        %v4201 = vunpack.c.l.s4 1983009808
        %v4202 = vunpack.c.0.s8 %v4201
        %v4203 = vlaneseq
        %v4204 = vshrl.u32 %v4203, 7
        %v4205 = vsub.s32 %v4202, %v4204
        %v4206 = vrot.slane %v4198, %v4205
        %v4208 = vunpack.c.l.s4 1983009808
        %v4209 = vunpack.c.0.s8 %v4208
        %v4210 = vlaneseq
        %v4211 = vshrl.u32 %v4210, 7
        %v4212 = vsub.s32 %v4209, %v4211
        %v4213 = vrot.slane %v4199, %v4212
        %v4214 = vcombine.low %v3445, %v3509
        %v4215 = vcombine.high %v3445, %v3509
        %v4217 = vunpack.c.l.s4 1983009808
        %v4218 = vunpack.c.0.s8 %v4217
        %v4219 = vlaneseq
        %v4220 = vshrl.u32 %v4219, 7
        %v4221 = vsub.s32 %v4218, %v4220
        %v4222 = vrot.slane %v4214, %v4221
        %v4224 = vunpack.c.l.s4 1983009808
        %v4225 = vunpack.c.0.s8 %v4224
        %v4226 = vlaneseq
        %v4227 = vshrl.u32 %v4226, 7
        %v4228 = vsub.s32 %v4225, %v4227
        %v4229 = vrot.slane %v4215, %v4228
        %v4230 = vcombine.low %v4206, %v4222
        %v4231 = vcombine.high %v4206, %v4222
        %v4233 = vunpack.c.l.s4 1934713408
        %v4234 = vunpack.c.0.s8 %v4233
        %v4235 = vlaneseq
        %v4236 = vshrl.u32 %v4235, 7
        %v4237 = vsub.s32 %v4234, %v4236
        %v4238 = vrot.slane %v4230, %v4237
        %v4240 = vunpack.c.l.s4 1934713408
        %v4241 = vunpack.c.0.s8 %v4240
        %v4242 = vlaneseq
        %v4243 = vshrl.u32 %v4242, 7
        %v4244 = vsub.s32 %v4241, %v4243
        %v4245 = vrot.slane %v4231, %v4244
        %v4246 = vcombine.low %v4213, %v4229
        %v4247 = vcombine.high %v4213, %v4229
        %v4249 = vunpack.c.l.s4 1934713408
        %v4250 = vunpack.c.0.s8 %v4249
        %v4251 = vlaneseq
        %v4252 = vshrl.u32 %v4251, 7
        %v4253 = vsub.s32 %v4250, %v4252
        %v4254 = vrot.slane %v4246, %v4253
        %v4256 = vunpack.c.l.s4 1934713408
        %v4257 = vunpack.c.0.s8 %v4256
        %v4258 = vlaneseq
        %v4259 = vshrl.u32 %v4258, 7
        %v4260 = vsub.s32 %v4257, %v4259
        %v4261 = vrot.slane %v4247, %v4260
        %v4262 = vcombine.high %v4238, 0.0
        %v4263 = vcombine.high %v4245, 0.0
        %v4264 = vcombine.high %v4254, 0.0
        %v4265 = vcombine.high %v4261, 0.0
        %v4266 = vcombine.low %v3415, %v3479
        %v4267 = vcombine.high %v3415, %v3479
        %v4269 = vunpack.c.l.s4 1983009808
        %v4270 = vunpack.c.0.s8 %v4269
        %v4271 = vlaneseq
        %v4272 = vshrl.u32 %v4271, 7
        %v4273 = vsub.s32 %v4270, %v4272
        %v4274 = vrot.slane %v4266, %v4273
        %v4276 = vunpack.c.l.s4 1983009808
        %v4277 = vunpack.c.0.s8 %v4276
        %v4278 = vlaneseq
        %v4279 = vshrl.u32 %v4278, 7
        %v4280 = vsub.s32 %v4277, %v4279
        %v4281 = vrot.slane %v4267, %v4280
        %v4282 = vcombine.low %v3447, %v3511
        %v4283 = vcombine.high %v3447, %v3511
        %v4285 = vunpack.c.l.s4 1983009808
        %v4286 = vunpack.c.0.s8 %v4285
        %v4287 = vlaneseq
        %v4288 = vshrl.u32 %v4287, 7
        %v4289 = vsub.s32 %v4286, %v4288
        %v4290 = vrot.slane %v4282, %v4289
        %v4292 = vunpack.c.l.s4 1983009808
        %v4293 = vunpack.c.0.s8 %v4292
        %v4294 = vlaneseq
        %v4295 = vshrl.u32 %v4294, 7
        %v4296 = vsub.s32 %v4293, %v4295
        %v4297 = vrot.slane %v4283, %v4296
        %v4298 = vcombine.low %v4274, %v4290
        %v4299 = vcombine.high %v4274, %v4290
        %v4301 = vunpack.c.l.s4 1934713408
        %v4302 = vunpack.c.0.s8 %v4301
        %v4303 = vlaneseq
        %v4304 = vshrl.u32 %v4303, 7
        %v4305 = vsub.s32 %v4302, %v4304
        %v4306 = vrot.slane %v4298, %v4305
        %v4308 = vunpack.c.l.s4 1934713408
        %v4309 = vunpack.c.0.s8 %v4308
        %v4310 = vlaneseq
        %v4311 = vshrl.u32 %v4310, 7
        %v4312 = vsub.s32 %v4309, %v4311
        %v4313 = vrot.slane %v4299, %v4312
        %v4314 = vcombine.low %v4281, %v4297
        %v4315 = vcombine.high %v4281, %v4297
        %v4317 = vunpack.c.l.s4 1934713408
        %v4318 = vunpack.c.0.s8 %v4317
        %v4319 = vlaneseq
        %v4320 = vshrl.u32 %v4319, 7
        %v4321 = vsub.s32 %v4318, %v4320
        %v4322 = vrot.slane %v4314, %v4321
        %v4324 = vunpack.c.l.s4 1934713408
        %v4325 = vunpack.c.0.s8 %v4324
        %v4326 = vlaneseq
        %v4327 = vshrl.u32 %v4326, 7
        %v4328 = vsub.s32 %v4325, %v4327
        %v4329 = vrot.slane %v4315, %v4328
        %v4330 = vcombine.high %v4306, 0.0
        %v4331 = vcombine.high %v4313, 0.0
        %v4332 = vcombine.high %v4322, 0.0
        %v4333 = vcombine.high %v4329, 0.0
        %v4334 = vcombine.low %v3417, %v3481
        %v4335 = vcombine.high %v3417, %v3481
        %v4337 = vunpack.c.l.s4 1983009808
        %v4338 = vunpack.c.0.s8 %v4337
        %v4339 = vlaneseq
        %v4340 = vshrl.u32 %v4339, 7
        %v4341 = vsub.s32 %v4338, %v4340
        %v4342 = vrot.slane %v4334, %v4341
        %v4344 = vunpack.c.l.s4 1983009808
        %v4345 = vunpack.c.0.s8 %v4344
        %v4346 = vlaneseq
        %v4347 = vshrl.u32 %v4346, 7
        %v4348 = vsub.s32 %v4345, %v4347
        %v4349 = vrot.slane %v4335, %v4348
        %v4350 = vcombine.low %v3449, %v3513
        %v4351 = vcombine.high %v3449, %v3513
        %v4353 = vunpack.c.l.s4 1983009808
        %v4354 = vunpack.c.0.s8 %v4353
        %v4355 = vlaneseq
        %v4356 = vshrl.u32 %v4355, 7
        %v4357 = vsub.s32 %v4354, %v4356
        %v4358 = vrot.slane %v4350, %v4357
        %v4360 = vunpack.c.l.s4 1983009808
        %v4361 = vunpack.c.0.s8 %v4360
        %v4362 = vlaneseq
        %v4363 = vshrl.u32 %v4362, 7
        %v4364 = vsub.s32 %v4361, %v4363
        %v4365 = vrot.slane %v4351, %v4364
        %v4366 = vcombine.low %v4342, %v4358
        %v4367 = vcombine.high %v4342, %v4358
        %v4369 = vunpack.c.l.s4 1934713408
        %v4370 = vunpack.c.0.s8 %v4369
        %v4371 = vlaneseq
        %v4372 = vshrl.u32 %v4371, 7
        %v4373 = vsub.s32 %v4370, %v4372
        %v4374 = vrot.slane %v4366, %v4373
        %v4376 = vunpack.c.l.s4 1934713408
        %v4377 = vunpack.c.0.s8 %v4376
        %v4378 = vlaneseq
        %v4379 = vshrl.u32 %v4378, 7
        %v4380 = vsub.s32 %v4377, %v4379
        %v4381 = vrot.slane %v4367, %v4380
        %v4382 = vcombine.low %v4349, %v4365
        %v4383 = vcombine.high %v4349, %v4365
        %v4385 = vunpack.c.l.s4 1934713408
        %v4386 = vunpack.c.0.s8 %v4385
        %v4387 = vlaneseq
        %v4388 = vshrl.u32 %v4387, 7
        %v4389 = vsub.s32 %v4386, %v4388
        %v4390 = vrot.slane %v4382, %v4389
        %v4392 = vunpack.c.l.s4 1934713408
        %v4393 = vunpack.c.0.s8 %v4392
        %v4394 = vlaneseq
        %v4395 = vshrl.u32 %v4394, 7
        %v4396 = vsub.s32 %v4393, %v4395
        %v4397 = vrot.slane %v4383, %v4396
        %v4398 = vcombine.high %v4374, 0.0
        %v4399 = vcombine.high %v4381, 0.0
        %v4400 = vcombine.high %v4390, 0.0
        %v4401 = vcombine.high %v4397, 0.0
        %v4402 = vcombine.low %v3419, %v3483
        %v4403 = vcombine.high %v3419, %v3483
        %v4405 = vunpack.c.l.s4 1983009808
        %v4406 = vunpack.c.0.s8 %v4405
        %v4407 = vlaneseq
        %v4408 = vshrl.u32 %v4407, 7
        %v4409 = vsub.s32 %v4406, %v4408
        %v4410 = vrot.slane %v4402, %v4409
        %v4412 = vunpack.c.l.s4 1983009808
        %v4413 = vunpack.c.0.s8 %v4412
        %v4414 = vlaneseq
        %v4415 = vshrl.u32 %v4414, 7
        %v4416 = vsub.s32 %v4413, %v4415
        %v4417 = vrot.slane %v4403, %v4416
        %v4418 = vcombine.low %v3451, %v3515
        %v4419 = vcombine.high %v3451, %v3515
        %v4421 = vunpack.c.l.s4 1983009808
        %v4422 = vunpack.c.0.s8 %v4421
        %v4423 = vlaneseq
        %v4424 = vshrl.u32 %v4423, 7
        %v4425 = vsub.s32 %v4422, %v4424
        %v4426 = vrot.slane %v4418, %v4425
        %v4428 = vunpack.c.l.s4 1983009808
        %v4429 = vunpack.c.0.s8 %v4428
        %v4430 = vlaneseq
        %v4431 = vshrl.u32 %v4430, 7
        %v4432 = vsub.s32 %v4429, %v4431
        %v4433 = vrot.slane %v4419, %v4432
        %v4434 = vcombine.low %v4410, %v4426
        %v4435 = vcombine.high %v4410, %v4426
        %v4437 = vunpack.c.l.s4 1934713408
        %v4438 = vunpack.c.0.s8 %v4437
        %v4439 = vlaneseq
        %v4440 = vshrl.u32 %v4439, 7
        %v4441 = vsub.s32 %v4438, %v4440
        %v4442 = vrot.slane %v4434, %v4441
        %v4444 = vunpack.c.l.s4 1934713408
        %v4445 = vunpack.c.0.s8 %v4444
        %v4446 = vlaneseq
        %v4447 = vshrl.u32 %v4446, 7
        %v4448 = vsub.s32 %v4445, %v4447
        %v4449 = vrot.slane %v4435, %v4448
        %v4450 = vcombine.low %v4417, %v4433
        %v4451 = vcombine.high %v4417, %v4433
        %v4453 = vunpack.c.l.s4 1934713408
        %v4454 = vunpack.c.0.s8 %v4453
        %v4455 = vlaneseq
        %v4456 = vshrl.u32 %v4455, 7
        %v4457 = vsub.s32 %v4454, %v4456
        %v4458 = vrot.slane %v4450, %v4457
        %v4460 = vunpack.c.l.s4 1934713408
        %v4461 = vunpack.c.0.s8 %v4460
        %v4462 = vlaneseq
        %v4463 = vshrl.u32 %v4462, 7
        %v4464 = vsub.s32 %v4461, %v4463
        %v4465 = vrot.slane %v4451, %v4464
        %v4466 = vcombine.high %v4442, 0.0
        %v4467 = vcombine.high %v4449, 0.0
        %v4468 = vcombine.high %v4458, 0.0
        %v4469 = vcombine.high %v4465, 0.0
        %v4470 = vcombine.low %v3421, %v3485
        %v4471 = vcombine.high %v3421, %v3485
        %v4473 = vunpack.c.l.s4 1983009808
        %v4474 = vunpack.c.0.s8 %v4473
        %v4475 = vlaneseq
        %v4476 = vshrl.u32 %v4475, 7
        %v4477 = vsub.s32 %v4474, %v4476
        %v4478 = vrot.slane %v4470, %v4477
        %v4480 = vunpack.c.l.s4 1983009808
        %v4481 = vunpack.c.0.s8 %v4480
        %v4482 = vlaneseq
        %v4483 = vshrl.u32 %v4482, 7
        %v4484 = vsub.s32 %v4481, %v4483
        %v4485 = vrot.slane %v4471, %v4484
        %v4486 = vcombine.low %v3453, %v3517
        %v4487 = vcombine.high %v3453, %v3517
        %v4489 = vunpack.c.l.s4 1983009808
        %v4490 = vunpack.c.0.s8 %v4489
        %v4491 = vlaneseq
        %v4492 = vshrl.u32 %v4491, 7
        %v4493 = vsub.s32 %v4490, %v4492
        %v4494 = vrot.slane %v4486, %v4493
        %v4496 = vunpack.c.l.s4 1983009808
        %v4497 = vunpack.c.0.s8 %v4496
        %v4498 = vlaneseq
        %v4499 = vshrl.u32 %v4498, 7
        %v4500 = vsub.s32 %v4497, %v4499
        %v4501 = vrot.slane %v4487, %v4500
        %v4502 = vcombine.low %v4478, %v4494
        %v4503 = vcombine.high %v4478, %v4494
        %v4505 = vunpack.c.l.s4 1934713408
        %v4506 = vunpack.c.0.s8 %v4505
        %v4507 = vlaneseq
        %v4508 = vshrl.u32 %v4507, 7
        %v4509 = vsub.s32 %v4506, %v4508
        %v4510 = vrot.slane %v4502, %v4509
        %v4512 = vunpack.c.l.s4 1934713408
        %v4513 = vunpack.c.0.s8 %v4512
        %v4514 = vlaneseq
        %v4515 = vshrl.u32 %v4514, 7
        %v4516 = vsub.s32 %v4513, %v4515
        %v4517 = vrot.slane %v4503, %v4516
        %v4518 = vcombine.low %v4485, %v4501
        %v4519 = vcombine.high %v4485, %v4501
        %v4521 = vunpack.c.l.s4 1934713408
        %v4522 = vunpack.c.0.s8 %v4521
        %v4523 = vlaneseq
        %v4524 = vshrl.u32 %v4523, 7
        %v4525 = vsub.s32 %v4522, %v4524
        %v4526 = vrot.slane %v4518, %v4525
        %v4528 = vunpack.c.l.s4 1934713408
        %v4529 = vunpack.c.0.s8 %v4528
        %v4530 = vlaneseq
        %v4531 = vshrl.u32 %v4530, 7
        %v4532 = vsub.s32 %v4529, %v4531
        %v4533 = vrot.slane %v4519, %v4532
        %v4534 = vcombine.high %v4510, 0.0
        %v4535 = vcombine.high %v4517, 0.0
        %v4536 = vcombine.high %v4526, 0.0
        %v4537 = vcombine.high %v4533, 0.0
        %v4538 = vcombine.low %v3423, %v3487
        %v4539 = vcombine.high %v3423, %v3487
        %v4541 = vunpack.c.l.s4 1983009808
        %v4542 = vunpack.c.0.s8 %v4541
        %v4543 = vlaneseq
        %v4544 = vshrl.u32 %v4543, 7
        %v4545 = vsub.s32 %v4542, %v4544
        %v4546 = vrot.slane %v4538, %v4545
        %v4548 = vunpack.c.l.s4 1983009808
        %v4549 = vunpack.c.0.s8 %v4548
        %v4550 = vlaneseq
        %v4551 = vshrl.u32 %v4550, 7
        %v4552 = vsub.s32 %v4549, %v4551
        %v4553 = vrot.slane %v4539, %v4552
        %v4554 = vcombine.low %v3455, %v3519
        %v4555 = vcombine.high %v3455, %v3519
        %v4557 = vunpack.c.l.s4 1983009808
        %v4558 = vunpack.c.0.s8 %v4557
        %v4559 = vlaneseq
        %v4560 = vshrl.u32 %v4559, 7
        %v4561 = vsub.s32 %v4558, %v4560
        %v4562 = vrot.slane %v4554, %v4561
        %v4564 = vunpack.c.l.s4 1983009808
        %v4565 = vunpack.c.0.s8 %v4564
        %v4566 = vlaneseq
        %v4567 = vshrl.u32 %v4566, 7
        %v4568 = vsub.s32 %v4565, %v4567
        %v4569 = vrot.slane %v4555, %v4568
        %v4570 = vcombine.low %v4546, %v4562
        %v4571 = vcombine.high %v4546, %v4562
        %v4573 = vunpack.c.l.s4 1934713408
        %v4574 = vunpack.c.0.s8 %v4573
        %v4575 = vlaneseq
        %v4576 = vshrl.u32 %v4575, 7
        %v4577 = vsub.s32 %v4574, %v4576
        %v4578 = vrot.slane %v4570, %v4577
        %v4580 = vunpack.c.l.s4 1934713408
        %v4581 = vunpack.c.0.s8 %v4580
        %v4582 = vlaneseq
        %v4583 = vshrl.u32 %v4582, 7
        %v4584 = vsub.s32 %v4581, %v4583
        %v4585 = vrot.slane %v4571, %v4584
        %v4586 = vcombine.low %v4553, %v4569
        %v4587 = vcombine.high %v4553, %v4569
        %v4589 = vunpack.c.l.s4 1934713408
        %v4590 = vunpack.c.0.s8 %v4589
        %v4591 = vlaneseq
        %v4592 = vshrl.u32 %v4591, 7
        %v4593 = vsub.s32 %v4590, %v4592
        %v4594 = vrot.slane %v4586, %v4593
        %v4596 = vunpack.c.l.s4 1934713408
        %v4597 = vunpack.c.0.s8 %v4596
        %v4598 = vlaneseq
        %v4599 = vshrl.u32 %v4598, 7
        %v4600 = vsub.s32 %v4597, %v4599
        %v4601 = vrot.slane %v4587, %v4600
        %v4602 = vcombine.high %v4578, 0.0
        %v4603 = vcombine.high %v4585, 0.0
        %v4604 = vcombine.high %v4594, 0.0
        %v4605 = vcombine.high %v4601, 0.0
        %v4606 = vcombine.low %v3425, %v3489
        %v4607 = vcombine.high %v3425, %v3489
        %v4609 = vunpack.c.l.s4 1983009808
        %v4610 = vunpack.c.0.s8 %v4609
        %v4611 = vlaneseq
        %v4612 = vshrl.u32 %v4611, 7
        %v4613 = vsub.s32 %v4610, %v4612
        %v4614 = vrot.slane %v4606, %v4613
        %v4616 = vunpack.c.l.s4 1983009808
        %v4617 = vunpack.c.0.s8 %v4616
        %v4618 = vlaneseq
        %v4619 = vshrl.u32 %v4618, 7
        %v4620 = vsub.s32 %v4617, %v4619
        %v4621 = vrot.slane %v4607, %v4620
        %v4622 = vcombine.low %v3457, %v3521
        %v4623 = vcombine.high %v3457, %v3521
        %v4625 = vunpack.c.l.s4 1983009808
        %v4626 = vunpack.c.0.s8 %v4625
        %v4627 = vlaneseq
        %v4628 = vshrl.u32 %v4627, 7
        %v4629 = vsub.s32 %v4626, %v4628
        %v4630 = vrot.slane %v4622, %v4629
        %v4632 = vunpack.c.l.s4 1983009808
        %v4633 = vunpack.c.0.s8 %v4632
        %v4634 = vlaneseq
        %v4635 = vshrl.u32 %v4634, 7
        %v4636 = vsub.s32 %v4633, %v4635
        %v4637 = vrot.slane %v4623, %v4636
        %v4638 = vcombine.low %v4614, %v4630
        %v4639 = vcombine.high %v4614, %v4630
        %v4641 = vunpack.c.l.s4 1934713408
        %v4642 = vunpack.c.0.s8 %v4641
        %v4643 = vlaneseq
        %v4644 = vshrl.u32 %v4643, 7
        %v4645 = vsub.s32 %v4642, %v4644
        %v4646 = vrot.slane %v4638, %v4645
        %v4648 = vunpack.c.l.s4 1934713408
        %v4649 = vunpack.c.0.s8 %v4648
        %v4650 = vlaneseq
        %v4651 = vshrl.u32 %v4650, 7
        %v4652 = vsub.s32 %v4649, %v4651
        %v4653 = vrot.slane %v4639, %v4652
        %v4654 = vcombine.low %v4621, %v4637
        %v4655 = vcombine.high %v4621, %v4637
        %v4657 = vunpack.c.l.s4 1934713408
        %v4658 = vunpack.c.0.s8 %v4657
        %v4659 = vlaneseq
        %v4660 = vshrl.u32 %v4659, 7
        %v4661 = vsub.s32 %v4658, %v4660
        %v4662 = vrot.slane %v4654, %v4661
        %v4664 = vunpack.c.l.s4 1934713408
        %v4665 = vunpack.c.0.s8 %v4664
        %v4666 = vlaneseq
        %v4667 = vshrl.u32 %v4666, 7
        %v4668 = vsub.s32 %v4665, %v4667
        %v4669 = vrot.slane %v4655, %v4668
        %v4670 = vcombine.high %v4646, 0.0
        %v4671 = vcombine.high %v4653, 0.0
        %v4672 = vcombine.high %v4662, 0.0
        %v4673 = vcombine.high %v4669, 0.0
        %v4674 = vcombine.low %v3626, %v3633
        %v4676 = vunpack.c.l.s4 1983009808
        %v4677 = vunpack.c.0.s8 %v4676
        %v4678 = vlaneseq
        %v4679 = vshrl.u32 %v4678, 7
        %v4680 = vsub.s32 %v4677, %v4679
        %v4681 = vrot.slane %v4674, %v4680
        %v4682 = vcombine.low %v3650, %v3651
        %v4684 = vunpack.c.l.s4 1983009808
        %v4685 = vunpack.c.0.s8 %v4684
        %v4686 = vlaneseq
        %v4687 = vshrl.u32 %v4686, 7
        %v4688 = vsub.s32 %v4685, %v4687
        %v4689 = vrot.slane %v4682, %v4688
        %v4690 = vcombine.low %v3642, %v3649
        %v4692 = vunpack.c.l.s4 1983009808
        %v4693 = vunpack.c.0.s8 %v4692
        %v4694 = vlaneseq
        %v4695 = vshrl.u32 %v4694, 7
        %v4696 = vsub.s32 %v4693, %v4695
        %v4697 = vrot.slane %v4690, %v4696
        %v4698 = vcombine.low %v3652, %v3653
        %v4700 = vunpack.c.l.s4 1983009808
        %v4701 = vunpack.c.0.s8 %v4700
        %v4702 = vlaneseq
        %v4703 = vshrl.u32 %v4702, 7
        %v4704 = vsub.s32 %v4701, %v4703
        %v4705 = vrot.slane %v4698, %v4704
        %v4706 = vcombine.low %v4681, %v4689
        %v4707 = vcombine.high %v4681, %v4689
        %v4709 = vunpack.c.l.s4 1934713408
        %v4710 = vunpack.c.0.s8 %v4709
        %v4711 = vlaneseq
        %v4712 = vshrl.u32 %v4711, 7
        %v4713 = vsub.s32 %v4710, %v4712
        %v4714 = vrot.slane %v4706, %v4713
        %v4716 = vunpack.c.l.s4 1934713408
        %v4717 = vunpack.c.0.s8 %v4716
        %v4718 = vlaneseq
        %v4719 = vshrl.u32 %v4718, 7
        %v4720 = vsub.s32 %v4717, %v4719
        %v4721 = vrot.slane %v4707, %v4720
        %v4722 = vcombine.low %v4697, %v4705
        %v4723 = vcombine.high %v4697, %v4705
        %v4725 = vunpack.c.l.s4 1934713408
        %v4726 = vunpack.c.0.s8 %v4725
        %v4727 = vlaneseq
        %v4728 = vshrl.u32 %v4727, 7
        %v4729 = vsub.s32 %v4726, %v4728
        %v4730 = vrot.slane %v4722, %v4729
        %v4732 = vunpack.c.l.s4 1934713408
        %v4733 = vunpack.c.0.s8 %v4732
        %v4734 = vlaneseq
        %v4735 = vshrl.u32 %v4734, 7
        %v4736 = vsub.s32 %v4733, %v4735
        %v4737 = vrot.slane %v4723, %v4736
        %v4738 = vcombine.low %v4714, %v4730
        %v4739 = vcombine.high %v4714, %v4730
        %v4740 = vcombine.low %v4721, %v4737
        %v4741 = vcombine.high %v4721, %v4737
        %v4742 = vcombine.low %v3694, %v3701
        %v4744 = vunpack.c.l.s4 1983009808
        %v4745 = vunpack.c.0.s8 %v4744
        %v4746 = vlaneseq
        %v4747 = vshrl.u32 %v4746, 7
        %v4748 = vsub.s32 %v4745, %v4747
        %v4749 = vrot.slane %v4742, %v4748
        %v4750 = vcombine.low %v3718, %v3719
        %v4752 = vunpack.c.l.s4 1983009808
        %v4753 = vunpack.c.0.s8 %v4752
        %v4754 = vlaneseq
        %v4755 = vshrl.u32 %v4754, 7
        %v4756 = vsub.s32 %v4753, %v4755
        %v4757 = vrot.slane %v4750, %v4756
        %v4758 = vcombine.low %v3710, %v3717
        %v4760 = vunpack.c.l.s4 1983009808
        %v4761 = vunpack.c.0.s8 %v4760
        %v4762 = vlaneseq
        %v4763 = vshrl.u32 %v4762, 7
        %v4764 = vsub.s32 %v4761, %v4763
        %v4765 = vrot.slane %v4758, %v4764
        %v4766 = vcombine.low %v3720, %v3721
        %v4768 = vunpack.c.l.s4 1983009808
        %v4769 = vunpack.c.0.s8 %v4768
        %v4770 = vlaneseq
        %v4771 = vshrl.u32 %v4770, 7
        %v4772 = vsub.s32 %v4769, %v4771
        %v4773 = vrot.slane %v4766, %v4772
        %v4774 = vcombine.low %v4749, %v4757
        %v4775 = vcombine.high %v4749, %v4757
        %v4777 = vunpack.c.l.s4 1934713408
        %v4778 = vunpack.c.0.s8 %v4777
        %v4779 = vlaneseq
        %v4780 = vshrl.u32 %v4779, 7
        %v4781 = vsub.s32 %v4778, %v4780
        %v4782 = vrot.slane %v4774, %v4781
        %v4784 = vunpack.c.l.s4 1934713408
        %v4785 = vunpack.c.0.s8 %v4784
        %v4786 = vlaneseq
        %v4787 = vshrl.u32 %v4786, 7
        %v4788 = vsub.s32 %v4785, %v4787
        %v4789 = vrot.slane %v4775, %v4788
        %v4790 = vcombine.low %v4765, %v4773
        %v4791 = vcombine.high %v4765, %v4773
        %v4793 = vunpack.c.l.s4 1934713408
        %v4794 = vunpack.c.0.s8 %v4793
        %v4795 = vlaneseq
        %v4796 = vshrl.u32 %v4795, 7
        %v4797 = vsub.s32 %v4794, %v4796
        %v4798 = vrot.slane %v4790, %v4797
        %v4800 = vunpack.c.l.s4 1934713408
        %v4801 = vunpack.c.0.s8 %v4800
        %v4802 = vlaneseq
        %v4803 = vshrl.u32 %v4802, 7
        %v4804 = vsub.s32 %v4801, %v4803
        %v4805 = vrot.slane %v4791, %v4804
        %v4806 = vcombine.low %v4782, %v4798
        %v4807 = vcombine.high %v4782, %v4798
        %v4808 = vcombine.low %v4789, %v4805
        %v4809 = vcombine.high %v4789, %v4805
        %v4810 = vcombine.low %v3762, %v3769
        %v4812 = vunpack.c.l.s4 1983009808
        %v4813 = vunpack.c.0.s8 %v4812
        %v4814 = vlaneseq
        %v4815 = vshrl.u32 %v4814, 7
        %v4816 = vsub.s32 %v4813, %v4815
        %v4817 = vrot.slane %v4810, %v4816
        %v4818 = vcombine.low %v3786, %v3787
        %v4820 = vunpack.c.l.s4 1983009808
        %v4821 = vunpack.c.0.s8 %v4820
        %v4822 = vlaneseq
        %v4823 = vshrl.u32 %v4822, 7
        %v4824 = vsub.s32 %v4821, %v4823
        %v4825 = vrot.slane %v4818, %v4824
        %v4826 = vcombine.low %v3778, %v3785
        %v4828 = vunpack.c.l.s4 1983009808
        %v4829 = vunpack.c.0.s8 %v4828
        %v4830 = vlaneseq
        %v4831 = vshrl.u32 %v4830, 7
        %v4832 = vsub.s32 %v4829, %v4831
        %v4833 = vrot.slane %v4826, %v4832
        %v4834 = vcombine.low %v3788, %v3789
        %v4836 = vunpack.c.l.s4 1983009808
        %v4837 = vunpack.c.0.s8 %v4836
        %v4838 = vlaneseq
        %v4839 = vshrl.u32 %v4838, 7
        %v4840 = vsub.s32 %v4837, %v4839
        %v4841 = vrot.slane %v4834, %v4840
        %v4842 = vcombine.low %v4817, %v4825
        %v4843 = vcombine.high %v4817, %v4825
        %v4845 = vunpack.c.l.s4 1934713408
        %v4846 = vunpack.c.0.s8 %v4845
        %v4847 = vlaneseq
        %v4848 = vshrl.u32 %v4847, 7
        %v4849 = vsub.s32 %v4846, %v4848
        %v4850 = vrot.slane %v4842, %v4849
        %v4852 = vunpack.c.l.s4 1934713408
        %v4853 = vunpack.c.0.s8 %v4852
        %v4854 = vlaneseq
        %v4855 = vshrl.u32 %v4854, 7
        %v4856 = vsub.s32 %v4853, %v4855
        %v4857 = vrot.slane %v4843, %v4856
        %v4858 = vcombine.low %v4833, %v4841
        %v4859 = vcombine.high %v4833, %v4841
        %v4861 = vunpack.c.l.s4 1934713408
        %v4862 = vunpack.c.0.s8 %v4861
        %v4863 = vlaneseq
        %v4864 = vshrl.u32 %v4863, 7
        %v4865 = vsub.s32 %v4862, %v4864
        %v4866 = vrot.slane %v4858, %v4865
        %v4868 = vunpack.c.l.s4 1934713408
        %v4869 = vunpack.c.0.s8 %v4868
        %v4870 = vlaneseq
        %v4871 = vshrl.u32 %v4870, 7
        %v4872 = vsub.s32 %v4869, %v4871
        %v4873 = vrot.slane %v4859, %v4872
        %v4874 = vcombine.low %v4850, %v4866
        %v4875 = vcombine.high %v4850, %v4866
        %v4876 = vcombine.low %v4857, %v4873
        %v4877 = vcombine.high %v4857, %v4873
        %v4878 = vcombine.low %v3830, %v3837
        %v4880 = vunpack.c.l.s4 1983009808
        %v4881 = vunpack.c.0.s8 %v4880
        %v4882 = vlaneseq
        %v4883 = vshrl.u32 %v4882, 7
        %v4884 = vsub.s32 %v4881, %v4883
        %v4885 = vrot.slane %v4878, %v4884
        %v4886 = vcombine.low %v3854, %v3855
        %v4888 = vunpack.c.l.s4 1983009808
        %v4889 = vunpack.c.0.s8 %v4888
        %v4890 = vlaneseq
        %v4891 = vshrl.u32 %v4890, 7
        %v4892 = vsub.s32 %v4889, %v4891
        %v4893 = vrot.slane %v4886, %v4892
        %v4894 = vcombine.low %v3846, %v3853
        %v4896 = vunpack.c.l.s4 1983009808
        %v4897 = vunpack.c.0.s8 %v4896
        %v4898 = vlaneseq
        %v4899 = vshrl.u32 %v4898, 7
        %v4900 = vsub.s32 %v4897, %v4899
        %v4901 = vrot.slane %v4894, %v4900
        %v4902 = vcombine.low %v3856, %v3857
        %v4904 = vunpack.c.l.s4 1983009808
        %v4905 = vunpack.c.0.s8 %v4904
        %v4906 = vlaneseq
        %v4907 = vshrl.u32 %v4906, 7
        %v4908 = vsub.s32 %v4905, %v4907
        %v4909 = vrot.slane %v4902, %v4908
        %v4910 = vcombine.low %v4885, %v4893
        %v4911 = vcombine.high %v4885, %v4893
        %v4913 = vunpack.c.l.s4 1934713408
        %v4914 = vunpack.c.0.s8 %v4913
        %v4915 = vlaneseq
        %v4916 = vshrl.u32 %v4915, 7
        %v4917 = vsub.s32 %v4914, %v4916
        %v4918 = vrot.slane %v4910, %v4917
        %v4920 = vunpack.c.l.s4 1934713408
        %v4921 = vunpack.c.0.s8 %v4920
        %v4922 = vlaneseq
        %v4923 = vshrl.u32 %v4922, 7
        %v4924 = vsub.s32 %v4921, %v4923
        %v4925 = vrot.slane %v4911, %v4924
        %v4926 = vcombine.low %v4901, %v4909
        %v4927 = vcombine.high %v4901, %v4909
        %v4929 = vunpack.c.l.s4 1934713408
        %v4930 = vunpack.c.0.s8 %v4929
        %v4931 = vlaneseq
        %v4932 = vshrl.u32 %v4931, 7
        %v4933 = vsub.s32 %v4930, %v4932
        %v4934 = vrot.slane %v4926, %v4933
        %v4936 = vunpack.c.l.s4 1934713408
        %v4937 = vunpack.c.0.s8 %v4936
        %v4938 = vlaneseq
        %v4939 = vshrl.u32 %v4938, 7
        %v4940 = vsub.s32 %v4937, %v4939
        %v4941 = vrot.slane %v4927, %v4940
        %v4942 = vcombine.low %v4918, %v4934
        %v4943 = vcombine.high %v4918, %v4934
        %v4944 = vcombine.low %v4925, %v4941
        %v4945 = vcombine.high %v4925, %v4941
        %v4946 = vcombine.low %v3898, %v3905
        %v4948 = vunpack.c.l.s4 1983009808
        %v4949 = vunpack.c.0.s8 %v4948
        %v4950 = vlaneseq
        %v4951 = vshrl.u32 %v4950, 7
        %v4952 = vsub.s32 %v4949, %v4951
        %v4953 = vrot.slane %v4946, %v4952
        %v4954 = vcombine.low %v3922, %v3923
        %v4956 = vunpack.c.l.s4 1983009808
        %v4957 = vunpack.c.0.s8 %v4956
        %v4958 = vlaneseq
        %v4959 = vshrl.u32 %v4958, 7
        %v4960 = vsub.s32 %v4957, %v4959
        %v4961 = vrot.slane %v4954, %v4960
        %v4962 = vcombine.low %v3914, %v3921
        %v4964 = vunpack.c.l.s4 1983009808
        %v4965 = vunpack.c.0.s8 %v4964
        %v4966 = vlaneseq
        %v4967 = vshrl.u32 %v4966, 7
        %v4968 = vsub.s32 %v4965, %v4967
        %v4969 = vrot.slane %v4962, %v4968
        %v4970 = vcombine.low %v3924, %v3925
        %v4972 = vunpack.c.l.s4 1983009808
        %v4973 = vunpack.c.0.s8 %v4972
        %v4974 = vlaneseq
        %v4975 = vshrl.u32 %v4974, 7
        %v4976 = vsub.s32 %v4973, %v4975
        %v4977 = vrot.slane %v4970, %v4976
        %v4978 = vcombine.low %v4953, %v4961
        %v4979 = vcombine.high %v4953, %v4961
        %v4981 = vunpack.c.l.s4 1934713408
        %v4982 = vunpack.c.0.s8 %v4981
        %v4983 = vlaneseq
        %v4984 = vshrl.u32 %v4983, 7
        %v4985 = vsub.s32 %v4982, %v4984
        %v4986 = vrot.slane %v4978, %v4985
        %v4988 = vunpack.c.l.s4 1934713408
        %v4989 = vunpack.c.0.s8 %v4988
        %v4990 = vlaneseq
        %v4991 = vshrl.u32 %v4990, 7
        %v4992 = vsub.s32 %v4989, %v4991
        %v4993 = vrot.slane %v4979, %v4992
        %v4994 = vcombine.low %v4969, %v4977
        %v4995 = vcombine.high %v4969, %v4977
        %v4997 = vunpack.c.l.s4 1934713408
        %v4998 = vunpack.c.0.s8 %v4997
        %v4999 = vlaneseq
        %v5000 = vshrl.u32 %v4999, 7
        %v5001 = vsub.s32 %v4998, %v5000
        %v5002 = vrot.slane %v4994, %v5001
        %v5004 = vunpack.c.l.s4 1934713408
        %v5005 = vunpack.c.0.s8 %v5004
        %v5006 = vlaneseq
        %v5007 = vshrl.u32 %v5006, 7
        %v5008 = vsub.s32 %v5005, %v5007
        %v5009 = vrot.slane %v4995, %v5008
        %v5010 = vcombine.low %v4986, %v5002
        %v5011 = vcombine.high %v4986, %v5002
        %v5012 = vcombine.low %v4993, %v5009
        %v5013 = vcombine.high %v4993, %v5009
        %v5014 = vcombine.low %v3966, %v3973
        %v5016 = vunpack.c.l.s4 1983009808
        %v5017 = vunpack.c.0.s8 %v5016
        %v5018 = vlaneseq
        %v5019 = vshrl.u32 %v5018, 7
        %v5020 = vsub.s32 %v5017, %v5019
        %v5021 = vrot.slane %v5014, %v5020
        %v5022 = vcombine.low %v3990, %v3991
        %v5024 = vunpack.c.l.s4 1983009808
        %v5025 = vunpack.c.0.s8 %v5024
        %v5026 = vlaneseq
        %v5027 = vshrl.u32 %v5026, 7
        %v5028 = vsub.s32 %v5025, %v5027
        %v5029 = vrot.slane %v5022, %v5028
        %v5030 = vcombine.low %v3982, %v3989
        %v5032 = vunpack.c.l.s4 1983009808
        %v5033 = vunpack.c.0.s8 %v5032
        %v5034 = vlaneseq
        %v5035 = vshrl.u32 %v5034, 7
        %v5036 = vsub.s32 %v5033, %v5035
        %v5037 = vrot.slane %v5030, %v5036
        %v5038 = vcombine.low %v3992, %v3993
        %v5040 = vunpack.c.l.s4 1983009808
        %v5041 = vunpack.c.0.s8 %v5040
        %v5042 = vlaneseq
        %v5043 = vshrl.u32 %v5042, 7
        %v5044 = vsub.s32 %v5041, %v5043
        %v5045 = vrot.slane %v5038, %v5044
        %v5046 = vcombine.low %v5021, %v5029
        %v5047 = vcombine.high %v5021, %v5029
        %v5049 = vunpack.c.l.s4 1934713408
        %v5050 = vunpack.c.0.s8 %v5049
        %v5051 = vlaneseq
        %v5052 = vshrl.u32 %v5051, 7
        %v5053 = vsub.s32 %v5050, %v5052
        %v5054 = vrot.slane %v5046, %v5053
        %v5056 = vunpack.c.l.s4 1934713408
        %v5057 = vunpack.c.0.s8 %v5056
        %v5058 = vlaneseq
        %v5059 = vshrl.u32 %v5058, 7
        %v5060 = vsub.s32 %v5057, %v5059
        %v5061 = vrot.slane %v5047, %v5060
        %v5062 = vcombine.low %v5037, %v5045
        %v5063 = vcombine.high %v5037, %v5045
        %v5065 = vunpack.c.l.s4 1934713408
        %v5066 = vunpack.c.0.s8 %v5065
        %v5067 = vlaneseq
        %v5068 = vshrl.u32 %v5067, 7
        %v5069 = vsub.s32 %v5066, %v5068
        %v5070 = vrot.slane %v5062, %v5069
        %v5072 = vunpack.c.l.s4 1934713408
        %v5073 = vunpack.c.0.s8 %v5072
        %v5074 = vlaneseq
        %v5075 = vshrl.u32 %v5074, 7
        %v5076 = vsub.s32 %v5073, %v5075
        %v5077 = vrot.slane %v5063, %v5076
        %v5078 = vcombine.low %v5054, %v5070
        %v5079 = vcombine.high %v5054, %v5070
        %v5080 = vcombine.low %v5061, %v5077
        %v5081 = vcombine.high %v5061, %v5077
        %v5082 = vcombine.low %v4034, %v4041
        %v5084 = vunpack.c.l.s4 1983009808
        %v5085 = vunpack.c.0.s8 %v5084
        %v5086 = vlaneseq
        %v5087 = vshrl.u32 %v5086, 7
        %v5088 = vsub.s32 %v5085, %v5087
        %v5089 = vrot.slane %v5082, %v5088
        %v5090 = vcombine.low %v4058, %v4059
        %v5092 = vunpack.c.l.s4 1983009808
        %v5093 = vunpack.c.0.s8 %v5092
        %v5094 = vlaneseq
        %v5095 = vshrl.u32 %v5094, 7
        %v5096 = vsub.s32 %v5093, %v5095
        %v5097 = vrot.slane %v5090, %v5096
        %v5098 = vcombine.low %v4050, %v4057
        %v5100 = vunpack.c.l.s4 1983009808
        %v5101 = vunpack.c.0.s8 %v5100
        %v5102 = vlaneseq
        %v5103 = vshrl.u32 %v5102, 7
        %v5104 = vsub.s32 %v5101, %v5103
        %v5105 = vrot.slane %v5098, %v5104
        %v5106 = vcombine.low %v4060, %v4061
        %v5108 = vunpack.c.l.s4 1983009808
        %v5109 = vunpack.c.0.s8 %v5108
        %v5110 = vlaneseq
        %v5111 = vshrl.u32 %v5110, 7
        %v5112 = vsub.s32 %v5109, %v5111
        %v5113 = vrot.slane %v5106, %v5112
        %v5114 = vcombine.low %v5089, %v5097
        %v5115 = vcombine.high %v5089, %v5097
        %v5117 = vunpack.c.l.s4 1934713408
        %v5118 = vunpack.c.0.s8 %v5117
        %v5119 = vlaneseq
        %v5120 = vshrl.u32 %v5119, 7
        %v5121 = vsub.s32 %v5118, %v5120
        %v5122 = vrot.slane %v5114, %v5121
        %v5124 = vunpack.c.l.s4 1934713408
        %v5125 = vunpack.c.0.s8 %v5124
        %v5126 = vlaneseq
        %v5127 = vshrl.u32 %v5126, 7
        %v5128 = vsub.s32 %v5125, %v5127
        %v5129 = vrot.slane %v5115, %v5128
        %v5130 = vcombine.low %v5105, %v5113
        %v5131 = vcombine.high %v5105, %v5113
        %v5133 = vunpack.c.l.s4 1934713408
        %v5134 = vunpack.c.0.s8 %v5133
        %v5135 = vlaneseq
        %v5136 = vshrl.u32 %v5135, 7
        %v5137 = vsub.s32 %v5134, %v5136
        %v5138 = vrot.slane %v5130, %v5137
        %v5140 = vunpack.c.l.s4 1934713408
        %v5141 = vunpack.c.0.s8 %v5140
        %v5142 = vlaneseq
        %v5143 = vshrl.u32 %v5142, 7
        %v5144 = vsub.s32 %v5141, %v5143
        %v5145 = vrot.slane %v5131, %v5144
        %v5146 = vcombine.low %v5122, %v5138
        %v5147 = vcombine.high %v5122, %v5138
        %v5148 = vcombine.low %v5129, %v5145
        %v5149 = vcombine.high %v5129, %v5145
        %v5150 = vcombine.low %v4102, %v4109
        %v5152 = vunpack.c.l.s4 1983009808
        %v5153 = vunpack.c.0.s8 %v5152
        %v5154 = vlaneseq
        %v5155 = vshrl.u32 %v5154, 7
        %v5156 = vsub.s32 %v5153, %v5155
        %v5157 = vrot.slane %v5150, %v5156
        %v5158 = vcombine.low %v4126, %v4127
        %v5160 = vunpack.c.l.s4 1983009808
        %v5161 = vunpack.c.0.s8 %v5160
        %v5162 = vlaneseq
        %v5163 = vshrl.u32 %v5162, 7
        %v5164 = vsub.s32 %v5161, %v5163
        %v5165 = vrot.slane %v5158, %v5164
        %v5166 = vcombine.low %v4118, %v4125
        %v5168 = vunpack.c.l.s4 1983009808
        %v5169 = vunpack.c.0.s8 %v5168
        %v5170 = vlaneseq
        %v5171 = vshrl.u32 %v5170, 7
        %v5172 = vsub.s32 %v5169, %v5171
        %v5173 = vrot.slane %v5166, %v5172
        %v5174 = vcombine.low %v4128, %v4129
        %v5176 = vunpack.c.l.s4 1983009808
        %v5177 = vunpack.c.0.s8 %v5176
        %v5178 = vlaneseq
        %v5179 = vshrl.u32 %v5178, 7
        %v5180 = vsub.s32 %v5177, %v5179
        %v5181 = vrot.slane %v5174, %v5180
        %v5182 = vcombine.low %v5157, %v5165
        %v5183 = vcombine.high %v5157, %v5165
        %v5185 = vunpack.c.l.s4 1934713408
        %v5186 = vunpack.c.0.s8 %v5185
        %v5187 = vlaneseq
        %v5188 = vshrl.u32 %v5187, 7
        %v5189 = vsub.s32 %v5186, %v5188
        %v5190 = vrot.slane %v5182, %v5189
        %v5192 = vunpack.c.l.s4 1934713408
        %v5193 = vunpack.c.0.s8 %v5192
        %v5194 = vlaneseq
        %v5195 = vshrl.u32 %v5194, 7
        %v5196 = vsub.s32 %v5193, %v5195
        %v5197 = vrot.slane %v5183, %v5196
        %v5198 = vcombine.low %v5173, %v5181
        %v5199 = vcombine.high %v5173, %v5181
        %v5201 = vunpack.c.l.s4 1934713408
        %v5202 = vunpack.c.0.s8 %v5201
        %v5203 = vlaneseq
        %v5204 = vshrl.u32 %v5203, 7
        %v5205 = vsub.s32 %v5202, %v5204
        %v5206 = vrot.slane %v5198, %v5205
        %v5208 = vunpack.c.l.s4 1934713408
        %v5209 = vunpack.c.0.s8 %v5208
        %v5210 = vlaneseq
        %v5211 = vshrl.u32 %v5210, 7
        %v5212 = vsub.s32 %v5209, %v5211
        %v5213 = vrot.slane %v5199, %v5212
        %v5214 = vcombine.low %v5190, %v5206
        %v5215 = vcombine.high %v5190, %v5206
        %v5216 = vcombine.low %v5197, %v5213
        %v5217 = vcombine.high %v5197, %v5213
        %v5218 = vcombine.low %v4170, %v4177
        %v5220 = vunpack.c.l.s4 1983009808
        %v5221 = vunpack.c.0.s8 %v5220
        %v5222 = vlaneseq
        %v5223 = vshrl.u32 %v5222, 7
        %v5224 = vsub.s32 %v5221, %v5223
        %v5225 = vrot.slane %v5218, %v5224
        %v5226 = vcombine.low %v4194, %v4195
        %v5228 = vunpack.c.l.s4 1983009808
        %v5229 = vunpack.c.0.s8 %v5228
        %v5230 = vlaneseq
        %v5231 = vshrl.u32 %v5230, 7
        %v5232 = vsub.s32 %v5229, %v5231
        %v5233 = vrot.slane %v5226, %v5232
        %v5234 = vcombine.low %v4186, %v4193
        %v5236 = vunpack.c.l.s4 1983009808
        %v5237 = vunpack.c.0.s8 %v5236
        %v5238 = vlaneseq
        %v5239 = vshrl.u32 %v5238, 7
        %v5240 = vsub.s32 %v5237, %v5239
        %v5241 = vrot.slane %v5234, %v5240
        %v5242 = vcombine.low %v4196, %v4197
        %v5244 = vunpack.c.l.s4 1983009808
        %v5245 = vunpack.c.0.s8 %v5244
        %v5246 = vlaneseq
        %v5247 = vshrl.u32 %v5246, 7
        %v5248 = vsub.s32 %v5245, %v5247
        %v5249 = vrot.slane %v5242, %v5248
        %v5250 = vcombine.low %v5225, %v5233
        %v5251 = vcombine.high %v5225, %v5233
        %v5253 = vunpack.c.l.s4 1934713408
        %v5254 = vunpack.c.0.s8 %v5253
        %v5255 = vlaneseq
        %v5256 = vshrl.u32 %v5255, 7
        %v5257 = vsub.s32 %v5254, %v5256
        %v5258 = vrot.slane %v5250, %v5257
        %v5260 = vunpack.c.l.s4 1934713408
        %v5261 = vunpack.c.0.s8 %v5260
        %v5262 = vlaneseq
        %v5263 = vshrl.u32 %v5262, 7
        %v5264 = vsub.s32 %v5261, %v5263
        %v5265 = vrot.slane %v5251, %v5264
        %v5266 = vcombine.low %v5241, %v5249
        %v5267 = vcombine.high %v5241, %v5249
        %v5269 = vunpack.c.l.s4 1934713408
        %v5270 = vunpack.c.0.s8 %v5269
        %v5271 = vlaneseq
        %v5272 = vshrl.u32 %v5271, 7
        %v5273 = vsub.s32 %v5270, %v5272
        %v5274 = vrot.slane %v5266, %v5273
        %v5276 = vunpack.c.l.s4 1934713408
        %v5277 = vunpack.c.0.s8 %v5276
        %v5278 = vlaneseq
        %v5279 = vshrl.u32 %v5278, 7
        %v5280 = vsub.s32 %v5277, %v5279
        %v5281 = vrot.slane %v5267, %v5280
        %v5282 = vcombine.low %v5258, %v5274
        %v5283 = vcombine.high %v5258, %v5274
        %v5284 = vcombine.low %v5265, %v5281
        %v5285 = vcombine.high %v5265, %v5281
        %v5286 = vcombine.low %v4238, %v4245
        %v5288 = vunpack.c.l.s4 1983009808
        %v5289 = vunpack.c.0.s8 %v5288
        %v5290 = vlaneseq
        %v5291 = vshrl.u32 %v5290, 7
        %v5292 = vsub.s32 %v5289, %v5291
        %v5293 = vrot.slane %v5286, %v5292
        %v5294 = vcombine.low %v4262, %v4263
        %v5296 = vunpack.c.l.s4 1983009808
        %v5297 = vunpack.c.0.s8 %v5296
        %v5298 = vlaneseq
        %v5299 = vshrl.u32 %v5298, 7
        %v5300 = vsub.s32 %v5297, %v5299
        %v5301 = vrot.slane %v5294, %v5300
        %v5302 = vcombine.low %v4254, %v4261
        %v5304 = vunpack.c.l.s4 1983009808
        %v5305 = vunpack.c.0.s8 %v5304
        %v5306 = vlaneseq
        %v5307 = vshrl.u32 %v5306, 7
        %v5308 = vsub.s32 %v5305, %v5307
        %v5309 = vrot.slane %v5302, %v5308
        %v5310 = vcombine.low %v4264, %v4265
        %v5312 = vunpack.c.l.s4 1983009808
        %v5313 = vunpack.c.0.s8 %v5312
        %v5314 = vlaneseq
        %v5315 = vshrl.u32 %v5314, 7
        %v5316 = vsub.s32 %v5313, %v5315
        %v5317 = vrot.slane %v5310, %v5316
        %v5318 = vcombine.low %v5293, %v5301
        %v5319 = vcombine.high %v5293, %v5301
        %v5321 = vunpack.c.l.s4 1934713408
        %v5322 = vunpack.c.0.s8 %v5321
        %v5323 = vlaneseq
        %v5324 = vshrl.u32 %v5323, 7
        %v5325 = vsub.s32 %v5322, %v5324
        %v5326 = vrot.slane %v5318, %v5325
        %v5328 = vunpack.c.l.s4 1934713408
        %v5329 = vunpack.c.0.s8 %v5328
        %v5330 = vlaneseq
        %v5331 = vshrl.u32 %v5330, 7
        %v5332 = vsub.s32 %v5329, %v5331
        %v5333 = vrot.slane %v5319, %v5332
        %v5334 = vcombine.low %v5309, %v5317
        %v5335 = vcombine.high %v5309, %v5317
        %v5337 = vunpack.c.l.s4 1934713408
        %v5338 = vunpack.c.0.s8 %v5337
        %v5339 = vlaneseq
        %v5340 = vshrl.u32 %v5339, 7
        %v5341 = vsub.s32 %v5338, %v5340
        %v5342 = vrot.slane %v5334, %v5341
        %v5344 = vunpack.c.l.s4 1934713408
        %v5345 = vunpack.c.0.s8 %v5344
        %v5346 = vlaneseq
        %v5347 = vshrl.u32 %v5346, 7
        %v5348 = vsub.s32 %v5345, %v5347
        %v5349 = vrot.slane %v5335, %v5348
        %v5350 = vcombine.low %v5326, %v5342
        %v5351 = vcombine.high %v5326, %v5342
        %v5352 = vcombine.low %v5333, %v5349
        %v5353 = vcombine.high %v5333, %v5349
        %v5354 = vcombine.low %v4306, %v4313
        %v5356 = vunpack.c.l.s4 1983009808
        %v5357 = vunpack.c.0.s8 %v5356
        %v5358 = vlaneseq
        %v5359 = vshrl.u32 %v5358, 7
        %v5360 = vsub.s32 %v5357, %v5359
        %v5361 = vrot.slane %v5354, %v5360
        %v5362 = vcombine.low %v4330, %v4331
        %v5364 = vunpack.c.l.s4 1983009808
        %v5365 = vunpack.c.0.s8 %v5364
        %v5366 = vlaneseq
        %v5367 = vshrl.u32 %v5366, 7
        %v5368 = vsub.s32 %v5365, %v5367
        %v5369 = vrot.slane %v5362, %v5368
        %v5370 = vcombine.low %v4322, %v4329
        %v5372 = vunpack.c.l.s4 1983009808
        %v5373 = vunpack.c.0.s8 %v5372
        %v5374 = vlaneseq
        %v5375 = vshrl.u32 %v5374, 7
        %v5376 = vsub.s32 %v5373, %v5375
        %v5377 = vrot.slane %v5370, %v5376
        %v5378 = vcombine.low %v4332, %v4333
        %v5380 = vunpack.c.l.s4 1983009808
        %v5381 = vunpack.c.0.s8 %v5380
        %v5382 = vlaneseq
        %v5383 = vshrl.u32 %v5382, 7
        %v5384 = vsub.s32 %v5381, %v5383
        %v5385 = vrot.slane %v5378, %v5384
        %v5386 = vcombine.low %v5361, %v5369
        %v5387 = vcombine.high %v5361, %v5369
        %v5389 = vunpack.c.l.s4 1934713408
        %v5390 = vunpack.c.0.s8 %v5389
        %v5391 = vlaneseq
        %v5392 = vshrl.u32 %v5391, 7
        %v5393 = vsub.s32 %v5390, %v5392
        %v5394 = vrot.slane %v5386, %v5393
        %v5396 = vunpack.c.l.s4 1934713408
        %v5397 = vunpack.c.0.s8 %v5396
        %v5398 = vlaneseq
        %v5399 = vshrl.u32 %v5398, 7
        %v5400 = vsub.s32 %v5397, %v5399
        %v5401 = vrot.slane %v5387, %v5400
        %v5402 = vcombine.low %v5377, %v5385
        %v5403 = vcombine.high %v5377, %v5385
        %v5405 = vunpack.c.l.s4 1934713408
        %v5406 = vunpack.c.0.s8 %v5405
        %v5407 = vlaneseq
        %v5408 = vshrl.u32 %v5407, 7
        %v5409 = vsub.s32 %v5406, %v5408
        %v5410 = vrot.slane %v5402, %v5409
        %v5412 = vunpack.c.l.s4 1934713408
        %v5413 = vunpack.c.0.s8 %v5412
        %v5414 = vlaneseq
        %v5415 = vshrl.u32 %v5414, 7
        %v5416 = vsub.s32 %v5413, %v5415
        %v5417 = vrot.slane %v5403, %v5416
        %v5418 = vcombine.low %v5394, %v5410
        %v5419 = vcombine.high %v5394, %v5410
        %v5420 = vcombine.low %v5401, %v5417
        %v5421 = vcombine.high %v5401, %v5417
        %v5422 = vcombine.low %v4374, %v4381
        %v5424 = vunpack.c.l.s4 1983009808
        %v5425 = vunpack.c.0.s8 %v5424
        %v5426 = vlaneseq
        %v5427 = vshrl.u32 %v5426, 7
        %v5428 = vsub.s32 %v5425, %v5427
        %v5429 = vrot.slane %v5422, %v5428
        %v5430 = vcombine.low %v4398, %v4399
        %v5432 = vunpack.c.l.s4 1983009808
        %v5433 = vunpack.c.0.s8 %v5432
        %v5434 = vlaneseq
        %v5435 = vshrl.u32 %v5434, 7
        %v5436 = vsub.s32 %v5433, %v5435
        %v5437 = vrot.slane %v5430, %v5436
        %v5438 = vcombine.low %v4390, %v4397
        %v5440 = vunpack.c.l.s4 1983009808
        %v5441 = vunpack.c.0.s8 %v5440
        %v5442 = vlaneseq
        %v5443 = vshrl.u32 %v5442, 7
        %v5444 = vsub.s32 %v5441, %v5443
        %v5445 = vrot.slane %v5438, %v5444
        %v5446 = vcombine.low %v4400, %v4401
        %v5448 = vunpack.c.l.s4 1983009808
        %v5449 = vunpack.c.0.s8 %v5448
        %v5450 = vlaneseq
        %v5451 = vshrl.u32 %v5450, 7
        %v5452 = vsub.s32 %v5449, %v5451
        %v5453 = vrot.slane %v5446, %v5452
        %v5454 = vcombine.low %v5429, %v5437
        %v5455 = vcombine.high %v5429, %v5437
        %v5457 = vunpack.c.l.s4 1934713408
        %v5458 = vunpack.c.0.s8 %v5457
        %v5459 = vlaneseq
        %v5460 = vshrl.u32 %v5459, 7
        %v5461 = vsub.s32 %v5458, %v5460
        %v5462 = vrot.slane %v5454, %v5461
        %v5464 = vunpack.c.l.s4 1934713408
        %v5465 = vunpack.c.0.s8 %v5464
        %v5466 = vlaneseq
        %v5467 = vshrl.u32 %v5466, 7
        %v5468 = vsub.s32 %v5465, %v5467
        %v5469 = vrot.slane %v5455, %v5468
        %v5470 = vcombine.low %v5445, %v5453
        %v5471 = vcombine.high %v5445, %v5453
        %v5473 = vunpack.c.l.s4 1934713408
        %v5474 = vunpack.c.0.s8 %v5473
        %v5475 = vlaneseq
        %v5476 = vshrl.u32 %v5475, 7
        %v5477 = vsub.s32 %v5474, %v5476
        %v5478 = vrot.slane %v5470, %v5477
        %v5480 = vunpack.c.l.s4 1934713408
        %v5481 = vunpack.c.0.s8 %v5480
        %v5482 = vlaneseq
        %v5483 = vshrl.u32 %v5482, 7
        %v5484 = vsub.s32 %v5481, %v5483
        %v5485 = vrot.slane %v5471, %v5484
        %v5486 = vcombine.low %v5462, %v5478
        %v5487 = vcombine.high %v5462, %v5478
        %v5488 = vcombine.low %v5469, %v5485
        %v5489 = vcombine.high %v5469, %v5485
        %v5490 = vcombine.low %v4442, %v4449
        %v5492 = vunpack.c.l.s4 1983009808
        %v5493 = vunpack.c.0.s8 %v5492
        %v5494 = vlaneseq
        %v5495 = vshrl.u32 %v5494, 7
        %v5496 = vsub.s32 %v5493, %v5495
        %v5497 = vrot.slane %v5490, %v5496
        %v5498 = vcombine.low %v4466, %v4467
        %v5500 = vunpack.c.l.s4 1983009808
        %v5501 = vunpack.c.0.s8 %v5500
        %v5502 = vlaneseq
        %v5503 = vshrl.u32 %v5502, 7
        %v5504 = vsub.s32 %v5501, %v5503
        %v5505 = vrot.slane %v5498, %v5504
        %v5506 = vcombine.low %v4458, %v4465
        %v5508 = vunpack.c.l.s4 1983009808
        %v5509 = vunpack.c.0.s8 %v5508
        %v5510 = vlaneseq
        %v5511 = vshrl.u32 %v5510, 7
        %v5512 = vsub.s32 %v5509, %v5511
        %v5513 = vrot.slane %v5506, %v5512
        %v5514 = vcombine.low %v4468, %v4469
        %v5516 = vunpack.c.l.s4 1983009808
        %v5517 = vunpack.c.0.s8 %v5516
        %v5518 = vlaneseq
        %v5519 = vshrl.u32 %v5518, 7
        %v5520 = vsub.s32 %v5517, %v5519
        %v5521 = vrot.slane %v5514, %v5520
        %v5522 = vcombine.low %v5497, %v5505
        %v5523 = vcombine.high %v5497, %v5505
        %v5525 = vunpack.c.l.s4 1934713408
        %v5526 = vunpack.c.0.s8 %v5525
        %v5527 = vlaneseq
        %v5528 = vshrl.u32 %v5527, 7
        %v5529 = vsub.s32 %v5526, %v5528
        %v5530 = vrot.slane %v5522, %v5529
        %v5532 = vunpack.c.l.s4 1934713408
        %v5533 = vunpack.c.0.s8 %v5532
        %v5534 = vlaneseq
        %v5535 = vshrl.u32 %v5534, 7
        %v5536 = vsub.s32 %v5533, %v5535
        %v5537 = vrot.slane %v5523, %v5536
        %v5538 = vcombine.low %v5513, %v5521
        %v5539 = vcombine.high %v5513, %v5521
        %v5541 = vunpack.c.l.s4 1934713408
        %v5542 = vunpack.c.0.s8 %v5541
        %v5543 = vlaneseq
        %v5544 = vshrl.u32 %v5543, 7
        %v5545 = vsub.s32 %v5542, %v5544
        %v5546 = vrot.slane %v5538, %v5545
        %v5548 = vunpack.c.l.s4 1934713408
        %v5549 = vunpack.c.0.s8 %v5548
        %v5550 = vlaneseq
        %v5551 = vshrl.u32 %v5550, 7
        %v5552 = vsub.s32 %v5549, %v5551
        %v5553 = vrot.slane %v5539, %v5552
        %v5554 = vcombine.low %v5530, %v5546
        %v5555 = vcombine.high %v5530, %v5546
        %v5556 = vcombine.low %v5537, %v5553
        %v5557 = vcombine.high %v5537, %v5553
        %v5558 = vcombine.low %v4510, %v4517
        %v5560 = vunpack.c.l.s4 1983009808
        %v5561 = vunpack.c.0.s8 %v5560
        %v5562 = vlaneseq
        %v5563 = vshrl.u32 %v5562, 7
        %v5564 = vsub.s32 %v5561, %v5563
        %v5565 = vrot.slane %v5558, %v5564
        %v5566 = vcombine.low %v4534, %v4535
        %v5568 = vunpack.c.l.s4 1983009808
        %v5569 = vunpack.c.0.s8 %v5568
        %v5570 = vlaneseq
        %v5571 = vshrl.u32 %v5570, 7
        %v5572 = vsub.s32 %v5569, %v5571
        %v5573 = vrot.slane %v5566, %v5572
        %v5574 = vcombine.low %v4526, %v4533
        %v5576 = vunpack.c.l.s4 1983009808
        %v5577 = vunpack.c.0.s8 %v5576
        %v5578 = vlaneseq
        %v5579 = vshrl.u32 %v5578, 7
        %v5580 = vsub.s32 %v5577, %v5579
        %v5581 = vrot.slane %v5574, %v5580
        %v5582 = vcombine.low %v4536, %v4537
        %v5584 = vunpack.c.l.s4 1983009808
        %v5585 = vunpack.c.0.s8 %v5584
        %v5586 = vlaneseq
        %v5587 = vshrl.u32 %v5586, 7
        %v5588 = vsub.s32 %v5585, %v5587
        %v5589 = vrot.slane %v5582, %v5588
        %v5590 = vcombine.low %v5565, %v5573
        %v5591 = vcombine.high %v5565, %v5573
        %v5593 = vunpack.c.l.s4 1934713408
        %v5594 = vunpack.c.0.s8 %v5593
        %v5595 = vlaneseq
        %v5596 = vshrl.u32 %v5595, 7
        %v5597 = vsub.s32 %v5594, %v5596
        %v5598 = vrot.slane %v5590, %v5597
        %v5600 = vunpack.c.l.s4 1934713408
        %v5601 = vunpack.c.0.s8 %v5600
        %v5602 = vlaneseq
        %v5603 = vshrl.u32 %v5602, 7
        %v5604 = vsub.s32 %v5601, %v5603
        %v5605 = vrot.slane %v5591, %v5604
        %v5606 = vcombine.low %v5581, %v5589
        %v5607 = vcombine.high %v5581, %v5589
        %v5609 = vunpack.c.l.s4 1934713408
        %v5610 = vunpack.c.0.s8 %v5609
        %v5611 = vlaneseq
        %v5612 = vshrl.u32 %v5611, 7
        %v5613 = vsub.s32 %v5610, %v5612
        %v5614 = vrot.slane %v5606, %v5613
        %v5616 = vunpack.c.l.s4 1934713408
        %v5617 = vunpack.c.0.s8 %v5616
        %v5618 = vlaneseq
        %v5619 = vshrl.u32 %v5618, 7
        %v5620 = vsub.s32 %v5617, %v5619
        %v5621 = vrot.slane %v5607, %v5620
        %v5622 = vcombine.low %v5598, %v5614
        %v5623 = vcombine.high %v5598, %v5614
        %v5624 = vcombine.low %v5605, %v5621
        %v5625 = vcombine.high %v5605, %v5621
        %v5626 = vcombine.low %v4578, %v4585
        %v5628 = vunpack.c.l.s4 1983009808
        %v5629 = vunpack.c.0.s8 %v5628
        %v5630 = vlaneseq
        %v5631 = vshrl.u32 %v5630, 7
        %v5632 = vsub.s32 %v5629, %v5631
        %v5633 = vrot.slane %v5626, %v5632
        %v5634 = vcombine.low %v4602, %v4603
        %v5636 = vunpack.c.l.s4 1983009808
        %v5637 = vunpack.c.0.s8 %v5636
        %v5638 = vlaneseq
        %v5639 = vshrl.u32 %v5638, 7
        %v5640 = vsub.s32 %v5637, %v5639
        %v5641 = vrot.slane %v5634, %v5640
        %v5642 = vcombine.low %v4594, %v4601
        %v5644 = vunpack.c.l.s4 1983009808
        %v5645 = vunpack.c.0.s8 %v5644
        %v5646 = vlaneseq
        %v5647 = vshrl.u32 %v5646, 7
        %v5648 = vsub.s32 %v5645, %v5647
        %v5649 = vrot.slane %v5642, %v5648
        %v5650 = vcombine.low %v4604, %v4605
        %v5652 = vunpack.c.l.s4 1983009808
        %v5653 = vunpack.c.0.s8 %v5652
        %v5654 = vlaneseq
        %v5655 = vshrl.u32 %v5654, 7
        %v5656 = vsub.s32 %v5653, %v5655
        %v5657 = vrot.slane %v5650, %v5656
        %v5658 = vcombine.low %v5633, %v5641
        %v5659 = vcombine.high %v5633, %v5641
        %v5661 = vunpack.c.l.s4 1934713408
        %v5662 = vunpack.c.0.s8 %v5661
        %v5663 = vlaneseq
        %v5664 = vshrl.u32 %v5663, 7
        %v5665 = vsub.s32 %v5662, %v5664
        %v5666 = vrot.slane %v5658, %v5665
        %v5668 = vunpack.c.l.s4 1934713408
        %v5669 = vunpack.c.0.s8 %v5668
        %v5670 = vlaneseq
        %v5671 = vshrl.u32 %v5670, 7
        %v5672 = vsub.s32 %v5669, %v5671
        %v5673 = vrot.slane %v5659, %v5672
        %v5674 = vcombine.low %v5649, %v5657
        %v5675 = vcombine.high %v5649, %v5657
        %v5677 = vunpack.c.l.s4 1934713408
        %v5678 = vunpack.c.0.s8 %v5677
        %v5679 = vlaneseq
        %v5680 = vshrl.u32 %v5679, 7
        %v5681 = vsub.s32 %v5678, %v5680
        %v5682 = vrot.slane %v5674, %v5681
        %v5684 = vunpack.c.l.s4 1934713408
        %v5685 = vunpack.c.0.s8 %v5684
        %v5686 = vlaneseq
        %v5687 = vshrl.u32 %v5686, 7
        %v5688 = vsub.s32 %v5685, %v5687
        %v5689 = vrot.slane %v5675, %v5688
        %v5690 = vcombine.low %v5666, %v5682
        %v5691 = vcombine.high %v5666, %v5682
        %v5692 = vcombine.low %v5673, %v5689
        %v5693 = vcombine.high %v5673, %v5689
        %v5694 = vcombine.low %v4646, %v4653
        %v5696 = vunpack.c.l.s4 1983009808
        %v5697 = vunpack.c.0.s8 %v5696
        %v5698 = vlaneseq
        %v5699 = vshrl.u32 %v5698, 7
        %v5700 = vsub.s32 %v5697, %v5699
        %v5701 = vrot.slane %v5694, %v5700
        %v5702 = vcombine.low %v4670, %v4671
        %v5704 = vunpack.c.l.s4 1983009808
        %v5705 = vunpack.c.0.s8 %v5704
        %v5706 = vlaneseq
        %v5707 = vshrl.u32 %v5706, 7
        %v5708 = vsub.s32 %v5705, %v5707
        %v5709 = vrot.slane %v5702, %v5708
        %v5710 = vcombine.low %v4662, %v4669
        %v5712 = vunpack.c.l.s4 1983009808
        %v5713 = vunpack.c.0.s8 %v5712
        %v5714 = vlaneseq
        %v5715 = vshrl.u32 %v5714, 7
        %v5716 = vsub.s32 %v5713, %v5715
        %v5717 = vrot.slane %v5710, %v5716
        %v5718 = vcombine.low %v4672, %v4673
        %v5720 = vunpack.c.l.s4 1983009808
        %v5721 = vunpack.c.0.s8 %v5720
        %v5722 = vlaneseq
        %v5723 = vshrl.u32 %v5722, 7
        %v5724 = vsub.s32 %v5721, %v5723
        %v5725 = vrot.slane %v5718, %v5724
        %v5726 = vcombine.low %v5701, %v5709
        %v5727 = vcombine.high %v5701, %v5709
        %v5729 = vunpack.c.l.s4 1934713408
        %v5730 = vunpack.c.0.s8 %v5729
        %v5731 = vlaneseq
        %v5732 = vshrl.u32 %v5731, 7
        %v5733 = vsub.s32 %v5730, %v5732
        %v5734 = vrot.slane %v5726, %v5733
        %v5736 = vunpack.c.l.s4 1934713408
        %v5737 = vunpack.c.0.s8 %v5736
        %v5738 = vlaneseq
        %v5739 = vshrl.u32 %v5738, 7
        %v5740 = vsub.s32 %v5737, %v5739
        %v5741 = vrot.slane %v5727, %v5740
        %v5742 = vcombine.low %v5717, %v5725
        %v5743 = vcombine.high %v5717, %v5725
        %v5745 = vunpack.c.l.s4 1934713408
        %v5746 = vunpack.c.0.s8 %v5745
        %v5747 = vlaneseq
        %v5748 = vshrl.u32 %v5747, 7
        %v5749 = vsub.s32 %v5746, %v5748
        %v5750 = vrot.slane %v5742, %v5749
        %v5752 = vunpack.c.l.s4 1934713408
        %v5753 = vunpack.c.0.s8 %v5752
        %v5754 = vlaneseq
        %v5755 = vshrl.u32 %v5754, 7
        %v5756 = vsub.s32 %v5753, %v5755
        %v5757 = vrot.slane %v5743, %v5756
        %v5758 = vcombine.low %v5734, %v5750
        %v5759 = vcombine.high %v5734, %v5750
        %v5760 = vcombine.low %v5741, %v5757
        %v5761 = vcombine.high %v5741, %v5757
        %v5762 = vpack.c.bf16 %v4806, %v4738
        %v5763 = vpack.c.bf16 %v4942, %v4874
        %v5764 = vpack.c.bf16 %v5078, %v5010
        %v5765 = vpack.c.bf16 %v5214, %v5146
        %v5766 = vpack.c.bf16 %v5350, %v5282
        %v5767 = vpack.c.bf16 %v5486, %v5418
        %v5768 = vpack.c.bf16 %v5622, %v5554
        %v5769 = vpack.c.bf16 %v5758, %v5690
        %v5770 = vpack.c.bf16 %v4807, %v4739
        %v5771 = vpack.c.bf16 %v4943, %v4875
        %v5772 = vpack.c.bf16 %v5079, %v5011
        %v5773 = vpack.c.bf16 %v5215, %v5147
        %v5774 = vpack.c.bf16 %v5351, %v5283
        %v5775 = vpack.c.bf16 %v5487, %v5419
        %v5776 = vpack.c.bf16 %v5623, %v5555
        %v5777 = vpack.c.bf16 %v5759, %v5691
        %v5778 = vpack.c.bf16 %v4808, %v4740
        %v5779 = vpack.c.bf16 %v4944, %v4876
        %v5780 = vpack.c.bf16 %v5080, %v5012
        %v5781 = vpack.c.bf16 %v5216, %v5148
        %v5782 = vpack.c.bf16 %v5352, %v5284
        %v5783 = vpack.c.bf16 %v5488, %v5420
        %v5784 = vpack.c.bf16 %v5624, %v5556
        %v5785 = vpack.c.bf16 %v5760, %v5692
        %v5786 = vpack.c.bf16 %v4809, %v4741
        %v5787 = vpack.c.bf16 %v4945, %v4877
        %v5788 = vpack.c.bf16 %v5081, %v5013
        %v5789 = vpack.c.bf16 %v5217, %v5149
        %v5790 = vpack.c.bf16 %v5353, %v5285
        %v5791 = vpack.c.bf16 %v5489, %v5421
        %v5792 = vpack.c.bf16 %v5625, %v5557
        %v5793 = vpack.c.bf16 %v5761, %v5693
        %v5794 = vld [vmem:[#allocation2] sm:$0xff]
        %v5795 = vld [vmem:[#allocation2 + $0x8] sm:$0xff]
        %v5796 = vld [vmem:[#allocation2 + $0x10] sm:$0xff]
        %v5797 = vld [vmem:[#allocation2 + $0x18] sm:$0xff]
        %v5798 = vld [vmem:[%s350] sm:$0xff]
        %v5799 = vld [vmem:[%s350 + $0x8] sm:$0xff]
        %vm5800 = vcmask 64512
        %v5802 = vsel %vm5800, %v5794, 0
        %v5805 = vsel %vm5800, %v3362, 0
        %v5808 = vsel %vm5800, %v3363, 0
        %v5811 = vsel %vm5800, %v3364, 0
        %v5814 = vsel %vm5800, %v3365, 0
        %v5817 = vsel %vm5800, %v3366, 0
        %v5820 = vsel %vm5800, %v3367, 0
        %v5823 = vsel %vm5800, %v3368, 0
        %v5826 = vsel %vm5800, %v3369, 0
        %5828 = vmatprep.subr.bf16.mxu0 0
        %5829 = vmatpush1.bf16.xpose.msra.mxu0 %v5805
        %5830 = vmatprep.subr.bf16.mxu0 0
        %5831 = vmatpush1.bf16.xpose.msra.mxu0 %v5808
        %5832 = vmatprep.subr.bf16.mxu0 0
        %5833 = vmatpush1.bf16.xpose.msra.mxu0 %v5811
        %5834 = vmatprep.subr.bf16.mxu0 0
        %5835 = vmatpush1.bf16.xpose.msra.mxu0 %v5814
        %5836 = vmatprep.subr.bf16.mxu0 0
        %5837 = vmatpush1.bf16.xpose.msra.mxu0 %v5817
        %5838 = vmatprep.subr.bf16.mxu0 0
        %5839 = vmatpush1.bf16.xpose.msra.mxu0 %v5820
        %5840 = vmatprep.subr.bf16.mxu0 0
        %5841 = vmatpush1.bf16.xpose.msra.mxu0 %v5823
        %5842 = vmatprep.subr.bf16.mxu0 0
        %5843 = vmatpush1.bf16.xpose.msra.mxu0 %v5826
        %5844 = vmatprep.subr.bf16.mxu0 0
        %5845 = vmatpush1.bf16.xpose.msra.mxu0 0
        %5846 = vmatprep.subr.bf16.mxu0 0
        %5847 = vmatpush1.bf16.xpose.msra.mxu0 0
        %5848 = vmatprep.subr.bf16.mxu0 0
        %5849 = vmatpush1.bf16.xpose.msra.mxu0 0
        %5850 = vmatprep.subr.bf16.mxu0 0
        %5851 = vmatpush1.bf16.xpose.msra.mxu0 0
        %5852 = vmatprep.subr.bf16.mxu0 0
        %5853 = vmatpush1.bf16.xpose.msra.mxu0 0
        %5854 = vmatprep.subr.bf16.mxu0 0
        %5855 = vmatpush1.bf16.xpose.msra.mxu0 0
        %5856 = vmatprep.subr.bf16.mxu0 0
        %5857 = vmatpush1.bf16.xpose.msra.mxu0 0
        %5858 = vmatprep.subr.bf16.mxu0 0
        %5859 = vmatpush1.bf16.xpose.msra.mxu0 0
        %5860 = vmatprep.mubr.bf16.mxu0 0
        %5861 = vmatmul.mubr.bf16.gmra.mrb[0].mxu0 %v5802
        %v5862 = vpop.f32.mrb[0].mxu0
        %v5863 = vadd.f32 %v5798, %v5862
        %v5864 = vpop.f32.mrb[0].mxu0
        %v5865 = vpop.f32.mrb[0].mxu0
        %v5866 = vadd.f32 %v5799, %v5865
        %v5867 = vpop.f32.mrb[0].mxu0
        %5868 = vdwg.mxu0
        %v5870 = vsel %vm5800, %v5795, 0
        %v5873 = vsel %vm5800, %v3370, 0
        %v5876 = vsel %vm5800, %v3371, 0
        %v5879 = vsel %vm5800, %v3372, 0
        %v5882 = vsel %vm5800, %v3373, 0
        %v5885 = vsel %vm5800, %v3374, 0
        %v5888 = vsel %vm5800, %v3375, 0
        %v5891 = vsel %vm5800, %v3376, 0
        %v5894 = vsel %vm5800, %v3377, 0
        %5896 = vmatprep.subr.bf16.mxu0 0
        %5897 = vmatpush1.bf16.xpose.msra.mxu0 %v5873
        %5898 = vmatprep.subr.bf16.mxu0 0
        %5899 = vmatpush1.bf16.xpose.msra.mxu0 %v5876
        %5900 = vmatprep.subr.bf16.mxu0 0
        %5901 = vmatpush1.bf16.xpose.msra.mxu0 %v5879
        %5902 = vmatprep.subr.bf16.mxu0 0
        %5903 = vmatpush1.bf16.xpose.msra.mxu0 %v5882
        %5904 = vmatprep.subr.bf16.mxu0 0
        %5905 = vmatpush1.bf16.xpose.msra.mxu0 %v5885
        %5906 = vmatprep.subr.bf16.mxu0 0
        %5907 = vmatpush1.bf16.xpose.msra.mxu0 %v5888
        %5908 = vmatprep.subr.bf16.mxu0 0
        %5909 = vmatpush1.bf16.xpose.msra.mxu0 %v5891
        %5910 = vmatprep.subr.bf16.mxu0 0
        %5911 = vmatpush1.bf16.xpose.msra.mxu0 %v5894
        %5912 = vmatprep.subr.bf16.mxu0 0
        %5913 = vmatpush1.bf16.xpose.msra.mxu0 0
        %5914 = vmatprep.subr.bf16.mxu0 0
        %5915 = vmatpush1.bf16.xpose.msra.mxu0 0
        %5916 = vmatprep.subr.bf16.mxu0 0
        %5917 = vmatpush1.bf16.xpose.msra.mxu0 0
        %5918 = vmatprep.subr.bf16.mxu0 0
        %5919 = vmatpush1.bf16.xpose.msra.mxu0 0
        %5920 = vmatprep.subr.bf16.mxu0 0
        %5921 = vmatpush1.bf16.xpose.msra.mxu0 0
        %5922 = vmatprep.subr.bf16.mxu0 0
        %5923 = vmatpush1.bf16.xpose.msra.mxu0 0
        %5924 = vmatprep.subr.bf16.mxu0 0
        %5925 = vmatpush1.bf16.xpose.msra.mxu0 0
        %5926 = vmatprep.subr.bf16.mxu0 0
        %5927 = vmatpush1.bf16.xpose.msra.mxu0 0
        %5928 = vmatprep.mubr.bf16.mxu0 0
        %5929 = vmatmul.mubr.bf16.gmra.mrb[0].mxu0 %v5870
        %v5930 = vpop.f32.mrb[0].mxu0
        %v5931 = vadd.f32 %v5798, %v5930
        %v5932 = vpop.f32.mrb[0].mxu0
        %v5933 = vpop.f32.mrb[0].mxu0
        %v5934 = vadd.f32 %v5799, %v5933
        %v5935 = vpop.f32.mrb[0].mxu0
        %5936 = vdwg.mxu0
        %v5938 = vsel %vm5800, %v5796, 0
        %v5941 = vsel %vm5800, %v3378, 0
        %v5944 = vsel %vm5800, %v3379, 0
        %v5947 = vsel %vm5800, %v3380, 0
        %v5950 = vsel %vm5800, %v3381, 0
        %v5953 = vsel %vm5800, %v3382, 0
        %v5956 = vsel %vm5800, %v3383, 0
        %v5959 = vsel %vm5800, %v3384, 0
        %v5962 = vsel %vm5800, %v3385, 0
        %5964 = vmatprep.subr.bf16.mxu0 0
        %5965 = vmatpush1.bf16.xpose.msra.mxu0 %v5941
        %5966 = vmatprep.subr.bf16.mxu0 0
        %5967 = vmatpush1.bf16.xpose.msra.mxu0 %v5944
        %5968 = vmatprep.subr.bf16.mxu0 0
        %5969 = vmatpush1.bf16.xpose.msra.mxu0 %v5947
        %5970 = vmatprep.subr.bf16.mxu0 0
        %5971 = vmatpush1.bf16.xpose.msra.mxu0 %v5950
        %5972 = vmatprep.subr.bf16.mxu0 0
        %5973 = vmatpush1.bf16.xpose.msra.mxu0 %v5953
        %5974 = vmatprep.subr.bf16.mxu0 0
        %5975 = vmatpush1.bf16.xpose.msra.mxu0 %v5956
        %5976 = vmatprep.subr.bf16.mxu0 0
        %5977 = vmatpush1.bf16.xpose.msra.mxu0 %v5959
        %5978 = vmatprep.subr.bf16.mxu0 0
        %5979 = vmatpush1.bf16.xpose.msra.mxu0 %v5962
        %5980 = vmatprep.subr.bf16.mxu0 0
        %5981 = vmatpush1.bf16.xpose.msra.mxu0 0
        %5982 = vmatprep.subr.bf16.mxu0 0
        %5983 = vmatpush1.bf16.xpose.msra.mxu0 0
        %5984 = vmatprep.subr.bf16.mxu0 0
        %5985 = vmatpush1.bf16.xpose.msra.mxu0 0
        %5986 = vmatprep.subr.bf16.mxu0 0
        %5987 = vmatpush1.bf16.xpose.msra.mxu0 0
        %5988 = vmatprep.subr.bf16.mxu0 0
        %5989 = vmatpush1.bf16.xpose.msra.mxu0 0
        %5990 = vmatprep.subr.bf16.mxu0 0
        %5991 = vmatpush1.bf16.xpose.msra.mxu0 0
        %5992 = vmatprep.subr.bf16.mxu0 0
        %5993 = vmatpush1.bf16.xpose.msra.mxu0 0
        %5994 = vmatprep.subr.bf16.mxu0 0
        %5995 = vmatpush1.bf16.xpose.msra.mxu0 0
        %5996 = vmatprep.mubr.bf16.mxu0 0
        %5997 = vmatmul.mubr.bf16.gmra.mrb[0].mxu0 %v5938
        %v5998 = vpop.f32.mrb[0].mxu0
        %v5999 = vadd.f32 %v5798, %v5998
        %v6000 = vpop.f32.mrb[0].mxu0
        %v6001 = vpop.f32.mrb[0].mxu0
        %v6002 = vadd.f32 %v5799, %v6001
        %v6003 = vpop.f32.mrb[0].mxu0
        %6004 = vdwg.mxu0
        %v6006 = vsel %vm5800, %v5797, 0
        %v6009 = vsel %vm5800, %v3386, 0
        %v6012 = vsel %vm5800, %v3387, 0
        %v6015 = vsel %vm5800, %v3388, 0
        %v6018 = vsel %vm5800, %v3389, 0
        %v6021 = vsel %vm5800, %v3390, 0
        %v6024 = vsel %vm5800, %v3391, 0
        %v6027 = vsel %vm5800, %v3392, 0
        %v6030 = vsel %vm5800, %v3393, 0
        %6032 = vmatprep.subr.bf16.mxu0 0
        %6033 = vmatpush1.bf16.xpose.msra.mxu0 %v6009
        %6034 = vmatprep.subr.bf16.mxu0 0
        %6035 = vmatpush1.bf16.xpose.msra.mxu0 %v6012
        %6036 = vmatprep.subr.bf16.mxu0 0
        %6037 = vmatpush1.bf16.xpose.msra.mxu0 %v6015
        %6038 = vmatprep.subr.bf16.mxu0 0
        %6039 = vmatpush1.bf16.xpose.msra.mxu0 %v6018
        %6040 = vmatprep.subr.bf16.mxu0 0
        %6041 = vmatpush1.bf16.xpose.msra.mxu0 %v6021
        %6042 = vmatprep.subr.bf16.mxu0 0
        %6043 = vmatpush1.bf16.xpose.msra.mxu0 %v6024
        %6044 = vmatprep.subr.bf16.mxu0 0
        %6045 = vmatpush1.bf16.xpose.msra.mxu0 %v6027
        %6046 = vmatprep.subr.bf16.mxu0 0
        %6047 = vmatpush1.bf16.xpose.msra.mxu0 %v6030
        %6048 = vmatprep.subr.bf16.mxu0 0
        %6049 = vmatpush1.bf16.xpose.msra.mxu0 0
        %6050 = vmatprep.subr.bf16.mxu0 0
        %6051 = vmatpush1.bf16.xpose.msra.mxu0 0
        %6052 = vmatprep.subr.bf16.mxu0 0
        %6053 = vmatpush1.bf16.xpose.msra.mxu0 0
        %6054 = vmatprep.subr.bf16.mxu0 0
        %6055 = vmatpush1.bf16.xpose.msra.mxu0 0
        %6056 = vmatprep.subr.bf16.mxu0 0
        %6057 = vmatpush1.bf16.xpose.msra.mxu0 0
        %6058 = vmatprep.subr.bf16.mxu0 0
        %6059 = vmatpush1.bf16.xpose.msra.mxu0 0
        %6060 = vmatprep.subr.bf16.mxu0 0
        %6061 = vmatpush1.bf16.xpose.msra.mxu0 0
        %6062 = vmatprep.subr.bf16.mxu0 0
        %6063 = vmatpush1.bf16.xpose.msra.mxu0 0
        %6064 = vmatprep.mubr.bf16.mxu0 0
        %6065 = vmatmul.mubr.bf16.gmra.mrb[0].mxu0 %v6006
        %v6066 = vpop.f32.mrb[0].mxu0
        %v6067 = vadd.f32 %v5798, %v6066
        %v6068 = vpop.f32.mrb[0].mxu0
        %v6069 = vpop.f32.mrb[0].mxu0
        %v6070 = vadd.f32 %v5799, %v6069
        %v6071 = vpop.f32.mrb[0].mxu0
        %6072 = vdwg.mxu0
        %v6073 = vld [vmem:[#allocation3] sm:$0xff]
        %v6074 = vld [vmem:[#allocation3 + $0x8] sm:$0xff]
        %v6075 = vld [vmem:[#allocation3 + $0x10] sm:$0xff]
        %v6076 = vld [vmem:[#allocation3 + $0x18] sm:$0xff]
        %v6077 = vld [vmem:[#allocation3 + $0x20] sm:$0xff]
        %v6078 = vld [vmem:[#allocation3 + $0x28] sm:$0xff]
        %v6079 = vld [vmem:[#allocation3 + $0x30] sm:$0xff]
        %v6080 = vld [vmem:[#allocation3 + $0x38] sm:$0xff]
        %6081 = vmax.xlane.f32.xlu0 %v5863
        %v6082 = vpop.xlane.xlu0 %6081
        %6083 = vmax.xlane.f32.xlu0 %v5866
        %v6084 = vpop.xlane.xlu0 %6083
        %6085 = vmax.xlane.f32.xlu0 %v5931
        %v6086 = vpop.xlane.xlu0 %6085
        %6087 = vmax.xlane.f32.xlu0 %v5934
        %v6088 = vpop.xlane.xlu0 %6087
        %6089 = vmax.xlane.f32.xlu0 %v5999
        %v6090 = vpop.xlane.xlu0 %6089
        %6091 = vmax.xlane.f32.xlu0 %v6002
        %v6092 = vpop.xlane.xlu0 %6091
        %6093 = vmax.xlane.f32.xlu0 %v6067
        %v6094 = vpop.xlane.xlu0 %6093
        %6095 = vmax.xlane.f32.xlu0 %v6070
        %v6096 = vpop.xlane.xlu0 %6095
        %v6097 = vmax.f32 %v6073, %v6082
        %v6098 = vmax.f32 %v6074, %v6084
        %v6099 = vmax.f32 %v6075, %v6086
        %v6100 = vmax.f32 %v6076, %v6088
        %v6101 = vmax.f32 %v6077, %v6090
        %v6102 = vmax.f32 %v6078, %v6092
        %v6103 = vmax.f32 %v6079, %v6094
        %v6104 = vmax.f32 %v6080, %v6096
        %v6105 = vsub.f32 %v6073, %v6097
        %v6106 = vsub.f32 %v6074, %v6098
        %v6107 = vsub.f32 %v6075, %v6099
        %v6108 = vsub.f32 %v6076, %v6100
        %v6109 = vsub.f32 %v6077, %v6101
        %v6110 = vsub.f32 %v6078, %v6102
        %v6111 = vsub.f32 %v6079, %v6103
        %v6112 = vsub.f32 %v6080, %v6104
        %v6113 = vmul.f32 %v6105, 1.442695
        %v6114 = vpow.pop %v6113
        %v6115 = vmul.f32 %v6106, 1.442695
        %v6116 = vpow.pop %v6115
        %v6117 = vmul.f32 %v6107, 1.442695
        %v6118 = vpow.pop %v6117
        %v6119 = vmul.f32 %v6108, 1.442695
        %v6120 = vpow.pop %v6119
        %v6121 = vmul.f32 %v6109, 1.442695
        %v6122 = vpow.pop %v6121
        %v6123 = vmul.f32 %v6110, 1.442695
        %v6124 = vpow.pop %v6123
        %v6125 = vmul.f32 %v6111, 1.442695
        %v6126 = vpow.pop %v6125
        %v6127 = vmul.f32 %v6112, 1.442695
        %v6128 = vpow.pop %v6127
        %6130 = vset.pattern.permute.xlu0 0
        %6131 = vperm.xlu0 %6130, %v6097
        %v6132 = vpop.permute.xlu0 %6131
        %6135 = vset.pattern.permute.xlu0 0
        %6136 = vperm.xlu0 %6135, %v6098
        %v6137 = vpop.permute.xlu0 %6136
        %6140 = vset.pattern.permute.xlu0 0
        %6141 = vperm.xlu0 %6140, %v6099
        %v6142 = vpop.permute.xlu0 %6141
        %6145 = vset.pattern.permute.xlu0 0
        %6146 = vperm.xlu0 %6145, %v6100
        %v6147 = vpop.permute.xlu0 %6146
        %6150 = vset.pattern.permute.xlu0 0
        %6151 = vperm.xlu0 %6150, %v6101
        %v6152 = vpop.permute.xlu0 %6151
        %6155 = vset.pattern.permute.xlu0 0
        %6156 = vperm.xlu0 %6155, %v6102
        %v6157 = vpop.permute.xlu0 %6156
        %6160 = vset.pattern.permute.xlu0 0
        %6161 = vperm.xlu0 %6160, %v6103
        %v6162 = vpop.permute.xlu0 %6161
        %6165 = vset.pattern.permute.xlu0 0
        %6166 = vperm.xlu0 %6165, %v6104
        %v6167 = vpop.permute.xlu0 %6166
        %v6169 = vsub.f32 %v5863, %v6132
        %v6170 = vsub.f32 %v5866, %v6137
        %v6171 = vsub.f32 %v5931, %v6142
        %v6172 = vsub.f32 %v5934, %v6147
        %v6173 = vsub.f32 %v5999, %v6152
        %v6174 = vsub.f32 %v6002, %v6157
        %v6175 = vsub.f32 %v6067, %v6162
        %v6176 = vsub.f32 %v6070, %v6167
        %v6177 = vmul.f32 %v6169, 1.442695
        %v6178 = vpow.pop %v6177
        %v6179 = vmul.f32 %v6170, 1.442695
        %v6180 = vpow.pop %v6179
        %v6181 = vmul.f32 %v6171, 1.442695
        %v6182 = vpow.pop %v6181
        %v6183 = vmul.f32 %v6172, 1.442695
        %v6184 = vpow.pop %v6183
        %v6185 = vmul.f32 %v6173, 1.442695
        %v6186 = vpow.pop %v6185
        %v6187 = vmul.f32 %v6174, 1.442695
        %v6188 = vpow.pop %v6187
        %v6189 = vmul.f32 %v6175, 1.442695
        %v6190 = vpow.pop %v6189
        %v6191 = vmul.f32 %v6176, 1.442695
        %v6192 = vpow.pop %v6191
        %v6193 = vld [vmem:[#allocation4] sm:$0xff]
        %v6194 = vld [vmem:[#allocation4 + $0x8] sm:$0xff]
        %v6195 = vld [vmem:[#allocation4 + $0x10] sm:$0xff]
        %v6196 = vld [vmem:[#allocation4 + $0x18] sm:$0xff]
        %v6197 = vld [vmem:[#allocation4 + $0x20] sm:$0xff]
        %v6198 = vld [vmem:[#allocation4 + $0x28] sm:$0xff]
        %v6199 = vld [vmem:[#allocation4 + $0x30] sm:$0xff]
        %v6200 = vld [vmem:[#allocation4 + $0x38] sm:$0xff]
        %v6201 = vmul.f32 %v6114, %v6193
        %v6202 = vmul.f32 %v6116, %v6194
        %v6203 = vmul.f32 %v6118, %v6195
        %v6204 = vmul.f32 %v6120, %v6196
        %v6205 = vmul.f32 %v6122, %v6197
        %v6206 = vmul.f32 %v6124, %v6198
        %v6207 = vmul.f32 %v6126, %v6199
        %v6208 = vmul.f32 %v6128, %v6200
        %6209 = vadd.xlane.f32.xlu0 %v6178
        %v6210 = vpop.xlane.xlu0 %6209
        %6211 = vadd.xlane.f32.xlu0 %v6180
        %v6212 = vpop.xlane.xlu0 %6211
        %6213 = vadd.xlane.f32.xlu0 %v6182
        %v6214 = vpop.xlane.xlu0 %6213
        %6215 = vadd.xlane.f32.xlu0 %v6184
        %v6216 = vpop.xlane.xlu0 %6215
        %6217 = vadd.xlane.f32.xlu0 %v6186
        %v6218 = vpop.xlane.xlu0 %6217
        %6219 = vadd.xlane.f32.xlu0 %v6188
        %v6220 = vpop.xlane.xlu0 %6219
        %6221 = vadd.xlane.f32.xlu0 %v6190
        %v6222 = vpop.xlane.xlu0 %6221
        %6223 = vadd.xlane.f32.xlu0 %v6192
        %v6224 = vpop.xlane.xlu0 %6223
        %v6225 = vadd.f32 %v6201, %v6210
        %v6226 = vadd.f32 %v6202, %v6212
        %v6227 = vadd.f32 %v6203, %v6214
        %v6228 = vadd.f32 %v6204, %v6216
        %v6229 = vadd.f32 %v6205, %v6218
        %v6230 = vadd.f32 %v6206, %v6220
        %v6231 = vadd.f32 %v6207, %v6222
        %v6232 = vadd.f32 %v6208, %v6224
        %vm6233 = vcmask 7168
        %6234 = vst.msk [vmem:[#allocation4] sm:$0xff] %vm6233, %v6225
        %6235 = vst.msk [vmem:[#allocation4 + $0x8] sm:$0xff] %vm6233, %v6226
        %6236 = vst.msk [vmem:[#allocation4 + $0x10] sm:$0xff] %vm6233, %v6227
        %6237 = vst.msk [vmem:[#allocation4 + $0x18] sm:$0xff] %vm6233, %v6228
        %6238 = vst.msk [vmem:[#allocation4 + $0x20] sm:$0xff] %vm6233, %v6229
        %6239 = vst.msk [vmem:[#allocation4 + $0x28] sm:$0xff] %vm6233, %v6230
        %6240 = vst.msk [vmem:[#allocation4 + $0x30] sm:$0xff] %vm6233, %v6231
        %6241 = vst.msk [vmem:[#allocation4 + $0x38] sm:$0xff] %vm6233, %v6232
        %v6242 = vld [vmem:[#allocation5] sm:$0xff]
        %v6243 = vld [vmem:[#allocation5 + $0x8] sm:$0xff]
        %v6244 = vld [vmem:[#allocation5 + $0x10] sm:$0xff]
        %v6245 = vld [vmem:[#allocation5 + $0x18] sm:$0xff]
        %v6246 = vld [vmem:[#allocation5 + $0x20] sm:$0xff]
        %v6247 = vld [vmem:[#allocation5 + $0x28] sm:$0xff]
        %v6248 = vld [vmem:[#allocation5 + $0x30] sm:$0xff]
        %v6249 = vld [vmem:[#allocation5 + $0x38] sm:$0xff]
        %6251 = vset.pattern.permute.xlu0 0
        %6252 = vperm.xlu0 %6251, %v6114
        %v6253 = vpop.permute.xlu0 %6252
        %6256 = vset.pattern.permute.xlu0 0
        %6257 = vperm.xlu0 %6256, %v6116
        %v6258 = vpop.permute.xlu0 %6257
        %6261 = vset.pattern.permute.xlu0 0
        %6262 = vperm.xlu0 %6261, %v6118
        %v6263 = vpop.permute.xlu0 %6262
        %6266 = vset.pattern.permute.xlu0 0
        %6267 = vperm.xlu0 %6266, %v6120
        %v6268 = vpop.permute.xlu0 %6267
        %6271 = vset.pattern.permute.xlu0 0
        %6272 = vperm.xlu0 %6271, %v6122
        %v6273 = vpop.permute.xlu0 %6272
        %6276 = vset.pattern.permute.xlu0 0
        %6277 = vperm.xlu0 %6276, %v6124
        %v6278 = vpop.permute.xlu0 %6277
        %6281 = vset.pattern.permute.xlu0 0
        %6282 = vperm.xlu0 %6281, %v6126
        %v6283 = vpop.permute.xlu0 %6282
        %6286 = vset.pattern.permute.xlu0 0
        %6287 = vperm.xlu0 %6286, %v6128
        %v6288 = vpop.permute.xlu0 %6287
        %v6290 = vmul.f32 %v6253, %v6242
        %v6291 = vmul.f32 %v6258, %v6243
        %v6292 = vmul.f32 %v6263, %v6244
        %v6293 = vmul.f32 %v6268, %v6245
        %v6294 = vmul.f32 %v6273, %v6246
        %v6295 = vmul.f32 %v6278, %v6247
        %v6296 = vmul.f32 %v6283, %v6248
        %v6297 = vmul.f32 %v6288, %v6249
        %v6298 = vpack.c.bf16 %v6180, %v6178
        %v6299 = vpack.c.bf16 %v6184, %v6182
        %v6300 = vpack.c.bf16 %v6188, %v6186
        %v6301 = vpack.c.bf16 %v6192, %v6190
        %6302 = vmatprep.subr.bf16.mxu0 0
        %6303 = vmatpush1.bf16.msra.mxu0 %v5762
        %6304 = vmatprep.subr.bf16.mxu0 0
        %6305 = vmatpush1.bf16.msra.mxu0 %v5763
        %6306 = vmatprep.subr.bf16.mxu0 0
        %6307 = vmatpush1.bf16.msra.mxu0 %v5764
        %6308 = vmatprep.subr.bf16.mxu0 0
        %6309 = vmatpush1.bf16.msra.mxu0 %v5765
        %6310 = vmatprep.subr.bf16.mxu0 0
        %6311 = vmatpush1.bf16.msra.mxu0 %v5766
        %6312 = vmatprep.subr.bf16.mxu0 0
        %6313 = vmatpush1.bf16.msra.mxu0 %v5767
        %6314 = vmatprep.subr.bf16.mxu0 0
        %6315 = vmatpush1.bf16.msra.mxu0 %v5768
        %6316 = vmatprep.subr.bf16.mxu0 0
        %6317 = vmatpush1.bf16.msra.mxu0 %v5769
        %6318 = vmatprep.subr.bf16.mxu0 0
        %6319 = vmatpush1.bf16.msra.mxu0 0
        %6320 = vmatprep.subr.bf16.mxu0 0
        %6321 = vmatpush1.bf16.msra.mxu0 0
        %6322 = vmatprep.subr.bf16.mxu0 0
        %6323 = vmatpush1.bf16.msra.mxu0 0
        %6324 = vmatprep.subr.bf16.mxu0 0
        %6325 = vmatpush1.bf16.msra.mxu0 0
        %6326 = vmatprep.subr.bf16.mxu0 0
        %6327 = vmatpush1.bf16.msra.mxu0 0
        %6328 = vmatprep.subr.bf16.mxu0 0
        %6329 = vmatpush1.bf16.msra.mxu0 0
        %6330 = vmatprep.subr.bf16.mxu0 0
        %6331 = vmatpush1.bf16.msra.mxu0 0
        %6332 = vmatprep.subr.bf16.mxu0 0
        %6333 = vmatpush1.bf16.msra.mxu0 0
        %6334 = vmatprep.mubr.bf16.mxu0 0
        %6335 = vmatmul.mubr.bf16.gmra.mrb[0].mxu0 %v6298
        %v6336 = vpop.f32.mrb[0].mxu0
        %v6337 = vadd.f32 0.0, %v6336
        %v6338 = vpop.f32.mrb[0].mxu0
        %v6339 = vpop.f32.mrb[0].mxu0
        %v6340 = vadd.f32 0.0, %v6339
        %v6341 = vpop.f32.mrb[0].mxu0
        %6342 = vdwg.mxu0
        %6343 = vmatprep.subr.bf16.mxu0 0
        %6344 = vmatpush1.bf16.msra.mxu0 %v5770
        %6345 = vmatprep.subr.bf16.mxu0 0
        %6346 = vmatpush1.bf16.msra.mxu0 %v5771
        %6347 = vmatprep.subr.bf16.mxu0 0
        %6348 = vmatpush1.bf16.msra.mxu0 %v5772
        %6349 = vmatprep.subr.bf16.mxu0 0
        %6350 = vmatpush1.bf16.msra.mxu0 %v5773
        %6351 = vmatprep.subr.bf16.mxu0 0
        %6352 = vmatpush1.bf16.msra.mxu0 %v5774
        %6353 = vmatprep.subr.bf16.mxu0 0
        %6354 = vmatpush1.bf16.msra.mxu0 %v5775
        %6355 = vmatprep.subr.bf16.mxu0 0
        %6356 = vmatpush1.bf16.msra.mxu0 %v5776
        %6357 = vmatprep.subr.bf16.mxu0 0
        %6358 = vmatpush1.bf16.msra.mxu0 %v5777
        %6359 = vmatprep.subr.bf16.mxu0 0
        %6360 = vmatpush1.bf16.msra.mxu0 0
        %6361 = vmatprep.subr.bf16.mxu0 0
        %6362 = vmatpush1.bf16.msra.mxu0 0
        %6363 = vmatprep.subr.bf16.mxu0 0
        %6364 = vmatpush1.bf16.msra.mxu0 0
        %6365 = vmatprep.subr.bf16.mxu0 0
        %6366 = vmatpush1.bf16.msra.mxu0 0
        %6367 = vmatprep.subr.bf16.mxu0 0
        %6368 = vmatpush1.bf16.msra.mxu0 0
        %6369 = vmatprep.subr.bf16.mxu0 0
        %6370 = vmatpush1.bf16.msra.mxu0 0
        %6371 = vmatprep.subr.bf16.mxu0 0
        %6372 = vmatpush1.bf16.msra.mxu0 0
        %6373 = vmatprep.subr.bf16.mxu0 0
        %6374 = vmatpush1.bf16.msra.mxu0 0
        %6375 = vmatprep.mubr.bf16.mxu0 0
        %6376 = vmatmul.mubr.bf16.gmra.mrb[0].mxu0 %v6299
        %v6377 = vpop.f32.mrb[0].mxu0
        %v6378 = vadd.f32 0.0, %v6377
        %v6379 = vpop.f32.mrb[0].mxu0
        %v6380 = vpop.f32.mrb[0].mxu0
        %v6381 = vadd.f32 0.0, %v6380
        %v6382 = vpop.f32.mrb[0].mxu0
        %6383 = vdwg.mxu0
        %6384 = vmatprep.subr.bf16.mxu0 0
        %6385 = vmatpush1.bf16.msra.mxu0 %v5778
        %6386 = vmatprep.subr.bf16.mxu0 0
        %6387 = vmatpush1.bf16.msra.mxu0 %v5779
        %6388 = vmatprep.subr.bf16.mxu0 0
        %6389 = vmatpush1.bf16.msra.mxu0 %v5780
        %6390 = vmatprep.subr.bf16.mxu0 0
        %6391 = vmatpush1.bf16.msra.mxu0 %v5781
        %6392 = vmatprep.subr.bf16.mxu0 0
        %6393 = vmatpush1.bf16.msra.mxu0 %v5782
        %6394 = vmatprep.subr.bf16.mxu0 0
        %6395 = vmatpush1.bf16.msra.mxu0 %v5783
        %6396 = vmatprep.subr.bf16.mxu0 0
        %6397 = vmatpush1.bf16.msra.mxu0 %v5784
        %6398 = vmatprep.subr.bf16.mxu0 0
        %6399 = vmatpush1.bf16.msra.mxu0 %v5785
        %6400 = vmatprep.subr.bf16.mxu0 0
        %6401 = vmatpush1.bf16.msra.mxu0 0
        %6402 = vmatprep.subr.bf16.mxu0 0
        %6403 = vmatpush1.bf16.msra.mxu0 0
        %6404 = vmatprep.subr.bf16.mxu0 0
        %6405 = vmatpush1.bf16.msra.mxu0 0
        %6406 = vmatprep.subr.bf16.mxu0 0
        %6407 = vmatpush1.bf16.msra.mxu0 0
        %6408 = vmatprep.subr.bf16.mxu0 0
        %6409 = vmatpush1.bf16.msra.mxu0 0
        %6410 = vmatprep.subr.bf16.mxu0 0
        %6411 = vmatpush1.bf16.msra.mxu0 0
        %6412 = vmatprep.subr.bf16.mxu0 0
        %6413 = vmatpush1.bf16.msra.mxu0 0
        %6414 = vmatprep.subr.bf16.mxu0 0
        %6415 = vmatpush1.bf16.msra.mxu0 0
        %6416 = vmatprep.mubr.bf16.mxu0 0
        %6417 = vmatmul.mubr.bf16.gmra.mrb[0].mxu0 %v6300
        %v6418 = vpop.f32.mrb[0].mxu0
        %v6419 = vadd.f32 0.0, %v6418
        %v6420 = vpop.f32.mrb[0].mxu0
        %v6421 = vpop.f32.mrb[0].mxu0
        %v6422 = vadd.f32 0.0, %v6421
        %v6423 = vpop.f32.mrb[0].mxu0
        %6424 = vdwg.mxu0
        %6425 = vmatprep.subr.bf16.mxu0 0
        %6426 = vmatpush1.bf16.msra.mxu0 %v5786
        %6427 = vmatprep.subr.bf16.mxu0 0
        %6428 = vmatpush1.bf16.msra.mxu0 %v5787
        %6429 = vmatprep.subr.bf16.mxu0 0
        %6430 = vmatpush1.bf16.msra.mxu0 %v5788
        %6431 = vmatprep.subr.bf16.mxu0 0
        %6432 = vmatpush1.bf16.msra.mxu0 %v5789
        %6433 = vmatprep.subr.bf16.mxu0 0
        %6434 = vmatpush1.bf16.msra.mxu0 %v5790
        %6435 = vmatprep.subr.bf16.mxu0 0
        %6436 = vmatpush1.bf16.msra.mxu0 %v5791
        %6437 = vmatprep.subr.bf16.mxu0 0
        %6438 = vmatpush1.bf16.msra.mxu0 %v5792
        %6439 = vmatprep.subr.bf16.mxu0 0
        %6440 = vmatpush1.bf16.msra.mxu0 %v5793
        %6441 = vmatprep.subr.bf16.mxu0 0
        %6442 = vmatpush1.bf16.msra.mxu0 0
        %6443 = vmatprep.subr.bf16.mxu0 0
        %6444 = vmatpush1.bf16.msra.mxu0 0
        %6445 = vmatprep.subr.bf16.mxu0 0
        %6446 = vmatpush1.bf16.msra.mxu0 0
        %6447 = vmatprep.subr.bf16.mxu0 0
        %6448 = vmatpush1.bf16.msra.mxu0 0
        %6449 = vmatprep.subr.bf16.mxu0 0
        %6450 = vmatpush1.bf16.msra.mxu0 0
        %6451 = vmatprep.subr.bf16.mxu0 0
        %6452 = vmatpush1.bf16.msra.mxu0 0
        %6453 = vmatprep.subr.bf16.mxu0 0
        %6454 = vmatpush1.bf16.msra.mxu0 0
        %6455 = vmatprep.subr.bf16.mxu0 0
        %6456 = vmatpush1.bf16.msra.mxu0 0
        %6457 = vmatprep.mubr.bf16.mxu0 0
        %6458 = vmatmul.mubr.bf16.gmra.mrb[0].mxu0 %v6301
        %v6459 = vpop.f32.mrb[0].mxu0
        %v6460 = vadd.f32 0.0, %v6459
        %v6461 = vpop.f32.mrb[0].mxu0
        %v6462 = vpop.f32.mrb[0].mxu0
        %v6463 = vadd.f32 0.0, %v6462
        %v6464 = vpop.f32.mrb[0].mxu0
        %6465 = vdwg.mxu0
        %v6466 = vadd.f32 %v6290, %v6337
        %v6467 = vadd.f32 %v6291, %v6340
        %v6468 = vadd.f32 %v6292, %v6378
        %v6469 = vadd.f32 %v6293, %v6381
        %v6470 = vadd.f32 %v6294, %v6419
        %v6471 = vadd.f32 %v6295, %v6422
        %v6472 = vadd.f32 %v6296, %v6460
        %v6473 = vadd.f32 %v6297, %v6463
        %6474 = vst.msk [vmem:[#allocation5] sm:$0xff] %vm5800, %v6466
        %6475 = vst.msk [vmem:[#allocation5 + $0x8] sm:$0xff] %vm5800, %v6467
        %6476 = vst.msk [vmem:[#allocation5 + $0x10] sm:$0xff] %vm5800, %v6468
        %6477 = vst.msk [vmem:[#allocation5 + $0x18] sm:$0xff] %vm5800, %v6469
        %6478 = vst.msk [vmem:[#allocation5 + $0x20] sm:$0xff] %vm5800, %v6470
        %6479 = vst.msk [vmem:[#allocation5 + $0x28] sm:$0xff] %vm5800, %v6471
        %6480 = vst.msk [vmem:[#allocation5 + $0x30] sm:$0xff] %vm5800, %v6472
        %6481 = vst.msk [vmem:[#allocation5 + $0x38] sm:$0xff] %vm5800, %v6473
        %6482 = vst.msk [vmem:[#allocation3] sm:$0xff] %vm6233, %v6097
        %6483 = vst.msk [vmem:[#allocation3 + $0x8] sm:$0xff] %vm6233, %v6098
        %6484 = vst.msk [vmem:[#allocation3 + $0x10] sm:$0xff] %vm6233, %v6099
        %6485 = vst.msk [vmem:[#allocation3 + $0x18] sm:$0xff] %vm6233, %v6100
        %6486 = vst.msk [vmem:[#allocation3 + $0x20] sm:$0xff] %vm6233, %v6101
        %6487 = vst.msk [vmem:[#allocation3 + $0x28] sm:$0xff] %vm6233, %v6102
        %6488 = vst.msk [vmem:[#allocation3 + $0x30] sm:$0xff] %vm6233, %v6103
        %6489 = vst.msk [vmem:[#allocation3 + $0x38] sm:$0xff] %vm6233, %v6104
        %p6490 = scmp.eq.s32.totalorder %s28, 1
        // Predicated region
        $region91: #{attention_forward.1} parent=81 // pred_check
          %p6491 = pneg %p6490
        $region92: #{attention_forward.1} parent=81 // pred_check_branch
          %6493 = sbr.rel (%p6491) target = $region94
        $region93: #{attention_forward.1} parent=81 // pred_region
          %v6494 = vld [vmem:[#allocation5] sm:$0xff]
          %v6495 = vld [vmem:[#allocation5 + $0x8] sm:$0xff]
          %v6496 = vld [vmem:[#allocation5 + $0x10] sm:$0xff]
          %v6497 = vld [vmem:[#allocation5 + $0x18] sm:$0xff]
          %v6498 = vld [vmem:[#allocation5 + $0x20] sm:$0xff]
          %v6499 = vld [vmem:[#allocation5 + $0x28] sm:$0xff]
          %v6500 = vld [vmem:[#allocation5 + $0x30] sm:$0xff]
          %v6501 = vld [vmem:[#allocation5 + $0x38] sm:$0xff]
          %v6502 = vld [vmem:[#allocation4] sm:$0xff]
          %v6503 = vld [vmem:[#allocation4 + $0x8] sm:$0xff]
          %v6504 = vld [vmem:[#allocation4 + $0x10] sm:$0xff]
          %v6505 = vld [vmem:[#allocation4 + $0x18] sm:$0xff]
          %v6506 = vld [vmem:[#allocation4 + $0x20] sm:$0xff]
          %v6507 = vld [vmem:[#allocation4 + $0x28] sm:$0xff]
          %v6508 = vld [vmem:[#allocation4 + $0x30] sm:$0xff]
          %v6509 = vld [vmem:[#allocation4 + $0x38] sm:$0xff]
          %v6510 = vrcp.pop %v6502
          %v6511 = vrcp.pop %v6503
          %v6512 = vrcp.pop %v6504
          %v6513 = vrcp.pop %v6505
          %v6514 = vrcp.pop %v6506
          %v6515 = vrcp.pop %v6507
          %v6516 = vrcp.pop %v6508
          %v6517 = vrcp.pop %v6509
          %6519 = vset.pattern.permute.xlu0 0
          %6520 = vperm.xlu0 %6519, %v6510
          %v6521 = vpop.permute.xlu0 %6520
          %6524 = vset.pattern.permute.xlu0 0
          %6525 = vperm.xlu0 %6524, %v6511
          %v6526 = vpop.permute.xlu0 %6525
          %6529 = vset.pattern.permute.xlu0 0
          %6530 = vperm.xlu0 %6529, %v6512
          %v6531 = vpop.permute.xlu0 %6530
          %6534 = vset.pattern.permute.xlu0 0
          %6535 = vperm.xlu0 %6534, %v6513
          %v6536 = vpop.permute.xlu0 %6535
          %6539 = vset.pattern.permute.xlu0 0
          %6540 = vperm.xlu0 %6539, %v6514
          %v6541 = vpop.permute.xlu0 %6540
          %6544 = vset.pattern.permute.xlu0 0
          %6545 = vperm.xlu0 %6544, %v6515
          %v6546 = vpop.permute.xlu0 %6545
          %6549 = vset.pattern.permute.xlu0 0
          %6550 = vperm.xlu0 %6549, %v6516
          %v6551 = vpop.permute.xlu0 %6550
          %6554 = vset.pattern.permute.xlu0 0
          %6555 = vperm.xlu0 %6554, %v6517
          %v6556 = vpop.permute.xlu0 %6555
          %v6558 = vmul.f32 %v6494, %v6521
          %v6559 = vmul.f32 %v6495, %v6526
          %v6560 = vmul.f32 %v6496, %v6531
          %v6561 = vmul.f32 %v6497, %v6536
          %v6562 = vmul.f32 %v6498, %v6541
          %v6563 = vmul.f32 %v6499, %v6546
          %v6564 = vmul.f32 %v6500, %v6551
          %v6565 = vmul.f32 %v6501, %v6556
          %v6566 = vcombine.low %v6558, %v6562
          %v6567 = vcombine.high %v6558, %v6562
          %v6569 = vunpack.c.l.s4 1983009808
          %v6570 = vunpack.c.0.s8 %v6569
          %v6571 = vlaneseq
          %v6572 = vshrl.u32 %v6571, 7
          %v6573 = vsub.s32 %v6570, %v6572
          %v6574 = vrot.slane %v6566, %v6573
          %v6576 = vunpack.c.l.s4 1983009808
          %v6577 = vunpack.c.0.s8 %v6576
          %v6578 = vlaneseq
          %v6579 = vshrl.u32 %v6578, 7
          %v6580 = vsub.s32 %v6577, %v6579
          %v6581 = vrot.slane %v6567, %v6580
          %v6582 = vcombine.low %v6560, %v6564
          %v6583 = vcombine.high %v6560, %v6564
          %v6585 = vunpack.c.l.s4 1983009808
          %v6586 = vunpack.c.0.s8 %v6585
          %v6587 = vlaneseq
          %v6588 = vshrl.u32 %v6587, 7
          %v6589 = vsub.s32 %v6586, %v6588
          %v6590 = vrot.slane %v6582, %v6589
          %v6592 = vunpack.c.l.s4 1983009808
          %v6593 = vunpack.c.0.s8 %v6592
          %v6594 = vlaneseq
          %v6595 = vshrl.u32 %v6594, 7
          %v6596 = vsub.s32 %v6593, %v6595
          %v6597 = vrot.slane %v6583, %v6596
          %v6598 = vcombine.low %v6574, %v6590
          %v6599 = vcombine.high %v6574, %v6590
          %v6601 = vunpack.c.l.s4 1934713408
          %v6602 = vunpack.c.0.s8 %v6601
          %v6603 = vlaneseq
          %v6604 = vshrl.u32 %v6603, 7
          %v6605 = vsub.s32 %v6602, %v6604
          %v6606 = vrot.slane %v6598, %v6605
          %v6608 = vunpack.c.l.s4 1934713408
          %v6609 = vunpack.c.0.s8 %v6608
          %v6610 = vlaneseq
          %v6611 = vshrl.u32 %v6610, 7
          %v6612 = vsub.s32 %v6609, %v6611
          %v6613 = vrot.slane %v6599, %v6612
          %v6614 = vcombine.low %v6581, %v6597
          %v6615 = vcombine.high %v6581, %v6597
          %v6617 = vunpack.c.l.s4 1934713408
          %v6618 = vunpack.c.0.s8 %v6617
          %v6619 = vlaneseq
          %v6620 = vshrl.u32 %v6619, 7
          %v6621 = vsub.s32 %v6618, %v6620
          %v6622 = vrot.slane %v6614, %v6621
          %v6624 = vunpack.c.l.s4 1934713408
          %v6625 = vunpack.c.0.s8 %v6624
          %v6626 = vlaneseq
          %v6627 = vshrl.u32 %v6626, 7
          %v6628 = vsub.s32 %v6625, %v6627
          %v6629 = vrot.slane %v6615, %v6628
          %v6630 = vcombine.high %v6606, 0.0
          %v6631 = vcombine.high %v6613, 0.0
          %v6632 = vcombine.high %v6622, 0.0
          %v6633 = vcombine.high %v6629, 0.0
          %v6634 = vcombine.low %v6559, %v6563
          %v6635 = vcombine.high %v6559, %v6563
          %v6637 = vunpack.c.l.s4 1983009808
          %v6638 = vunpack.c.0.s8 %v6637
          %v6639 = vlaneseq
          %v6640 = vshrl.u32 %v6639, 7
          %v6641 = vsub.s32 %v6638, %v6640
          %v6642 = vrot.slane %v6634, %v6641
          %v6644 = vunpack.c.l.s4 1983009808
          %v6645 = vunpack.c.0.s8 %v6644
          %v6646 = vlaneseq
          %v6647 = vshrl.u32 %v6646, 7
          %v6648 = vsub.s32 %v6645, %v6647
          %v6649 = vrot.slane %v6635, %v6648
          %v6650 = vcombine.low %v6561, %v6565
          %v6651 = vcombine.high %v6561, %v6565
          %v6653 = vunpack.c.l.s4 1983009808
          %v6654 = vunpack.c.0.s8 %v6653
          %v6655 = vlaneseq
          %v6656 = vshrl.u32 %v6655, 7
          %v6657 = vsub.s32 %v6654, %v6656
          %v6658 = vrot.slane %v6650, %v6657
          %v6660 = vunpack.c.l.s4 1983009808
          %v6661 = vunpack.c.0.s8 %v6660
          %v6662 = vlaneseq
          %v6663 = vshrl.u32 %v6662, 7
          %v6664 = vsub.s32 %v6661, %v6663
          %v6665 = vrot.slane %v6651, %v6664
          %v6666 = vcombine.low %v6642, %v6658
          %v6667 = vcombine.high %v6642, %v6658
          %v6669 = vunpack.c.l.s4 1934713408
          %v6670 = vunpack.c.0.s8 %v6669
          %v6671 = vlaneseq
          %v6672 = vshrl.u32 %v6671, 7
          %v6673 = vsub.s32 %v6670, %v6672
          %v6674 = vrot.slane %v6666, %v6673
          %v6676 = vunpack.c.l.s4 1934713408
          %v6677 = vunpack.c.0.s8 %v6676
          %v6678 = vlaneseq
          %v6679 = vshrl.u32 %v6678, 7
          %v6680 = vsub.s32 %v6677, %v6679
          %v6681 = vrot.slane %v6667, %v6680
          %v6682 = vcombine.low %v6649, %v6665
          %v6683 = vcombine.high %v6649, %v6665
          %v6685 = vunpack.c.l.s4 1934713408
          %v6686 = vunpack.c.0.s8 %v6685
          %v6687 = vlaneseq
          %v6688 = vshrl.u32 %v6687, 7
          %v6689 = vsub.s32 %v6686, %v6688
          %v6690 = vrot.slane %v6682, %v6689
          %v6692 = vunpack.c.l.s4 1934713408
          %v6693 = vunpack.c.0.s8 %v6692
          %v6694 = vlaneseq
          %v6695 = vshrl.u32 %v6694, 7
          %v6696 = vsub.s32 %v6693, %v6695
          %v6697 = vrot.slane %v6683, %v6696
          %v6698 = vcombine.high %v6674, 0.0
          %v6699 = vcombine.high %v6681, 0.0
          %v6700 = vcombine.high %v6690, 0.0
          %v6701 = vcombine.high %v6697, 0.0
          %v6702 = vcombine.low %v6606, %v6613
          %v6704 = vunpack.c.l.s4 1983009808
          %v6705 = vunpack.c.0.s8 %v6704
          %v6706 = vlaneseq
          %v6707 = vshrl.u32 %v6706, 7
          %v6708 = vsub.s32 %v6705, %v6707
          %v6709 = vrot.slane %v6702, %v6708
          %v6710 = vcombine.low %v6630, %v6631
          %v6712 = vunpack.c.l.s4 1983009808
          %v6713 = vunpack.c.0.s8 %v6712
          %v6714 = vlaneseq
          %v6715 = vshrl.u32 %v6714, 7
          %v6716 = vsub.s32 %v6713, %v6715
          %v6717 = vrot.slane %v6710, %v6716
          %v6718 = vcombine.low %v6622, %v6629
          %v6720 = vunpack.c.l.s4 1983009808
          %v6721 = vunpack.c.0.s8 %v6720
          %v6722 = vlaneseq
          %v6723 = vshrl.u32 %v6722, 7
          %v6724 = vsub.s32 %v6721, %v6723
          %v6725 = vrot.slane %v6718, %v6724
          %v6726 = vcombine.low %v6632, %v6633
          %v6728 = vunpack.c.l.s4 1983009808
          %v6729 = vunpack.c.0.s8 %v6728
          %v6730 = vlaneseq
          %v6731 = vshrl.u32 %v6730, 7
          %v6732 = vsub.s32 %v6729, %v6731
          %v6733 = vrot.slane %v6726, %v6732
          %v6734 = vcombine.low %v6709, %v6717
          %v6735 = vcombine.high %v6709, %v6717
          %v6737 = vunpack.c.l.s4 1934713408
          %v6738 = vunpack.c.0.s8 %v6737
          %v6739 = vlaneseq
          %v6740 = vshrl.u32 %v6739, 7
          %v6741 = vsub.s32 %v6738, %v6740
          %v6742 = vrot.slane %v6734, %v6741
          %v6744 = vunpack.c.l.s4 1934713408
          %v6745 = vunpack.c.0.s8 %v6744
          %v6746 = vlaneseq
          %v6747 = vshrl.u32 %v6746, 7
          %v6748 = vsub.s32 %v6745, %v6747
          %v6749 = vrot.slane %v6735, %v6748
          %v6750 = vcombine.low %v6725, %v6733
          %v6751 = vcombine.high %v6725, %v6733
          %v6753 = vunpack.c.l.s4 1934713408
          %v6754 = vunpack.c.0.s8 %v6753
          %v6755 = vlaneseq
          %v6756 = vshrl.u32 %v6755, 7
          %v6757 = vsub.s32 %v6754, %v6756
          %v6758 = vrot.slane %v6750, %v6757
          %v6760 = vunpack.c.l.s4 1934713408
          %v6761 = vunpack.c.0.s8 %v6760
          %v6762 = vlaneseq
          %v6763 = vshrl.u32 %v6762, 7
          %v6764 = vsub.s32 %v6761, %v6763
          %v6765 = vrot.slane %v6751, %v6764
          %v6766 = vcombine.low %v6742, %v6758
          %v6767 = vcombine.high %v6742, %v6758
          %v6768 = vcombine.low %v6749, %v6765
          %v6769 = vcombine.high %v6749, %v6765
          %v6770 = vcombine.low %v6674, %v6681
          %v6772 = vunpack.c.l.s4 1983009808
          %v6773 = vunpack.c.0.s8 %v6772
          %v6774 = vlaneseq
          %v6775 = vshrl.u32 %v6774, 7
          %v6776 = vsub.s32 %v6773, %v6775
          %v6777 = vrot.slane %v6770, %v6776
          %v6778 = vcombine.low %v6698, %v6699
          %v6780 = vunpack.c.l.s4 1983009808
          %v6781 = vunpack.c.0.s8 %v6780
          %v6782 = vlaneseq
          %v6783 = vshrl.u32 %v6782, 7
          %v6784 = vsub.s32 %v6781, %v6783
          %v6785 = vrot.slane %v6778, %v6784
          %v6786 = vcombine.low %v6690, %v6697
          %v6788 = vunpack.c.l.s4 1983009808
          %v6789 = vunpack.c.0.s8 %v6788
          %v6790 = vlaneseq
          %v6791 = vshrl.u32 %v6790, 7
          %v6792 = vsub.s32 %v6789, %v6791
          %v6793 = vrot.slane %v6786, %v6792
          %v6794 = vcombine.low %v6700, %v6701
          %v6796 = vunpack.c.l.s4 1983009808
          %v6797 = vunpack.c.0.s8 %v6796
          %v6798 = vlaneseq
          %v6799 = vshrl.u32 %v6798, 7
          %v6800 = vsub.s32 %v6797, %v6799
          %v6801 = vrot.slane %v6794, %v6800
          %v6802 = vcombine.low %v6777, %v6785
          %v6803 = vcombine.high %v6777, %v6785
          %v6805 = vunpack.c.l.s4 1934713408
          %v6806 = vunpack.c.0.s8 %v6805
          %v6807 = vlaneseq
          %v6808 = vshrl.u32 %v6807, 7
          %v6809 = vsub.s32 %v6806, %v6808
          %v6810 = vrot.slane %v6802, %v6809
          %v6812 = vunpack.c.l.s4 1934713408
          %v6813 = vunpack.c.0.s8 %v6812
          %v6814 = vlaneseq
          %v6815 = vshrl.u32 %v6814, 7
          %v6816 = vsub.s32 %v6813, %v6815
          %v6817 = vrot.slane %v6803, %v6816
          %v6818 = vcombine.low %v6793, %v6801
          %v6819 = vcombine.high %v6793, %v6801
          %v6821 = vunpack.c.l.s4 1934713408
          %v6822 = vunpack.c.0.s8 %v6821
          %v6823 = vlaneseq
          %v6824 = vshrl.u32 %v6823, 7
          %v6825 = vsub.s32 %v6822, %v6824
          %v6826 = vrot.slane %v6818, %v6825
          %v6828 = vunpack.c.l.s4 1934713408
          %v6829 = vunpack.c.0.s8 %v6828
          %v6830 = vlaneseq
          %v6831 = vshrl.u32 %v6830, 7
          %v6832 = vsub.s32 %v6829, %v6831
          %v6833 = vrot.slane %v6819, %v6832
          %v6834 = vcombine.low %v6810, %v6826
          %v6835 = vcombine.high %v6810, %v6826
          %v6836 = vcombine.low %v6817, %v6833
          %v6837 = vcombine.high %v6817, %v6833
          %6840 = vrot.lane.b32.xlu0 %v6767, 8
          %v6841 = vpop.permute.xlu0 %6840
          %6842 = vrot.lane.b32.xlu0 %v6835, 8
          %v6843 = vpop.permute.xlu0 %6842
          %6848 = vrot.lane.b32.xlu0 %v6768, 16
          %v6849 = vpop.permute.xlu0 %6848
          %6850 = vrot.lane.b32.xlu0 %v6836, 16
          %v6851 = vpop.permute.xlu0 %6850
          %6856 = vrot.lane.b32.xlu0 %v6769, 24
          %v6857 = vpop.permute.xlu0 %6856
          %6858 = vrot.lane.b32.xlu0 %v6837, 24
          %v6859 = vpop.permute.xlu0 %6858
          %v6862 = vsel %vm5800, %v6766, %v6841
          %v6863 = vsel %vm5800, %v6834, %v6843
          %vm6864 = vcmask 130048
          %v6865 = vsel %vm6864, %v6862, %v6849
          %v6866 = vsel %vm6864, %v6863, %v6851
          %vm6867 = vcmask 195584
          %v6868 = vsel %vm6867, %v6865, %v6857
          %v6869 = vsel %vm6867, %v6866, %v6859
          %6870 = vst.msk [vmem:[%s396] sm:$0xff] %vm904, %v6868
          %6871 = vst.msk [vmem:[%s396 + $0x8] sm:$0xff] %vm904, %v6869
        $region94: #{attention_forward.1} parent=81 // pred_fallthru
          _
        %s6872 = sand.u32 %s220, 1
        %s6873 = scalar_lea.sflag [#allocation8], %s6872
        %s6874 = sand.u32 %s220, 1
        %s6875 = smul.addr %s6874, 16
        %s6876 = scalar_lea.vmem [#allocation7], %s6875
        // Predicated region
        $region95: #{attention_forward.1} parent=81 // pred_check
          %p6877 = pneg %p230
        $region96: #{attention_forward.1} parent=81 // pred_check_branch
          %6879 = sbr.rel (%p6877) target = $region98
        $region97: #{attention_forward.1} parent=81 // pred_region
          %s6880 = smul.u32 2, %s27
          %s6882 = ssub.s32 256, 256
          %6883 = vsyncadd %s6873, %s6882
          %s6884 = smul.addr %s26, 4
          %s6885 = sadd.s32 %s6880, %s6884
          %s6886 = smul.addr %s6885, 128
          %s6887 = scalar_lea.hbm %s7, %s6886
          %s6888 = sshll.u32 %s6876, 4
          %s6889 = int_to_ptr.vmem [resolvable:$true] %s6888
          %6894 = dma.vmem_to_hbm [thread:$0]  %s6889, 256, %s6887, %s6873, 128, 128, 8
        $region98: #{attention_forward.1} parent=81 // pred_fallthru
          _
      $region82: #{attention_forward.1} parent=5 // pred_fallthru
        _
      %p6895 = scmp.le.s32.totalorder 2, %s16
      // Predicated region
      $region99: #{attention_forward.1} parent=5 // pred_check
        %p6896 = pneg %p6895
      $region100: #{attention_forward.1} parent=5 // pred_check_branch
        %6898 = sbr.rel (%p6896) target = $region102
      $region101: #{attention_forward.1} parent=5 // pred_region
        %s6899 = ssub.s32 %s16, 2
        // Predicated region
        $region103: #{attention_forward.1} parent=101 // pred_check
          %p6900 = pneg %p236
        $region104: #{attention_forward.1} parent=101 // pred_check_branch
          %6902 = sbr.rel (%p6900) target = $region106
        $region105: #{attention_forward.1} parent=101 // pred_region
          %s6903 = sand.u32 %s221, 1
          %s6904 = scalar_lea.sflag [#allocation8], %s6903
          %s6905 = sand.u32 %s221, 1
          %s6906 = smul.addr %s6905, 16
          %s6907 = scalar_lea.vmem [#allocation7], %s6906
          %6908 = dma.done %s6904, 256
        $region106: #{attention_forward.1} parent=101 // pred_fallthru
          _
      $region102: #{attention_forward.1} parent=5 // pred_fallthru
        _
    $region6: #{attention_forward.1} parent=1 // loop_footer
      %s20 = sadd.s32 1, %s16
    $region7: #{attention_forward.1} parent=1 // loop_footer_branch
      %15 = sbr.rel target = $region3
    $region8: #{attention_forward.1} parent=1 // loop_exit
      _
    %6909 = vsyncpa [#allocation8], 1
    %s6910 = scalar_lea.sflag [#allocation8], 1
    %6911 = vsyncpa %s6910, 1

</llo_original>
